<compile_context>
chip_gen: v6e
topology: v6e:2x2x1
jax: 0.10.0
libtpu: 0.0.40
codegen_flags: <defaults>
</compile_context>

<pallas_src>
from functools import partial

import jax
import jax.numpy as jnp
from jax.experimental import pallas as pl
from jax.experimental.pallas import tpu as pltpu

CP = 128          # padded channel width (lane-dense activations everywhere)
HEAD_OUT = 64     # true head channels (4 * 16)


def _cparams(n_axes=1):
    return pltpu.CompilerParams(
        dimension_semantics=("parallel",) * n_axes,
        vmem_limit_bytes=32 * 1024 * 1024,
    )


# ---------------------------------------------------------------------------
# Kernel 1: tiled matmul + folded-BN + SiLU (stem im2col matmul only).
# ---------------------------------------------------------------------------

def _matmul_bn_act_kernel(x_ref, w_ref, scale_ref, bias_ref, o_ref, *, act):
    y = jnp.dot(x_ref[...], w_ref[...], preferred_element_type=jnp.float32)
    y = y * scale_ref[...] + bias_ref[...]
    if act == "silu":
        y = y * jax.nn.sigmoid(y)
    o_ref[...] = y.astype(o_ref.dtype)


def matmul_bn_act(x, w, scale, bias, *, act, block_rows=64, out_dtype=jnp.bfloat16):
    M, K = x.shape
    N = w.shape[1]
    tm = max(8, min(block_rows, M))
    Mp = pl.cdiv(M, tm) * tm
    if Mp != M:
        x = jnp.pad(x, ((0, Mp - M), (0, 0)))
    out = pl.pallas_call(
        partial(_matmul_bn_act_kernel, act=act),
        out_shape=jax.ShapeDtypeStruct((Mp, N), out_dtype),
        grid=(Mp // tm,),
        in_specs=[
            pl.BlockSpec((tm, K), lambda i: (i, 0)),
            pl.BlockSpec((K, N), lambda i: (0, 0)),
            pl.BlockSpec((1, N), lambda i: (0, 0)),
            pl.BlockSpec((1, N), lambda i: (0, 0)),
        ],
        out_specs=pl.BlockSpec((tm, N), lambda i: (i, 0)),
        compiler_params=_cparams(1),
    )(x, w, scale, bias)
    return out[:M] if Mp != M else out


# ---------------------------------------------------------------------------
# Kernel 2: FusedMBConv(expand=1): 3x3 stride-1 conv + BN + SiLU + residual,
#           fused with the following MBConv expand 1x1 + BN + SiLU.
#           Taps gathered in-kernel from the padded NHWC map (no HBM im2col);
#           the residual skip is the centre tap of the same resident map.
# ---------------------------------------------------------------------------

def _stage1_expand_kernel(x_ref, w_ref, s1_ref, b1_ref, we_ref, se_ref, be_ref,
                          o_ref, *, H, W):
    xp = x_ref[0].astype(jnp.float32)                 # (H+2, W+2, CP)
    HW = H * W
    acc = jnp.zeros((HW, CP), jnp.float32)
    for di in range(3):
        for dj in range(3):
            tap = xp[di:di + H, dj:dj + W, :].reshape(HW, CP)
            acc = acc + jnp.dot(tap.astype(jnp.bfloat16), w_ref[di * 3 + dj],
                                preferred_element_type=jnp.float32)
    y = acc * s1_ref[...] + b1_ref[...]
    y = y * jax.nn.sigmoid(y)                          # SiLU
    # fused residual add (StochasticDepth identity in eval); skip = centre taps
    skip = xp[1:H + 1, 1:W + 1, :].reshape(HW, CP)
    y = y + skip
    # MBConv expand 1x1 + BN + SiLU fused in the same kernel
    e = jnp.dot(y.astype(jnp.bfloat16), we_ref[...],
                preferred_element_type=jnp.float32)
    e = e * se_ref[...] + be_ref[...]
    e = e * jax.nn.sigmoid(e)                          # SiLU
    o_ref[0] = e.astype(o_ref.dtype)


def stage1_and_expand(x_pad, f1_w, f1_s, f1_b, exp_w, exp_s, exp_b, *, H, W):
    N = x_pad.shape[0]
    Hp, Wp = H + 2, W + 2
    HW = H * W
    return pl.pallas_call(
        partial(_stage1_expand_kernel, H=H, W=W),
        out_shape=jax.ShapeDtypeStruct((N, HW, CP), jnp.bfloat16),
        grid=(N,),
        in_specs=[
            pl.BlockSpec((1, Hp, Wp, CP), lambda n: (n, 0, 0, 0)),
            pl.BlockSpec((9, CP, CP), lambda n: (0, 0, 0)),
            pl.BlockSpec((1, CP), lambda n: (0, 0)),
            pl.BlockSpec((1, CP), lambda n: (0, 0)),
            pl.BlockSpec((CP, CP), lambda n: (0, 0)),
            pl.BlockSpec((1, CP), lambda n: (0, 0)),
            pl.BlockSpec((1, CP), lambda n: (0, 0)),
        ],
        out_specs=pl.BlockSpec((1, HW, CP), lambda n: (n, 0, 0)),
        compiler_params=_cparams(1),
    )(x_pad, f1_w, f1_s, f1_b, exp_w, exp_s, exp_b)


# ---------------------------------------------------------------------------
# Kernel 3: depthwise 3x3 stride-2 conv + BN + SiLU + full SqueezeExcitation
#           + project 1x1 + BN + head 1x1 + BN + SiLU + global average pool,
#           all in one kernel per batch element.  Stride-2 taps come from four
#           parity (even/odd row/col) maps so every in-kernel slice is
#           contiguous; project/head matmuls run row-by-row (no 3D reshape).
# ---------------------------------------------------------------------------

def _dw_se_proj_head_kernel(x00_ref, x01_ref, x10_ref, x11_ref,
                            dww_ref, dws_ref, dwb_ref,
                            w1_ref, b1_ref, w2_ref, b2_ref,
                            wp_ref, sp_ref, bp_ref,
                            wh_ref, sh_ref, bh_ref,
                            o_ref, *, Ho, Wo):
    maps = ((x00_ref[0].astype(jnp.float32), x01_ref[0].astype(jnp.float32)),
            (x10_ref[0].astype(jnp.float32), x11_ref[0].astype(jnp.float32)))
    acc = jnp.zeros((Ho, Wo, CP), jnp.float32)
    for di in range(3):
        for dj in range(3):
            p, oi = di % 2, di // 2
            q, oj = dj % 2, dj // 2
            tap = maps[p][q][oi:oi + Ho, oj:oj + Wo, :]
            acc = acc + tap * dww_ref[di * 3 + dj:di * 3 + dj + 1, :]
    y = acc * dws_ref[...] + dwb_ref[...]
    y = y * jax.nn.sigmoid(y)                                              # SiLU
    inv_hw = 1.0 / (Ho * Wo)
    # SqueezeExcitation, entirely in VMEM.
    pooled = (jnp.sum(y, axis=(0, 1), keepdims=True) * inv_hw).reshape(1, CP)
    s = jnp.dot(pooled.astype(jnp.bfloat16), w1_ref[...],
                preferred_element_type=jnp.float32) + b1_ref[...]
    s = s * jax.nn.sigmoid(s)                                              # SiLU
    s = jnp.dot(s.astype(jnp.bfloat16), w2_ref[...],
                preferred_element_type=jnp.float32) + b2_ref[...]
    s = jax.nn.sigmoid(s)                                                  # (1, CP)
    y = y * s                                                              # channel scale
    # project 1x1 + BN (no act) -> head 1x1 + BN + SiLU -> global avg pool,
    # processed one spatial row at a time (avoids a 3D->2D relayout).
    pool = jnp.zeros((1, CP), jnp.float32)
    for i in range(Ho):
        row = y[i]                                                         # (Wo, CP)
        pj = jnp.dot(row.astype(jnp.bfloat16), wp_ref[...],
                     preferred_element_type=jnp.float32)
        pj = pj * sp_ref[...] + bp_ref[...]
        hd = jnp.dot(pj.astype(jnp.bfloat16), wh_ref[...],
                     preferred_element_type=jnp.float32)
        hd = hd * sh_ref[...] + bh_ref[...]
        hd = hd * jax.nn.sigmoid(hd)                                       # SiLU
        pool = pool + jnp.sum(hd, axis=0, keepdims=True)
    o_ref[0] = pool * inv_hw


def dw_se_proj_head(x_pad, dw_w, dw_s, dw_b, se_w1, se_b1, se_w2, se_b2,
                    proj_w, proj_s, proj_b, head_w, head_s, head_b, *, Ho, Wo):
    N = x_pad.shape[0]
    # Parity split done once in XLA: one pass over the map, not a 9x im2col.
    parts = [x_pad[:, p::2, q::2, :] for p in (0, 1) for q in (0, 1)]
    Hq, Wq = parts[0].shape[1], parts[0].shape[2]
    vec = lambda: pl.BlockSpec((1, CP), lambda n: (0, 0))
    mat = lambda: pl.BlockSpec((CP, CP), lambda n: (0, 0))
    return pl.pallas_call(
        partial(_dw_se_proj_head_kernel, Ho=Ho, Wo=Wo),
        out_shape=jax.ShapeDtypeStruct((N, 1, CP), jnp.float32),
        grid=(N,),
        in_specs=[pl.BlockSpec((1, Hq, Wq, CP), lambda n: (n, 0, 0, 0))] * 4 + [
            pl.BlockSpec((9, CP), lambda n: (0, 0)),   # dw taps
            vec(), vec(),                              # dw BN scale / bias
            mat(), vec(), mat(), vec(),                # SE fc1 w/b, fc2 w/b
            mat(), vec(), vec(),                       # project w, BN scale / bias
            mat(), vec(), vec(),                       # head w, BN scale / bias
        ],
        out_specs=pl.BlockSpec((1, 1, CP), lambda n: (n, 0, 0)),
        compiler_params=_cparams(1),
    )(*parts, dw_w, dw_s, dw_b, se_w1, se_b1, se_w2, se_b2,
      proj_w, proj_s, proj_b, head_w, head_s, head_b)


# ---------------------------------------------------------------------------
# Glue: im2col for the stem only (raw 3-channel input, K = 27 -> negligible).
# ---------------------------------------------------------------------------

def im2col(x_nhwc, k, stride, pad):
    N, H, W, C = x_nhwc.shape
    xp = jnp.pad(x_nhwc, ((0, 0), (pad, pad), (pad, pad), (0, 0)))
    Ho = (H + 2 * pad - k) // stride + 1
    Wo = (W + 2 * pad - k) // stride + 1
    cols = []
    for di in range(k):
        for dj in range(k):
            cols.append(xp[:, di:di + stride * Ho:stride, dj:dj + stride * Wo:stride, :])
    patches = jnp.stack(cols, axis=-2)            # (N, Ho, Wo, k*k, C)
    return patches, Ho, Wo


# ---------------------------------------------------------------------------
# Parameters (deterministic synthetic init) for a tiny EfficientNet:
#   stem: Conv3x3 s2 (3 -> 8) + BN + SiLU
#   stage1: FusedMBConv(expand=1, k3, s1, 8 -> 8)   [single conv + residual]
#   stage2: MBConv(expand=4, k3, s2, 8 -> 16)       [expand / dw / SE / project]
#   head: Conv1x1 (16 -> 64) + BN + SiLU, avgpool, flatten
# All weights zero-padded to CP=128 channels; padded BN scale=1, bias=0 keeps
# padded channels exactly zero through the whole network.
# ---------------------------------------------------------------------------

def make_params(key):
    keys = iter(jax.random.split(key, 64))

    def w(shape, s=0.1):
        return s * jax.random.normal(next(keys), shape, jnp.float32)

    def bn_fold(c, eps=1e-5):
        gamma = 1.0 + 0.1 * jax.random.normal(next(keys), (c,), jnp.float32)
        beta = 0.1 * jax.random.normal(next(keys), (c,), jnp.float32)
        mean = 0.1 * jax.random.normal(next(keys), (c,), jnp.float32)
        var = 1.0 + jnp.abs(0.1 * jax.random.normal(next(keys), (c,), jnp.float32))
        scale = gamma / jnp.sqrt(var + eps)
        bias = beta - mean * scale
        return scale, bias

    def pad_bn(scale, bias):
        c = scale.shape[0]
        s = jnp.ones((1, CP), jnp.float32).at[0, :c].set(scale)
        b = jnp.zeros((1, CP), jnp.float32).at[0, :c].set(bias)
        return s, b

    def pad_mat(m, rows=CP, cols=CP, dtype=jnp.bfloat16):
        out = jnp.zeros((rows, cols), jnp.float32)
        out = out.at[:m.shape[0], :m.shape[1]].set(m)
        return out.astype(dtype)

    p = {}
    # stem: 3x3 s2 conv, 3 -> 8; im2col weight (27, CP), tap-major / channel-minor
    p["stem_w"] = pad_mat(w((3, 3, 3, 8)).reshape(27, 8), rows=27, cols=CP)
    p["stem_bn"] = pad_bn(*bn_fold(8))
    # FusedMBConv (expand=1): single 3x3 s1 conv, 8 -> 8; weights as (9, CP, CP)
    f1 = w((3, 3, 8, 8)).reshape(9, 8, 8)
    p["f1_w"] = jnp.zeros((9, CP, CP), jnp.float32).at[:, :8, :8].set(f1).astype(jnp.bfloat16)
    p["f1_bn"] = pad_bn(*bn_fold(8))
    # MBConv: expand 1x1 (8 -> 32)
    p["m_exp_w"] = pad_mat(w((8, 32)))
    p["m_exp_bn"] = pad_bn(*bn_fold(32))
    # depthwise 3x3 s2 (per-channel taps), (9, CP) f32
    p["m_dw_w"] = jnp.zeros((9, CP), jnp.float32).at[:, :32].set(w((9, 32)))
    p["m_dw_bn"] = pad_bn(*bn_fold(32))
    # SqueezeExcitation: squeeze = max(1, 8 // 4) = 2, padded to CP lanes
    p["m_se_w1"] = pad_mat(w((32, 2)))
    p["m_se_b1"] = jnp.zeros((1, CP), jnp.float32).at[0, :2].set(w((2,), 0.05))
    p["m_se_w2"] = pad_mat(w((2, 32)))
    p["m_se_b2"] = jnp.zeros((1, CP), jnp.float32).at[0, :32].set(w((32,), 0.05))
    # project 1x1 (32 -> 16), no activation
    p["m_proj_w"] = pad_mat(w((32, 16)))
    p["m_proj_bn"] = pad_bn(*bn_fold(16))
    # head 1x1 (16 -> 64 = 4 * 16)
    p["head_w"] = pad_mat(w((16, 64)))
    p["head_bn"] = pad_bn(*bn_fold(64))
    return p


# ---------------------------------------------------------------------------
# Forward pass (matches EfficientNet._forward_impl in eval mode)
# ---------------------------------------------------------------------------

def efficientnet_forward(params, x_nchw):
    x = jnp.transpose(x_nchw, (0, 2, 3, 1)).astype(jnp.float32)   # NCHW -> NHWC
    n = x.shape[0]

    # stem: Conv 3x3 s2 (3 -> 8) + BN + SiLU (im2col for the raw RGB input only)
    patches, h, w_ = im2col(x, 3, 2, 1)
    xm = patches.reshape(n * h * w_, 27).astype(jnp.bfloat16)
    x = matmul_bn_act(xm, params["stem_w"], *params["stem_bn"], act="silu")

    # stage 1 (FusedMBConv 3x3 s1 + BN + SiLU + residual) fused with the
    # stage 2 MBConv expand 1x1 + BN + SiLU, one kernel per batch element.
    # TODO(synk): StochasticDepth / Dropout are identity in eval mode.
    xpad = jnp.pad(x.reshape(n, h, w_, CP), ((0, 0), (1, 1), (1, 1), (0, 0)))
    xe = stage1_and_expand(xpad, params["f1_w"], *params["f1_bn"],
                           params["m_exp_w"], *params["m_exp_bn"], H=h, W=w_)

    # stage 2 rest: depthwise 3x3 s2 + BN + SiLU + SE + project 1x1 + BN,
    # fused with the head 1x1 + BN + SiLU and the global average pool.
    epad = jnp.pad(xe.reshape(n, h, w_, CP), ((0, 0), (1, 1), (1, 1), (0, 0)))
    ho, wo = (h + 2 - 3) // 2 + 1, (w_ + 2 - 3) // 2 + 1
    out = dw_se_proj_head(epad, params["m_dw_w"], *params["m_dw_bn"],
                          params["m_se_w1"], params["m_se_b1"],
                          params["m_se_w2"], params["m_se_b2"],
                          params["m_proj_w"], *params["m_proj_bn"],
                          params["head_w"], *params["head_bn"], Ho=ho, Wo=wo)

    # flatten + strip the lane padding (Dropout identity in eval).
    return out.reshape(n, CP)[:, :HEAD_OUT]


if __name__ == "__main__":
    key = jax.random.PRNGKey(0)
    pkey, xkey = jax.random.split(key)
    params = make_params(pkey)
    x = jax.random.normal(xkey, (2, 3, 16, 16), jnp.float32)      # NCHW like PyTorch
    out = jax.jit(efficientnet_forward)(params, x)
    jax.block_until_ready(out)
    assert out.shape == (2, HEAD_OUT), out.shape
    assert bool(jnp.all(jnp.isfinite(out)))
    print("KERNEL_OK")
</pallas_src>

<mosaic_0001>
module attributes {stable_mosaic.version = 11 : i64} {
  func.func @_matmul_bn_act_kernel(%arg0: i32, %arg1: memref<64x27xbf16, #tpu.memory_space<vmem>>, %arg2: memref<27x128xbf16, #tpu.memory_space<vmem>>, %arg3: memref<1x128xf32, #tpu.memory_space<vmem>>, %arg4: memref<1x128xf32, #tpu.memory_space<vmem>>, %arg5: memref<64x128xbf16, #tpu.memory_space<vmem>>) attributes {dimension_semantics = [#tpu.dimension_semantics<parallel>], iteration_bounds = array<i64: 2>, scalar_prefetch = 0 : i64, scratch_operands = 0 : i64, tpu.core_type = #tpu.core_type<tc>, window_params = [{transform_indices = @transform_0, window_bounds = array<i64: 64, 27>}, {pipeline_mode = #tpu.pipeline_mode<synchronous>, transform_indices = @transform_1, window_bounds = array<i64: 27, 128>}, {pipeline_mode = #tpu.pipeline_mode<synchronous>, transform_indices = @transform_2, window_bounds = array<i64: 1, 128>}, {pipeline_mode = #tpu.pipeline_mode<synchronous>, transform_indices = @transform_3, window_bounds = array<i64: 1, 128>}, {transform_indices = @transform_4, window_bounds = array<i64: 64, 128>}]} {
    %c0 = arith.constant 0 : index
    %c0_0 = arith.constant 0 : index
    %0 = vector.load %arg1[%c0, %c0_0] : memref<64x27xbf16, #tpu.memory_space<vmem>>, vector<64x27xbf16>
    %c0_1 = arith.constant 0 : index
    %c0_2 = arith.constant 0 : index
    %1 = vector.load %arg2[%c0_1, %c0_2] : memref<27x128xbf16, #tpu.memory_space<vmem>>, vector<27x128xbf16>
    %cst = arith.constant dense<0.000000e+00> : vector<64x128xf32>
    %2 = tpu.matmul %0, %1, %cst {dimension_numbers = #tpu.dot_dimension_numbers<[1], [0], [0], [1], [0, 0, 1, 1], [], []>} : vector<64x27xbf16>, vector<27x128xbf16>, vector<64x128xf32> -> vector<64x128xf32>
    %c0_3 = arith.constant 0 : index
    %c0_4 = arith.constant 0 : index
    %3 = vector.load %arg3[%c0_3, %c0_4] : memref<1x128xf32, #tpu.memory_space<vmem>>, vector<1x128xf32>
    %4 = vector.broadcast %3 : vector<1x128xf32> to vector<64x128xf32>
    %5 = arith.mulf %2, %4 : vector<64x128xf32>
    %c0_5 = arith.constant 0 : index
    %c0_6 = arith.constant 0 : index
    %6 = vector.load %arg4[%c0_5, %c0_6] : memref<1x128xf32, #tpu.memory_space<vmem>>, vector<1x128xf32>
    %7 = vector.broadcast %6 : vector<1x128xf32> to vector<64x128xf32>
    %8 = arith.addf %5, %7 : vector<64x128xf32>
    %9 = arith.negf %8 : vector<64x128xf32>
    %10 = math.exp %9 : vector<64x128xf32>
    %cst_7 = arith.constant 1.000000e+00 : f32
    %11 = vector.broadcast %cst_7 : f32 to vector<64x128xf32>
    %12 = arith.addf %11, %10 : vector<64x128xf32>
    %13 = arith.divf %11, %12 : vector<64x128xf32>
    %14 = arith.mulf %8, %13 : vector<64x128xf32>
    %15 = arith.truncf %14 : vector<64x128xf32> to vector<64x128xbf16>
    %c0_8 = arith.constant 0 : index
    %c0_9 = arith.constant 0 : index
    %16 = vector.load %arg5[%c0_8, %c0_9] : memref<64x128xbf16, #tpu.memory_space<vmem>>, vector<64x128xbf16>
    tpu.vector_store %arg5[%c0_8, %c0_9], %15 {strides = array<i32>} : memref<64x128xbf16, #tpu.memory_space<vmem>>, vector<64x128xbf16>,
    return
  }
  func.func @transform_0(%arg0: i32) -> (i32, i32) {
    %c0_i32 = arith.constant 0 : i32
    %c0_i32_0 = arith.constant 0 : i32
    return %arg0, %c0_i32 : i32, i32
  }
  func.func @transform_1(%arg0: i32) -> (i32, i32) {
    %c0_i32 = arith.constant 0 : i32
    %c0_i32_0 = arith.constant 0 : i32
    %c0_i32_1 = arith.constant 0 : i32
    return %c0_i32, %c0_i32_0 : i32, i32
  }
  func.func @transform_2(%arg0: i32) -> (i32, i32) {
    %c0_i32 = arith.constant 0 : i32
    %c0_i32_0 = arith.constant 0 : i32
    %c0_i32_1 = arith.constant 0 : i32
    return %c0_i32, %c0_i32_0 : i32, i32
  }
  func.func @transform_3(%arg0: i32) -> (i32, i32) {
    %c0_i32 = arith.constant 0 : i32
    %c0_i32_0 = arith.constant 0 : i32
    %c0_i32_1 = arith.constant 0 : i32
    return %c0_i32, %c0_i32_0 : i32, i32
  }
  func.func @transform_4(%arg0: i32) -> (i32, i32) {
    %c0_i32 = arith.constant 0 : i32
    %c0_i32_0 = arith.constant 0 : i32
    return %arg0, %c0_i32 : i32, i32
  }
}

module attributes {stable_mosaic.version = 11 : i64} {
  func.func @_stage1_expand_kernel(%arg0: i32, %arg1: memref<1x10x10x128xbf16, #tpu.memory_space<vmem>>, %arg2: memref<9x128x128xbf16, #tpu.memory_space<vmem>>, %arg3: memref<1x128xf32, #tpu.memory_space<vmem>>, %arg4: memref<1x128xf32, #tpu.memory_space<vmem>>, %arg5: memref<128x128xbf16, #tpu.memory_space<vmem>>, %arg6: memref<1x128xf32, #tpu.memory_space<vmem>>, %arg7: memref<1x128xf32, #tpu.memory_space<vmem>>, %arg8: memref<1x64x128xbf16, #tpu.memory_space<vmem>>) attributes {dimension_semantics = [#tpu.dimension_semantics<parallel>], iteration_bounds = array<i64: 2>, scalar_prefetch = 0 : i64, scratch_operands = 0 : i64, tpu.core_type = #tpu.core_type<tc>, window_params = [{transform_indices = @transform_0, window_bounds = array<i64: 1, 10, 10, 128>}, {pipeline_mode = #tpu.pipeline_mode<synchronous>, transform_indices = @transform_1, window_bounds = array<i64: 9, 128, 128>}, {pipeline_mode = #tpu.pipeline_mode<synchronous>, transform_indices = @transform_2, window_bounds = array<i64: 1, 128>}, {pipeline_mode = #tpu.pipeline_mode<synchronous>, transform_indices = @transform_3, window_bounds = array<i64: 1, 128>}, {pipeline_mode = #tpu.pipeline_mode<synchronous>, transform_indices = @transform_4, window_bounds = array<i64: 128, 128>}, {pipeline_mode = #tpu.pipeline_mode<synchronous>, transform_indices = @transform_5, window_bounds = array<i64: 1, 128>}, {pipeline_mode = #tpu.pipeline_mode<synchronous>, transform_indices = @transform_6, window_bounds = array<i64: 1, 128>}, {transform_indices = @transform_7, window_bounds = array<i64: 1, 64, 128>}]} {
    %c0 = arith.constant 0 : index
    %c0_0 = arith.constant 0 : index
    %c0_1 = arith.constant 0 : index
    %c0_2 = arith.constant 0 : index
    %0 = vector.load %arg1[%c0, %c0_0, %c0_1, %c0_2] : memref<1x10x10x128xbf16, #tpu.memory_space<vmem>>, vector<1x10x10x128xbf16>
    %1 = vector.shape_cast %0 : vector<1x10x10x128xbf16> to vector<10x10x128xbf16>
    %2 = arith.extf %1 : vector<10x10x128xbf16> to vector<10x10x128xf32>
    %cst = arith.constant 0.000000e+00 : f32
    %3 = vector.broadcast %cst : f32 to vector<64x128xf32>
    %4 = vector.extract_strided_slice %2 {offsets = [0, 0, 0], sizes = [8, 8, 128], strides = [1, 1, 1]} : vector<10x10x128xf32> to vector<8x8x128xf32>
    %5 = vector.shape_cast %4 : vector<8x8x128xf32> to vector<64x128xf32>
    %6 = arith.truncf %5 : vector<64x128xf32> to vector<64x128xbf16>
    %c0_3 = arith.constant 0 : index
    %c0_4 = arith.constant 0 : index
    %c0_5 = arith.constant 0 : index
    %7 = vector.load %arg2[%c0_3, %c0_4, %c0_5] : memref<9x128x128xbf16, #tpu.memory_space<vmem>>, vector<1x128x128xbf16>
    %8 = vector.shape_cast %7 : vector<1x128x128xbf16> to vector<128x128xbf16>
    %cst_6 = arith.constant dense<0.000000e+00> : vector<64x128xf32>
    %9 = tpu.matmul %6, %8, %cst_6 {dimension_numbers = #tpu.dot_dimension_numbers<[1], [0], [0], [1], [0, 0, 1, 1], [], []>} : vector<64x128xbf16>, vector<128x128xbf16>, vector<64x128xf32> -> vector<64x128xf32>
    %10 = arith.addf %3, %9 : vector<64x128xf32>
    %11 = vector.extract_strided_slice %2 {offsets = [0, 1, 0], sizes = [8, 8, 128], strides = [1, 1, 1]} : vector<10x10x128xf32> to vector<8x8x128xf32>
    %12 = vector.shape_cast %11 : vector<8x8x128xf32> to vector<64x128xf32>
    %13 = arith.truncf %12 : vector<64x128xf32> to vector<64x128xbf16>
    %c1 = arith.constant 1 : index
    %c0_7 = arith.constant 0 : index
    %c0_8 = arith.constant 0 : index
    %14 = vector.load %arg2[%c1, %c0_7, %c0_8] : memref<9x128x128xbf16, #tpu.memory_space<vmem>>, vector<1x128x128xbf16>
    %15 = vector.shape_cast %14 : vector<1x128x128xbf16> to vector<128x128xbf16>
    %cst_9 = arith.constant dense<0.000000e+00> : vector<64x128xf32>
    %16 = tpu.matmul %13, %15, %cst_9 {dimension_numbers = #tpu.dot_dimension_numbers<[1], [0], [0], [1], [0, 0, 1, 1], [], []>} : vector<64x128xbf16>, vector<128x128xbf16>, vector<64x128xf32> -> vector<64x128xf32>
    %17 = arith.addf %10, %16 : vector<64x128xf32>
    %18 = vector.extract_strided_slice %2 {offsets = [0, 2, 0], sizes = [8, 8, 128], strides = [1, 1, 1]} : vector<10x10x128xf32> to vector<8x8x128xf32>
    %19 = vector.shape_cast %18 : vector<8x8x128xf32> to vector<64x128xf32>
    %20 = arith.truncf %19 : vector<64x128xf32> to vector<64x128xbf16>
    %c2 = arith.constant 2 : index
    %c0_10 = arith.constant 0 : index
    %c0_11 = arith.constant 0 : index
    %21 = vector.load %arg2[%c2, %c0_10, %c0_11] : memref<9x128x128xbf16, #tpu.memory_space<vmem>>, vector<1x128x128xbf16>
    %22 = vector.shape_cast %21 : vector<1x128x128xbf16> to vector<128x128xbf16>
    %cst_12 = arith.constant dense<0.000000e+00> : vector<64x128xf32>
    %23 = tpu.matmul %20, %22, %cst_12 {dimension_numbers = #tpu.dot_dimension_numbers<[1], [0], [0], [1], [0, 0, 1, 1], [], []>} : vector<64x128xbf16>, vector<128x128xbf16>, vector<64x128xf32> -> vector<64x128xf32>
    %24 = arith.addf %17, %23 : vector<64x128xf32>
    %25 = vector.extract_strided_slice %2 {offsets = [1, 0, 0], sizes = [8, 8, 128], strides = [1, 1, 1]} : vector<10x10x128xf32> to vector<8x8x128xf32>
    %26 = vector.shape_cast %25 : vector<8x8x128xf32> to vector<64x128xf32>
    %27 = arith.truncf %26 : vector<64x128xf32> to vector<64x128xbf16>
    %c3 = arith.constant 3 : index
    %c0_13 = arith.constant 0 : index
    %c0_14 = arith.constant 0 : index
    %28 = vector.load %arg2[%c3, %c0_13, %c0_14] : memref<9x128x128xbf16, #tpu.memory_space<vmem>>, vector<1x128x128xbf16>
    %29 = vector.shape_cast %28 : vector<1x128x128xbf16> to vector<128x128xbf16>
    %cst_15 = arith.constant dense<0.000000e+00> : vector<64x128xf32>
    %30 = tpu.matmul %27, %29, %cst_15 {dimension_numbers = #tpu.dot_dimension_numbers<[1], [0], [0], [1], [0, 0, 1, 1], [], []>} : vector<64x128xbf16>, vector<128x128xbf16>, vector<64x128xf32> -> vector<64x128xf32>
    %31 = arith.addf %24, %30 : vector<64x128xf32>
    %32 = vector.extract_strided_slice %2 {offsets = [1, 1, 0], sizes = [8, 8, 128], strides = [1, 1, 1]} : vector<10x10x128xf32> to vector<8x8x128xf32>
    %33 = vector.shape_cast %32 : vector<8x8x128xf32> to vector<64x128xf32>
    %34 = arith.truncf %33 : vector<64x128xf32> to vector<64x128xbf16>
    %c4 = arith.constant 4 : index
    %c0_16 = arith.constant 0 : index
    %c0_17 = arith.constant 0 : index
    %35 = vector.load %arg2[%c4, %c0_16, %c0_17] : memref<9x128x128xbf16, #tpu.memory_space<vmem>>, vector<1x128x128xbf16>
    %36 = vector.shape_cast %35 : vector<1x128x128xbf16> to vector<128x128xbf16>
    %cst_18 = arith.constant dense<0.000000e+00> : vector<64x128xf32>
    %37 = tpu.matmul %34, %36, %cst_18 {dimension_numbers = #tpu.dot_dimension_numbers<[1], [0], [0], [1], [0, 0, 1, 1], [], []>} : vector<64x128xbf16>, vector<128x128xbf16>, vector<64x128xf32> -> vector<64x128xf32>
    %38 = arith.addf %31, %37 : vector<64x128xf32>
    %39 = vector.extract_strided_slice %2 {offsets = [1, 2, 0], sizes = [8, 8, 128], strides = [1, 1, 1]} : vector<10x10x128xf32> to vector<8x8x128xf32>
    %40 = vector.shape_cast %39 : vector<8x8x128xf32> to vector<64x128xf32>
    %41 = arith.truncf %40 : vector<64x128xf32> to vector<64x128xbf16>
    %c5 = arith.constant 5 : index
    %c0_19 = arith.constant 0 : index
    %c0_20 = arith.constant 0 : index
    %42 = vector.load %arg2[%c5, %c0_19, %c0_20] : memref<9x128x128xbf16, #tpu.memory_space<vmem>>, vector<1x128x128xbf16>
    %43 = vector.shape_cast %42 : vector<1x128x128xbf16> to vector<128x128xbf16>
    %cst_21 = arith.constant dense<0.000000e+00> : vector<64x128xf32>
    %44 = tpu.matmul %41, %43, %cst_21 {dimension_numbers = #tpu.dot_dimension_numbers<[1], [0], [0], [1], [0, 0, 1, 1], [], []>} : vector<64x128xbf16>, vector<128x128xbf16>, vector<64x128xf32> -> vector<64x128xf32>
    %45 = arith.addf %38, %44 : vector<64x128xf32>
    %46 = vector.extract_strided_slice %2 {offsets = [2, 0, 0], sizes = [8, 8, 128], strides = [1, 1, 1]} : vector<10x10x128xf32> to vector<8x8x128xf32>
    %47 = vector.shape_cast %46 : vector<8x8x128xf32> to vector<64x128xf32>
    %48 = arith.truncf %47 : vector<64x128xf32> to vector<64x128xbf16>
    %c6 = arith.constant 6 : index
    %c0_22 = arith.constant 0 : index
    %c0_23 = arith.constant 0 : index
    %49 = vector.load %arg2[%c6, %c0_22, %c0_23] : memref<9x128x128xbf16, #tpu.memory_space<vmem>>, vector<1x128x128xbf16>
    %50 = vector.shape_cast %49 : vector<1x128x128xbf16> to vector<128x128xbf16>
    %cst_24 = arith.constant dense<0.000000e+00> : vector<64x128xf32>
    %51 = tpu.matmul %48, %50, %cst_24 {dimension_numbers = #tpu.dot_dimension_numbers<[1], [0], [0], [1], [0, 0, 1, 1], [], []>} : vector<64x128xbf16>, vector<128x128xbf16>, vector<64x128xf32> -> vector<64x128xf32>
    %52 = arith.addf %45, %51 : vector<64x128xf32>
    %53 = vector.extract_strided_slice %2 {offsets = [2, 1, 0], sizes = [8, 8, 128], strides = [1, 1, 1]} : vector<10x10x128xf32> to vector<8x8x128xf32>
    %54 = vector.shape_cast %53 : vector<8x8x128xf32> to vector<64x128xf32>
    %55 = arith.truncf %54 : vector<64x128xf32> to vector<64x128xbf16>
    %c7 = arith.constant 7 : index
    %c0_25 = arith.constant 0 : index
    %c0_26 = arith.constant 0 : index
    %56 = vector.load %arg2[%c7, %c0_25, %c0_26] : memref<9x128x128xbf16, #tpu.memory_space<vmem>>, vector<1x128x128xbf16>
    %57 = vector.shape_cast %56 : vector<1x128x128xbf16> to vector<128x128xbf16>
    %cst_27 = arith.constant dense<0.000000e+00> : vector<64x128xf32>
    %58 = tpu.matmul %55, %57, %cst_27 {dimension_numbers = #tpu.dot_dimension_numbers<[1], [0], [0], [1], [0, 0, 1, 1], [], []>} : vector<64x128xbf16>, vector<128x128xbf16>, vector<64x128xf32> -> vector<64x128xf32>
    %59 = arith.addf %52, %58 : vector<64x128xf32>
    %60 = vector.extract_strided_slice %2 {offsets = [2, 2, 0], sizes = [8, 8, 128], strides = [1, 1, 1]} : vector<10x10x128xf32> to vector<8x8x128xf32>
    %61 = vector.shape_cast %60 : vector<8x8x128xf32> to vector<64x128xf32>
    %62 = arith.truncf %61 : vector<64x128xf32> to vector<64x128xbf16>
    %c8 = arith.constant 8 : index
    %c0_28 = arith.constant 0 : index
    %c0_29 = arith.constant 0 : index
    %63 = vector.load %arg2[%c8, %c0_28, %c0_29] : memref<9x128x128xbf16, #tpu.memory_space<vmem>>, vector<1x128x128xbf16>
    %64 = vector.shape_cast %63 : vector<1x128x128xbf16> to vector<128x128xbf16>
    %cst_30 = arith.constant dense<0.000000e+00> : vector<64x128xf32>
    %65 = tpu.matmul %62, %64, %cst_30 {dimension_numbers = #tpu.dot_dimension_numbers<[1], [0], [0], [1], [0, 0, 1, 1], [], []>} : vector<64x128xbf16>, vector<128x128xbf16>, vector<64x128xf32> -> vector<64x128xf32>
    %66 = arith.addf %59, %65 : vector<64x128xf32>
    %c0_31 = arith.constant 0 : index
    %c0_32 = arith.constant 0 : index
    %67 = vector.load %arg3[%c0_31, %c0_32] : memref<1x128xf32, #tpu.memory_space<vmem>>, vector<1x128xf32>
    %68 = vector.broadcast %67 : vector<1x128xf32> to vector<64x128xf32>
    %69 = arith.mulf %66, %68 : vector<64x128xf32>
    %c0_33 = arith.constant 0 : index
    %c0_34 = arith.constant 0 : index
    %70 = vector.load %arg4[%c0_33, %c0_34] : memref<1x128xf32, #tpu.memory_space<vmem>>, vector<1x128xf32>
    %71 = vector.broadcast %70 : vector<1x128xf32> to vector<64x128xf32>
    %72 = arith.addf %69, %71 : vector<64x128xf32>
    %73 = arith.negf %72 : vector<64x128xf32>
    %74 = math.exp %73 : vector<64x128xf32>
    %cst_35 = arith.constant 1.000000e+00 : f32
    %75 = vector.broadcast %cst_35 : f32 to vector<64x128xf32>
    %76 = arith.addf %75, %74 : vector<64x128xf32>
    %77 = arith.divf %75, %76 : vector<64x128xf32>
    %78 = arith.mulf %72, %77 : vector<64x128xf32>
    %79 = vector.extract_strided_slice %2 {offsets = [1, 1, 0], sizes = [8, 8, 128], strides = [1, 1, 1]} : vector<10x10x128xf32> to vector<8x8x128xf32>
    %80 = vector.shape_cast %79 : vector<8x8x128xf32> to vector<64x128xf32>
    %81 = arith.addf %78, %80 : vector<64x128xf32>
    %82 = arith.truncf %81 : vector<64x128xf32> to vector<64x128xbf16>
    %c0_36 = arith.constant 0 : index
    %c0_37 = arith.constant 0 : index
    %83 = vector.load %arg5[%c0_36, %c0_37] : memref<128x128xbf16, #tpu.memory_space<vmem>>, vector<128x128xbf16>
    %cst_38 = arith.constant dense<0.000000e+00> : vector<64x128xf32>
    %84 = tpu.matmul %82, %83, %cst_38 {dimension_numbers = #tpu.dot_dimension_numbers<[1], [0], [0], [1], [0, 0, 1, 1], [], []>} : vector<64x128xbf16>, vector<128x128xbf16>, vector<64x128xf32> -> vector<64x128xf32>
    %c0_39 = arith.constant 0 : index
    %c0_40 = arith.constant 0 : index
    %85 = vector.load %arg6[%c0_39, %c0_40] : memref<1x128xf32, #tpu.memory_space<vmem>>, vector<1x128xf32>
    %86 = vector.broadcast %85 : vector<1x128xf32> to vector<64x128xf32>
    %87 = arith.mulf %84, %86 : vector<64x128xf32>
    %c0_41 = arith.constant 0 : index
    %c0_42 = arith.constant 0 : index
    %88 = vector.load %arg7[%c0_41, %c0_42] : memref<1x128xf32, #tpu.memory_space<vmem>>, vector<1x128xf32>
    %89 = vector.broadcast %88 : vector<1x128xf32> to vector<64x128xf32>
    %90 = arith.addf %87, %89 : vector<64x128xf32>
    %91 = arith.negf %90 : vector<64x128xf32>
    %92 = math.exp %91 : vector<64x128xf32>
    %cst_43 = arith.constant 1.000000e+00 : f32
    %93 = vector.broadcast %cst_43 : f32 to vector<64x128xf32>
    %94 = arith.addf %93, %92 : vector<64x128xf32>
    %95 = arith.divf %93, %94 : vector<64x128xf32>
    %96 = arith.mulf %90, %95 : vector<64x128xf32>
    %97 = arith.truncf %96 : vector<64x128xf32> to vector<64x128xbf16>
    %c0_44 = arith.constant 0 : index
    %c0_45 = arith.constant 0 : index
    %c0_46 = arith.constant 0 : index
    %98 = vector.load %arg8[%c0_44, %c0_45, %c0_46] : memref<1x64x128xbf16, #tpu.memory_space<vmem>>, vector<1x64x128xbf16>
    %99 = vector.shape_cast %98 : vector<1x64x128xbf16> to vector<64x128xbf16>
    %100 = vector.shape_cast %97 : vector<64x128xbf16> to vector<1x64x128xbf16>
    tpu.vector_store %arg8[%c0_44, %c0_45, %c0_46], %100 {strides = array<i32>} : memref<1x64x128xbf16, #tpu.memory_space<vmem>>, vector<1x64x128xbf16>,
    return
  }
  func.func @transform_0(%arg0: i32) -> (i32, i32, i32, i32) {
    %c0_i32 = arith.constant 0 : i32
    %c0_i32_0 = arith.constant 0 : i32
    %c0_i32_1 = arith.constant 0 : i32
    %c0_i32_2 = arith.constant 0 : i32
    return %arg0, %c0_i32, %c0_i32_0, %c0_i32_1 : i32, i32, i32, i32
  }
  func.func @transform_1(%arg0: i32) -> (i32, i32, i32) {
    %c0_i32 = arith.constant 0 : i32
    %c0_i32_0 = arith.constant 0 : i32
    %c0_i32_1 = arith.constant 0 : i32
    %c0_i32_2 = arith.constant 0 : i32
    return %c0_i32, %c0_i32_0, %c0_i32_1 : i32, i32, i32
  }
  func.func @transform_2(%arg0: i32) -> (i32, i32) {
    %c0_i32 = arith.constant 0 : i32
    %c0_i32_0 = arith.constant 0 : i32
    %c0_i32_1 = arith.constant 0 : i32
    return %c0_i32, %c0_i32_0 : i32, i32
  }
  func.func @transform_3(%arg0: i32) -> (i32, i32) {
    %c0_i32 = arith.constant 0 : i32
    %c0_i32_0 = arith.constant 0 : i32
    %c0_i32_1 = arith.constant 0 : i32
    return %c0_i32, %c0_i32_0 : i32, i32
  }
  func.func @transform_4(%arg0: i32) -> (i32, i32) {
    %c0_i32 = arith.constant 0 : i32
    %c0_i32_0 = arith.constant 0 : i32
    %c0_i32_1 = arith.constant 0 : i32
    return %c0_i32, %c0_i32_0 : i32, i32
  }
  func.func @transform_5(%arg0: i32) -> (i32, i32) {
    %c0_i32 = arith.constant 0 : i32
    %c0_i32_0 = arith.constant 0 : i32
    %c0_i32_1 = arith.constant 0 : i32
    return %c0_i32, %c0_i32_0 : i32, i32
  }
  func.func @transform_6(%arg0: i32) -> (i32, i32) {
    %c0_i32 = arith.constant 0 : i32
    %c0_i32_0 = arith.constant 0 : i32
    %c0_i32_1 = arith.constant 0 : i32
    return %c0_i32, %c0_i32_0 : i32, i32
  }
  func.func @transform_7(%arg0: i32) -> (i32, i32, i32) {
    %c0_i32 = arith.constant 0 : i32
    %c0_i32_0 = arith.constant 0 : i32
    %c0_i32_1 = arith.constant 0 : i32
    return %arg0, %c0_i32, %c0_i32_0 : i32, i32, i32
  }
}

module attributes {stable_mosaic.version = 11 : i64} {
  func.func @_dw_se_proj_head_kernel(%arg0: i32, %arg1: memref<1x5x5x128xbf16, #tpu.memory_space<vmem>>, %arg2: memref<1x5x5x128xbf16, #tpu.memory_space<vmem>>, %arg3: memref<1x5x5x128xbf16, #tpu.memory_space<vmem>>, %arg4: memref<1x5x5x128xbf16, #tpu.memory_space<vmem>>, %arg5: memref<9x128xf32, #tpu.memory_space<vmem>>, %arg6: memref<1x128xf32, #tpu.memory_space<vmem>>, %arg7: memref<1x128xf32, #tpu.memory_space<vmem>>, %arg8: memref<128x128xbf16, #tpu.memory_space<vmem>>, %arg9: memref<1x128xf32, #tpu.memory_space<vmem>>, %arg10: memref<128x128xbf16, #tpu.memory_space<vmem>>, %arg11: memref<1x128xf32, #tpu.memory_space<vmem>>, %arg12: memref<128x128xbf16, #tpu.memory_space<vmem>>, %arg13: memref<1x128xf32, #tpu.memory_space<vmem>>, %arg14: memref<1x128xf32, #tpu.memory_space<vmem>>, %arg15: memref<128x128xbf16, #tpu.memory_space<vmem>>, %arg16: memref<1x128xf32, #tpu.memory_space<vmem>>, %arg17: memref<1x128xf32, #tpu.memory_space<vmem>>, %arg18: memref<1x1x128xf32, #tpu.memory_space<vmem>>) attributes {dimension_semantics = [#tpu.dimension_semantics<parallel>], iteration_bounds = array<i64: 2>, scalar_prefetch = 0 : i64, scratch_operands = 0 : i64, tpu.core_type = #tpu.core_type<tc>, window_params = [{transform_indices = @transform_0, window_bounds = array<i64: 1, 5, 5, 128>}, {transform_indices = @transform_1, window_bounds = array<i64: 1, 5, 5, 128>}, {transform_indices = @transform_2, window_bounds = array<i64: 1, 5, 5, 128>}, {transform_indices = @transform_3, window_bounds = array<i64: 1, 5, 5, 128>}, {pipeline_mode = #tpu.pipeline_mode<synchronous>, transform_indices = @transform_4, window_bounds = array<i64: 9, 128>}, {pipeline_mode = #tpu.pipeline_mode<synchronous>, transform_indices = @transform_5, window_bounds = array<i64: 1, 128>}, {pipeline_mode = #tpu.pipeline_mode<synchronous>, transform_indices = @transform_6, window_bounds = array<i64: 1, 128>}, {pipeline_mode = #tpu.pipeline_mode<synchronous>, transform_indices = @transform_7, window_bounds = array<i64: 128, 128>}, {pipeline_mode = #tpu.pipeline_mode<synchronous>, transform_indices = @transform_8, window_bounds = array<i64: 1, 128>}, {pipeline_mode = #tpu.pipeline_mode<synchronous>, transform_indices = @transform_9, window_bounds = array<i64: 128, 128>}, {pipeline_mode = #tpu.pipeline_mode<synchronous>, transform_indices = @transform_10, window_bounds = array<i64: 1, 128>}, {pipeline_mode = #tpu.pipeline_mode<synchronous>, transform_indices = @transform_11, window_bounds = array<i64: 128, 128>}, {pipeline_mode = #tpu.pipeline_mode<synchronous>, transform_indices = @transform_12, window_bounds = array<i64: 1, 128>}, {pipeline_mode = #tpu.pipeline_mode<synchronous>, transform_indices = @transform_13, window_bounds = array<i64: 1, 128>}, {pipeline_mode = #tpu.pipeline_mode<synchronous>, transform_indices = @transform_14, window_bounds = array<i64: 128, 128>}, {pipeline_mode = #tpu.pipeline_mode<synchronous>, transform_indices = @transform_15, window_bounds = array<i64: 1, 128>}, {pipeline_mode = #tpu.pipeline_mode<synchronous>, transform_indices = @transform_16, window_bounds = array<i64: 1, 128>}, {transform_indices = @transform_17, window_bounds = array<i64: 1, 1, 128>}]} {
    %c0 = arith.constant 0 : index
    %c0_0 = arith.constant 0 : index
    %c0_1 = arith.constant 0 : index
    %c0_2 = arith.constant 0 : index
    %0 = vector.load %arg1[%c0, %c0_0, %c0_1, %c0_2] : memref<1x5x5x128xbf16, #tpu.memory_space<vmem>>, vector<1x5x5x128xbf16>
    %1 = vector.shape_cast %0 : vector<1x5x5x128xbf16> to vector<5x5x128xbf16>
    %2 = arith.extf %1 : vector<5x5x128xbf16> to vector<5x5x128xf32>
    %c0_3 = arith.constant 0 : index
    %c0_4 = arith.constant 0 : index
    %c0_5 = arith.constant 0 : index
    %c0_6 = arith.constant 0 : index
    %3 = vector.load %arg2[%c0_3, %c0_4, %c0_5, %c0_6] : memref<1x5x5x128xbf16, #tpu.memory_space<vmem>>, vector<1x5x5x128xbf16>
    %4 = vector.shape_cast %3 : vector<1x5x5x128xbf16> to vector<5x5x128xbf16>
    %5 = arith.extf %4 : vector<5x5x128xbf16> to vector<5x5x128xf32>
    %c0_7 = arith.constant 0 : index
    %c0_8 = arith.constant 0 : index
    %c0_9 = arith.constant 0 : index
    %c0_10 = arith.constant 0 : index
    %6 = vector.load %arg3[%c0_7, %c0_8, %c0_9, %c0_10] : memref<1x5x5x128xbf16, #tpu.memory_space<vmem>>, vector<1x5x5x128xbf16>
    %7 = vector.shape_cast %6 : vector<1x5x5x128xbf16> to vector<5x5x128xbf16>
    %8 = arith.extf %7 : vector<5x5x128xbf16> to vector<5x5x128xf32>
    %c0_11 = arith.constant 0 : index
    %c0_12 = arith.constant 0 : index
    %c0_13 = arith.constant 0 : index
    %c0_14 = arith.constant 0 : index
    %9 = vector.load %arg4[%c0_11, %c0_12, %c0_13, %c0_14] : memref<1x5x5x128xbf16, #tpu.memory_space<vmem>>, vector<1x5x5x128xbf16>
    %10 = vector.shape_cast %9 : vector<1x5x5x128xbf16> to vector<5x5x128xbf16>
    %11 = arith.extf %10 : vector<5x5x128xbf16> to vector<5x5x128xf32>
    %cst = arith.constant 0.000000e+00 : f32
    %12 = vector.broadcast %cst : f32 to vector<4x4x128xf32>
    %13 = vector.extract_strided_slice %2 {offsets = [0, 0, 0], sizes = [4, 4, 128], strides = [1, 1, 1]} : vector<5x5x128xf32> to vector<4x4x128xf32>
    %c0_15 = arith.constant 0 : index
    %c0_16 = arith.constant 0 : index
    %14 = vector.load %arg5[%c0_15, %c0_16] : memref<9x128xf32, #tpu.memory_space<vmem>>, vector<1x128xf32>
    %15 = vector.shape_cast %14 : vector<1x128xf32> to vector<1x1x128xf32>
    %16 = vector.broadcast %15 : vector<1x1x128xf32> to vector<4x4x128xf32>
    %17 = arith.mulf %13, %16 : vector<4x4x128xf32>
    %18 = arith.addf %12, %17 : vector<4x4x128xf32>
    %19 = vector.extract_strided_slice %5 {offsets = [0, 0, 0], sizes = [4, 4, 128], strides = [1, 1, 1]} : vector<5x5x128xf32> to vector<4x4x128xf32>
    %c1 = arith.constant 1 : index
    %c0_17 = arith.constant 0 : index
    %20 = vector.load %arg5[%c1, %c0_17] : memref<9x128xf32, #tpu.memory_space<vmem>>, vector<1x128xf32>
    %21 = vector.shape_cast %20 : vector<1x128xf32> to vector<1x1x128xf32>
    %22 = vector.broadcast %21 : vector<1x1x128xf32> to vector<4x4x128xf32>
    %23 = arith.mulf %19, %22 : vector<4x4x128xf32>
    %24 = arith.addf %18, %23 : vector<4x4x128xf32>
    %25 = vector.extract_strided_slice %2 {offsets = [0, 1, 0], sizes = [4, 4, 128], strides = [1, 1, 1]} : vector<5x5x128xf32> to vector<4x4x128xf32>
    %c2 = arith.constant 2 : index
    %c0_18 = arith.constant 0 : index
    %26 = vector.load %arg5[%c2, %c0_18] : memref<9x128xf32, #tpu.memory_space<vmem>>, vector<1x128xf32>
    %27 = vector.shape_cast %26 : vector<1x128xf32> to vector<1x1x128xf32>
    %28 = vector.broadcast %27 : vector<1x1x128xf32> to vector<4x4x128xf32>
    %29 = arith.mulf %25, %28 : vector<4x4x128xf32>
    %30 = arith.addf %24, %29 : vector<4x4x128xf32>
    %31 = vector.extract_strided_slice %8 {offsets = [0, 0, 0], sizes = [4, 4, 128], strides = [1, 1, 1]} : vector<5x5x128xf32> to vector<4x4x128xf32>
    %c3 = arith.constant 3 : index
    %c0_19 = arith.constant 0 : index
    %32 = vector.load %arg5[%c3, %c0_19] : memref<9x128xf32, #tpu.memory_space<vmem>>, vector<1x128xf32>
    %33 = vector.shape_cast %32 : vector<1x128xf32> to vector<1x1x128xf32>
    %34 = vector.broadcast %33 : vector<1x1x128xf32> to vector<4x4x128xf32>
    %35 = arith.mulf %31, %34 : vector<4x4x128xf32>
    %36 = arith.addf %30, %35 : vector<4x4x128xf32>
    %37 = vector.extract_strided_slice %11 {offsets = [0, 0, 0], sizes = [4, 4, 128], strides = [1, 1, 1]} : vector<5x5x128xf32> to vector<4x4x128xf32>
    %c4 = arith.constant 4 : index
    %c0_20 = arith.constant 0 : index
    %38 = vector.load %arg5[%c4, %c0_20] : memref<9x128xf32, #tpu.memory_space<vmem>>, vector<1x128xf32>
    %39 = vector.shape_cast %38 : vector<1x128xf32> to vector<1x1x128xf32>
    %40 = vector.broadcast %39 : vector<1x1x128xf32> to vector<4x4x128xf32>
    %41 = arith.mulf %37, %40 : vector<4x4x128xf32>
    %42 = arith.addf %36, %41 : vector<4x4x128xf32>
    %43 = vector.extract_strided_slice %8 {offsets = [0, 1, 0], sizes = [4, 4, 128], strides = [1, 1, 1]} : vector<5x5x128xf32> to vector<4x4x128xf32>
    %c5 = arith.constant 5 : index
    %c0_21 = arith.constant 0 : index
    %44 = vector.load %arg5[%c5, %c0_21] : memref<9x128xf32, #tpu.memory_space<vmem>>, vector<1x128xf32>
    %45 = vector.shape_cast %44 : vector<1x128xf32> to vector<1x1x128xf32>
    %46 = vector.broadcast %45 : vector<1x1x128xf32> to vector<4x4x128xf32>
    %47 = arith.mulf %43, %46 : vector<4x4x128xf32>
    %48 = arith.addf %42, %47 : vector<4x4x128xf32>
    %49 = vector.extract_strided_slice %2 {offsets = [1, 0, 0], sizes = [4, 4, 128], strides = [1, 1, 1]} : vector<5x5x128xf32> to vector<4x4x128xf32>
    %c6 = arith.constant 6 : index
    %c0_22 = arith.constant 0 : index
    %50 = vector.load %arg5[%c6, %c0_22] : memref<9x128xf32, #tpu.memory_space<vmem>>, vector<1x128xf32>
    %51 = vector.shape_cast %50 : vector<1x128xf32> to vector<1x1x128xf32>
    %52 = vector.broadcast %51 : vector<1x1x128xf32> to vector<4x4x128xf32>
    %53 = arith.mulf %49, %52 : vector<4x4x128xf32>
    %54 = arith.addf %48, %53 : vector<4x4x128xf32>
    %55 = vector.extract_strided_slice %5 {offsets = [1, 0, 0], sizes = [4, 4, 128], strides = [1, 1, 1]} : vector<5x5x128xf32> to vector<4x4x128xf32>
    %c7 = arith.constant 7 : index
    %c0_23 = arith.constant 0 : index
    %56 = vector.load %arg5[%c7, %c0_23] : memref<9x128xf32, #tpu.memory_space<vmem>>, vector<1x128xf32>
    %57 = vector.shape_cast %56 : vector<1x128xf32> to vector<1x1x128xf32>
    %58 = vector.broadcast %57 : vector<1x1x128xf32> to vector<4x4x128xf32>
    %59 = arith.mulf %55, %58 : vector<4x4x128xf32>
    %60 = arith.addf %54, %59 : vector<4x4x128xf32>
    %61 = vector.extract_strided_slice %2 {offsets = [1, 1, 0], sizes = [4, 4, 128], strides = [1, 1, 1]} : vector<5x5x128xf32> to vector<4x4x128xf32>
    %c8 = arith.constant 8 : index
    %c0_24 = arith.constant 0 : index
    %62 = vector.load %arg5[%c8, %c0_24] : memref<9x128xf32, #tpu.memory_space<vmem>>, vector<1x128xf32>
    %63 = vector.shape_cast %62 : vector<1x128xf32> to vector<1x1x128xf32>
    %64 = vector.broadcast %63 : vector<1x1x128xf32> to vector<4x4x128xf32>
    %65 = arith.mulf %61, %64 : vector<4x4x128xf32>
    %66 = arith.addf %60, %65 : vector<4x4x128xf32>
    %c0_25 = arith.constant 0 : index
    %c0_26 = arith.constant 0 : index
    %67 = vector.load %arg6[%c0_25, %c0_26] : memref<1x128xf32, #tpu.memory_space<vmem>>, vector<1x128xf32>
    %68 = vector.shape_cast %67 : vector<1x128xf32> to vector<1x1x128xf32>
    %69 = vector.broadcast %68 : vector<1x1x128xf32> to vector<4x4x128xf32>
    %70 = arith.mulf %66, %69 : vector<4x4x128xf32>
    %c0_27 = arith.constant 0 : index
    %c0_28 = arith.constant 0 : index
    %71 = vector.load %arg7[%c0_27, %c0_28] : memref<1x128xf32, #tpu.memory_space<vmem>>, vector<1x128xf32>
    %72 = vector.shape_cast %71 : vector<1x128xf32> to vector<1x1x128xf32>
    %73 = vector.broadcast %72 : vector<1x1x128xf32> to vector<4x4x128xf32>
    %74 = arith.addf %70, %73 : vector<4x4x128xf32>
    %75 = arith.negf %74 : vector<4x4x128xf32>
    %76 = math.exp %75 : vector<4x4x128xf32>
    %cst_29 = arith.constant 1.000000e+00 : f32
    %77 = vector.broadcast %cst_29 : f32 to vector<4x4x128xf32>
    %78 = arith.addf %77, %76 : vector<4x4x128xf32>
    %79 = arith.divf %77, %78 : vector<4x4x128xf32>
    %80 = arith.mulf %74, %79 : vector<4x4x128xf32>
    %cst_30 = arith.constant dense<0.000000e+00> : vector<128xf32>
    %81 = vector.multi_reduction <add>, %80, %cst_30 [0, 1] : vector<4x4x128xf32> to vector<128xf32>
    %82 = vector.shape_cast %81 : vector<128xf32> to vector<1x1x128xf32>
    %cst_31 = arith.constant 6.250000e-02 : f32
    %83 = vector.broadcast %cst_31 : f32 to vector<1x1x128xf32>
    %84 = arith.mulf %82, %83 : vector<1x1x128xf32>
    %85 = vector.shape_cast %84 : vector<1x1x128xf32> to vector<1x128xf32>
    %86 = arith.truncf %85 : vector<1x128xf32> to vector<1x128xbf16>
    %c0_32 = arith.constant 0 : index
    %c0_33 = arith.constant 0 : index
    %87 = vector.load %arg8[%c0_32, %c0_33] : memref<128x128xbf16, #tpu.memory_space<vmem>>, vector<128x128xbf16>
    %cst_34 = arith.constant dense<0.000000e+00> : vector<1x128xf32>
    %88 = tpu.matmul %86, %87, %cst_34 {dimension_numbers = #tpu.dot_dimension_numbers<[1], [0], [0], [1], [0, 0, 1, 1], [], []>} : vector<1x128xbf16>, vector<128x128xbf16>, vector<1x128xf32> -> vector<1x128xf32>
    %c0_35 = arith.constant 0 : index
    %c0_36 = arith.constant 0 : index
    %89 = vector.load %arg9[%c0_35, %c0_36] : memref<1x128xf32, #tpu.memory_space<vmem>>, vector<1x128xf32>
    %90 = arith.addf %88, %89 : vector<1x128xf32>
    %91 = arith.negf %90 : vector<1x128xf32>
    %92 = math.exp %91 : vector<1x128xf32>
    %cst_37 = arith.constant 1.000000e+00 : f32
    %93 = vector.broadcast %cst_37 : f32 to vector<1x128xf32>
    %94 = arith.addf %93, %92 : vector<1x128xf32>
    %95 = arith.divf %93, %94 : vector<1x128xf32>
    %96 = arith.mulf %90, %95 : vector<1x128xf32>
    %97 = arith.truncf %96 : vector<1x128xf32> to vector<1x128xbf16>
    %c0_38 = arith.constant 0 : index
    %c0_39 = arith.constant 0 : index
    %98 = vector.load %arg10[%c0_38, %c0_39] : memref<128x128xbf16, #tpu.memory_space<vmem>>, vector<128x128xbf16>
    %cst_40 = arith.constant dense<0.000000e+00> : vector<1x128xf32>
    %99 = tpu.matmul %97, %98, %cst_40 {dimension_numbers = #tpu.dot_dimension_numbers<[1], [0], [0], [1], [0, 0, 1, 1], [], []>} : vector<1x128xbf16>, vector<128x128xbf16>, vector<1x128xf32> -> vector<1x128xf32>
    %c0_41 = arith.constant 0 : index
    %c0_42 = arith.constant 0 : index
    %100 = vector.load %arg11[%c0_41, %c0_42] : memref<1x128xf32, #tpu.memory_space<vmem>>, vector<1x128xf32>
    %101 = arith.addf %99, %100 : vector<1x128xf32>
    %102 = arith.negf %101 : vector<1x128xf32>
    %103 = math.exp %102 : vector<1x128xf32>
    %cst_43 = arith.constant 1.000000e+00 : f32
    %104 = vector.broadcast %cst_43 : f32 to vector<1x128xf32>
    %105 = arith.addf %104, %103 : vector<1x128xf32>
    %106 = arith.divf %104, %105 : vector<1x128xf32>
    %107 = vector.shape_cast %106 : vector<1x128xf32> to vector<1x1x128xf32>
    %108 = vector.broadcast %107 : vector<1x1x128xf32> to vector<4x4x128xf32>
    %109 = arith.mulf %80, %108 : vector<4x4x128xf32>
    %cst_44 = arith.constant 0.000000e+00 : f32
    %110 = vector.broadcast %cst_44 : f32 to vector<1x128xf32>
    %111 = vector.extract_strided_slice %109 {offsets = [0, 0, 0], sizes = [1, 4, 128], strides = [1, 1, 1]} : vector<4x4x128xf32> to vector<1x4x128xf32>
    %112 = vector.shape_cast %111 : vector<1x4x128xf32> to vector<4x128xf32>
    %113 = arith.truncf %112 : vector<4x128xf32> to vector<4x128xbf16>
    %c0_45 = arith.constant 0 : index
    %c0_46 = arith.constant 0 : index
    %114 = vector.load %arg12[%c0_45, %c0_46] : memref<128x128xbf16, #tpu.memory_space<vmem>>, vector<128x128xbf16>
    %cst_47 = arith.constant dense<0.000000e+00> : vector<4x128xf32>
    %115 = tpu.matmul %113, %114, %cst_47 {dimension_numbers = #tpu.dot_dimension_numbers<[1], [0], [0], [1], [0, 0, 1, 1], [], []>} : vector<4x128xbf16>, vector<128x128xbf16>, vector<4x128xf32> -> vector<4x128xf32>
    %c0_48 = arith.constant 0 : index
    %c0_49 = arith.constant 0 : index
    %116 = vector.load %arg13[%c0_48, %c0_49] : memref<1x128xf32, #tpu.memory_space<vmem>>, vector<1x128xf32>
    %117 = vector.broadcast %116 : vector<1x128xf32> to vector<4x128xf32>
    %118 = arith.mulf %115, %117 : vector<4x128xf32>
    %c0_50 = arith.constant 0 : index
    %c0_51 = arith.constant 0 : index
    %119 = vector.load %arg14[%c0_50, %c0_51] : memref<1x128xf32, #tpu.memory_space<vmem>>, vector<1x128xf32>
    %120 = vector.broadcast %119 : vector<1x128xf32> to vector<4x128xf32>
    %121 = arith.addf %118, %120 : vector<4x128xf32>
    %122 = arith.truncf %121 : vector<4x128xf32> to vector<4x128xbf16>
    %c0_52 = arith.constant 0 : index
    %c0_53 = arith.constant 0 : index
    %123 = vector.load %arg15[%c0_52, %c0_53] : memref<128x128xbf16, #tpu.memory_space<vmem>>, vector<128x128xbf16>
    %cst_54 = arith.constant dense<0.000000e+00> : vector<4x128xf32>
    %124 = tpu.matmul %122, %123, %cst_54 {dimension_numbers = #tpu.dot_dimension_numbers<[1], [0], [0], [1], [0, 0, 1, 1], [], []>} : vector<4x128xbf16>, vector<128x128xbf16>, vector<4x128xf32> -> vector<4x128xf32>
    %c0_55 = arith.constant 0 : index
    %c0_56 = arith.constant 0 : index
    %125 = vector.load %arg16[%c0_55, %c0_56] : memref<1x128xf32, #tpu.memory_space<vmem>>, vector<1x128xf32>
    %126 = vector.broadcast %125 : vector<1x128xf32> to vector<4x128xf32>
    %127 = arith.mulf %124, %126 : vector<4x128xf32>
    %c0_57 = arith.constant 0 : index
    %c0_58 = arith.constant 0 : index
    %128 = vector.load %arg17[%c0_57, %c0_58] : memref<1x128xf32, #tpu.memory_space<vmem>>, vector<1x128xf32>
    %129 = vector.broadcast %128 : vector<1x128xf32> to vector<4x128xf32>
    %130 = arith.addf %127, %129 : vector<4x128xf32>
    %131 = arith.negf %130 : vector<4x128xf32>
    %132 = math.exp %131 : vector<4x128xf32>
    %cst_59 = arith.constant 1.000000e+00 : f32
    %133 = vector.broadcast %cst_59 : f32 to vector<4x128xf32>
    %134 = arith.addf %133, %132 : vector<4x128xf32>
    %135 = arith.divf %133, %134 : vector<4x128xf32>
    %136 = arith.mulf %130, %135 : vector<4x128xf32>
    %cst_60 = arith.constant dense<0.000000e+00> : vector<128xf32>
    %137 = vector.multi_reduction <add>, %136, %cst_60 [0] : vector<4x128xf32> to vector<128xf32>
    %138 = vector.shape_cast %137 : vector<128xf32> to vector<1x128xf32>
    %139 = arith.addf %110, %138 : vector<1x128xf32>
    %140 = vector.extract_strided_slice %109 {offsets = [1, 0, 0], sizes = [1, 4, 128], strides = [1, 1, 1]} : vector<4x4x128xf32> to vector<1x4x128xf32>
    %141 = vector.shape_cast %140 : vector<1x4x128xf32> to vector<4x128xf32>
    %142 = arith.truncf %141 : vector<4x128xf32> to vector<4x128xbf16>
    %c0_61 = arith.constant 0 : index
    %c0_62 = arith.constant 0 : index
    %143 = vector.load %arg12[%c0_61, %c0_62] : memref<128x128xbf16, #tpu.memory_space<vmem>>, vector<128x128xbf16>
    %cst_63 = arith.constant dense<0.000000e+00> : vector<4x128xf32>
    %144 = tpu.matmul %142, %143, %cst_63 {dimension_numbers = #tpu.dot_dimension_numbers<[1], [0], [0], [1], [0, 0, 1, 1], [], []>} : vector<4x128xbf16>, vector<128x128xbf16>, vector<4x128xf32> -> vector<4x128xf32>
    %c0_64 = arith.constant 0 : index
    %c0_65 = arith.constant 0 : index
    %145 = vector.load %arg13[%c0_64, %c0_65] : memref<1x128xf32, #tpu.memory_space<vmem>>, vector<1x128xf32>
    %146 = vector.broadcast %145 : vector<1x128xf32> to vector<4x128xf32>
    %147 = arith.mulf %144, %146 : vector<4x128xf32>
    %c0_66 = arith.constant 0 : index
    %c0_67 = arith.constant 0 : index
    %148 = vector.load %arg14[%c0_66, %c0_67] : memref<1x128xf32, #tpu.memory_space<vmem>>, vector<1x128xf32>
    %149 = vector.broadcast %148 : vector<1x128xf32> to vector<4x128xf32>
    %150 = arith.addf %147, %149 : vector<4x128xf32>
    %151 = arith.truncf %150 : vector<4x128xf32> to vector<4x128xbf16>
    %c0_68 = arith.constant 0 : index
    %c0_69 = arith.constant 0 : index
    %152 = vector.load %arg15[%c0_68, %c0_69] : memref<128x128xbf16, #tpu.memory_space<vmem>>, vector<128x128xbf16>
    %cst_70 = arith.constant dense<0.000000e+00> : vector<4x128xf32>
    %153 = tpu.matmul %151, %152, %cst_70 {dimension_numbers = #tpu.dot_dimension_numbers<[1], [0], [0], [1], [0, 0, 1, 1], [], []>} : vector<4x128xbf16>, vector<128x128xbf16>, vector<4x128xf32> -> vector<4x128xf32>
    %c0_71 = arith.constant 0 : index
    %c0_72 = arith.constant 0 : index
    %154 = vector.load %arg16[%c0_71, %c0_72] : memref<1x128xf32, #tpu.memory_space<vmem>>, vector<1x128xf32>
    %155 = vector.broadcast %154 : vector<1x128xf32> to vector<4x128xf32>
    %156 = arith.mulf %153, %155 : vector<4x128xf32>
    %c0_73 = arith.constant 0 : index
    %c0_74 = arith.constant 0 : index
    %157 = vector.load %arg17[%c0_73, %c0_74] : memref<1x128xf32, #tpu.memory_space<vmem>>, vector<1x128xf32>
    %158 = vector.broadcast %157 : vector<1x128xf32> to vector<4x128xf32>
    %159 = arith.addf %156, %158 : vector<4x128xf32>
    %160 = arith.negf %159 : vector<4x128xf32>
    %161 = math.exp %160 : vector<4x128xf32>
    %cst_75 = arith.constant 1.000000e+00 : f32
    %162 = vector.broadcast %cst_75 : f32 to vector<4x128xf32>
    %163 = arith.addf %162, %161 : vector<4x128xf32>
    %164 = arith.divf %162, %163 : vector<4x128xf32>
    %165 = arith.mulf %159, %164 : vector<4x128xf32>
    %cst_76 = arith.constant dense<0.000000e+00> : vector<128xf32>
    %166 = vector.multi_reduction <add>, %165, %cst_76 [0] : vector<4x128xf32> to vector<128xf32>
    %167 = vector.shape_cast %166 : vector<128xf32> to vector<1x128xf32>
    %168 = arith.addf %139, %167 : vector<1x128xf32>
    %169 = vector.extract_strided_slice %109 {offsets = [2, 0, 0], sizes = [1, 4, 128], strides = [1, 1, 1]} : vector<4x4x128xf32> to vector<1x4x128xf32>
    %170 = vector.shape_cast %169 : vector<1x4x128xf32> to vector<4x128xf32>
    %171 = arith.truncf %170 : vector<4x128xf32> to vector<4x128xbf16>
    %c0_77 = arith.constant 0 : index
    %c0_78 = arith.constant 0 : index
    %172 = vector.load %arg12[%c0_77, %c0_78] : memref<128x128xbf16, #tpu.memory_space<vmem>>, vector<128x128xbf16>
    %cst_79 = arith.constant dense<0.000000e+00> : vector<4x128xf32>
    %173 = tpu.matmul %171, %172, %cst_79 {dimension_numbers = #tpu.dot_dimension_numbers<[1], [0], [0], [1], [0, 0, 1, 1], [], []>} : vector<4x128xbf16>, vector<128x128xbf16>, vector<4x128xf32> -> vector<4x128xf32>
    %c0_80 = arith.constant 0 : index
    %c0_81 = arith.constant 0 : index
    %174 = vector.load %arg13[%c0_80, %c0_81] : memref<1x128xf32, #tpu.memory_space<vmem>>, vector<1x128xf32>
    %175 = vector.broadcast %174 : vector<1x128xf32> to vector<4x128xf32>
    %176 = arith.mulf %173, %175 : vector<4x128xf32>
    %c0_82 = arith.constant 0 : index
    %c0_83 = arith.constant 0 : index
    %177 = vector.load %arg14[%c0_82, %c0_83] : memref<1x128xf32, #tpu.memory_space<vmem>>, vector<1x128xf32>
    %178 = vector.broadcast %177 : vector<1x128xf32> to vector<4x128xf32>
    %179 = arith.addf %176, %178 : vector<4x128xf32>
    %180 = arith.truncf %179 : vector<4x128xf32> to vector<4x128xbf16>
    %c0_84 = arith.constant 0 : index
    %c0_85 = arith.constant 0 : index
    %181 = vector.load %arg15[%c0_84, %c0_85] : memref<128x128xbf16, #tpu.memory_space<vmem>>, vector<128x128xbf16>
    %cst_86 = arith.constant dense<0.000000e+00> : vector<4x128xf32>
    %182 = tpu.matmul %180, %181, %cst_86 {dimension_numbers = #tpu.dot_dimension_numbers<[1], [0], [0], [1], [0, 0, 1, 1], [], []>} : vector<4x128xbf16>, vector<128x128xbf16>, vector<4x128xf32> -> vector<4x128xf32>
    %c0_87 = arith.constant 0 : index
    %c0_88 = arith.constant 0 : index
    %183 = vector.load %arg16[%c0_87, %c0_88] : memref<1x128xf32, #tpu.memory_space<vmem>>, vector<1x128xf32>
    %184 = vector.broadcast %183 : vector<1x128xf32> to vector<4x128xf32>
    %185 = arith.mulf %182, %184 : vector<4x128xf32>
    %c0_89 = arith.constant 0 : index
    %c0_90 = arith.constant 0 : index
    %186 = vector.load %arg17[%c0_89, %c0_90] : memref<1x128xf32, #tpu.memory_space<vmem>>, vector<1x128xf32>
    %187 = vector.broadcast %186 : vector<1x128xf32> to vector<4x128xf32>
    %188 = arith.addf %185, %187 : vector<4x128xf32>
    %189 = arith.negf %188 : vector<4x128xf32>
    %190 = math.exp %189 : vector<4x128xf32>
    %cst_91 = arith.constant 1.000000e+00 : f32
    %191 = vector.broadcast %cst_91 : f32 to vector<4x128xf32>
    %192 = arith.addf %191, %190 : vector<4x128xf32>
    %193 = arith.divf %191, %192 : vector<4x128xf32>
    %194 = arith.mulf %188, %193 : vector<4x128xf32>
    %cst_92 = arith.constant dense<0.000000e+00> : vector<128xf32>
    %195 = vector.multi_reduction <add>, %194, %cst_92 [0] : vector<4x128xf32> to vector<128xf32>
    %196 = vector.shape_cast %195 : vector<128xf32> to vector<1x128xf32>
    %197 = arith.addf %168, %196 : vector<1x128xf32>
    %198 = vector.extract_strided_slice %109 {offsets = [3, 0, 0], sizes = [1, 4, 128], strides = [1, 1, 1]} : vector<4x4x128xf32> to vector<1x4x128xf32>
    %199 = vector.shape_cast %198 : vector<1x4x128xf32> to vector<4x128xf32>
    %200 = arith.truncf %199 : vector<4x128xf32> to vector<4x128xbf16>
    %c0_93 = arith.constant 0 : index
    %c0_94 = arith.constant 0 : index
    %201 = vector.load %arg12[%c0_93, %c0_94] : memref<128x128xbf16, #tpu.memory_space<vmem>>, vector<128x128xbf16>
    %cst_95 = arith.constant dense<0.000000e+00> : vector<4x128xf32>
    %202 = tpu.matmul %200, %201, %cst_95 {dimension_numbers = #tpu.dot_dimension_numbers<[1], [0], [0], [1], [0, 0, 1, 1], [], []>} : vector<4x128xbf16>, vector<128x128xbf16>, vector<4x128xf32> -> vector<4x128xf32>
    %c0_96 = arith.constant 0 : index
    %c0_97 = arith.constant 0 : index
    %203 = vector.load %arg13[%c0_96, %c0_97] : memref<1x128xf32, #tpu.memory_space<vmem>>, vector<1x128xf32>
    %204 = vector.broadcast %203 : vector<1x128xf32> to vector<4x128xf32>
    %205 = arith.mulf %202, %204 : vector<4x128xf32>
    %c0_98 = arith.constant 0 : index
    %c0_99 = arith.constant 0 : index
    %206 = vector.load %arg14[%c0_98, %c0_99] : memref<1x128xf32, #tpu.memory_space<vmem>>, vector<1x128xf32>
    %207 = vector.broadcast %206 : vector<1x128xf32> to vector<4x128xf32>
    %208 = arith.addf %205, %207 : vector<4x128xf32>
    %209 = arith.truncf %208 : vector<4x128xf32> to vector<4x128xbf16>
    %c0_100 = arith.constant 0 : index
    %c0_101 = arith.constant 0 : index
    %210 = vector.load %arg15[%c0_100, %c0_101] : memref<128x128xbf16, #tpu.memory_space<vmem>>, vector<128x128xbf16>
    %cst_102 = arith.constant dense<0.000000e+00> : vector<4x128xf32>
    %211 = tpu.matmul %209, %210, %cst_102 {dimension_numbers = #tpu.dot_dimension_numbers<[1], [0], [0], [1], [0, 0, 1, 1], [], []>} : vector<4x128xbf16>, vector<128x128xbf16>, vector<4x128xf32> -> vector<4x128xf32>
    %c0_103 = arith.constant 0 : index
    %c0_104 = arith.constant 0 : index
    %212 = vector.load %arg16[%c0_103, %c0_104] : memref<1x128xf32, #tpu.memory_space<vmem>>, vector<1x128xf32>
    %213 = vector.broadcast %212 : vector<1x128xf32> to vector<4x128xf32>
    %214 = arith.mulf %211, %213 : vector<4x128xf32>
    %c0_105 = arith.constant 0 : index
    %c0_106 = arith.constant 0 : index
    %215 = vector.load %arg17[%c0_105, %c0_106] : memref<1x128xf32, #tpu.memory_space<vmem>>, vector<1x128xf32>
    %216 = vector.broadcast %215 : vector<1x128xf32> to vector<4x128xf32>
    %217 = arith.addf %214, %216 : vector<4x128xf32>
    %218 = arith.negf %217 : vector<4x128xf32>
    %219 = math.exp %218 : vector<4x128xf32>
    %cst_107 = arith.constant 1.000000e+00 : f32
    %220 = vector.broadcast %cst_107 : f32 to vector<4x128xf32>
    %221 = arith.addf %220, %219 : vector<4x128xf32>
    %222 = arith.divf %220, %221 : vector<4x128xf32>
    %223 = arith.mulf %217, %222 : vector<4x128xf32>
    %cst_108 = arith.constant dense<0.000000e+00> : vector<128xf32>
    %224 = vector.multi_reduction <add>, %223, %cst_108 [0] : vector<4x128xf32> to vector<128xf32>
    %225 = vector.shape_cast %224 : vector<128xf32> to vector<1x128xf32>
    %226 = arith.addf %197, %225 : vector<1x128xf32>
    %cst_109 = arith.constant 6.250000e-02 : f32
    %227 = vector.broadcast %cst_109 : f32 to vector<1x128xf32>
    %228 = arith.mulf %226, %227 : vector<1x128xf32>
    %c0_110 = arith.constant 0 : index
    %c0_111 = arith.constant 0 : index
    %c0_112 = arith.constant 0 : index
    %229 = vector.load %arg18[%c0_110, %c0_111, %c0_112] : memref<1x1x128xf32, #tpu.memory_space<vmem>>, vector<1x1x128xf32>
    %230 = vector.shape_cast %229 : vector<1x1x128xf32> to vector<1x128xf32>
    %231 = vector.shape_cast %228 : vector<1x128xf32> to vector<1x1x128xf32>
    tpu.vector_store %arg18[%c0_110, %c0_111, %c0_112], %231 {strides = array<i32>} : memref<1x1x128xf32, #tpu.memory_space<vmem>>, vector<1x1x128xf32>,
    return
  }
  func.func @transform_0(%arg0: i32) -> (i32, i32, i32, i32) {
    %c0_i32 = arith.constant 0 : i32
    %c0_i32_0 = arith.constant 0 : i32
    %c0_i32_1 = arith.constant 0 : i32
    %c0_i32_2 = arith.constant 0 : i32
    return %arg0, %c0_i32, %c0_i32_0, %c0_i32_1 : i32, i32, i32, i32
  }
  func.func @transform_1(%arg0: i32) -> (i32, i32, i32, i32) {
    %c0_i32 = arith.constant 0 : i32
    %c0_i32_0 = arith.constant 0 : i32
    %c0_i32_1 = arith.constant 0 : i32
    %c0_i32_2 = arith.constant 0 : i32
    return %arg0, %c0_i32, %c0_i32_0, %c0_i32_1 : i32, i32, i32, i32
  }
  func.func @transform_2(%arg0: i32) -> (i32, i32, i32, i32) {
    %c0_i32 = arith.constant 0 : i32
    %c0_i32_0 = arith.constant 0 : i32
    %c0_i32_1 = arith.constant 0 : i32
    %c0_i32_2 = arith.constant 0 : i32
    return %arg0, %c0_i32, %c0_i32_0, %c0_i32_1 : i32, i32, i32, i32
  }
  func.func @transform_3(%arg0: i32) -> (i32, i32, i32, i32) {
    %c0_i32 = arith.constant 0 : i32
    %c0_i32_0 = arith.constant 0 : i32
    %c0_i32_1 = arith.constant 0 : i32
    %c0_i32_2 = arith.constant 0 : i32
    return %arg0, %c0_i32, %c0_i32_0, %c0_i32_1 : i32, i32, i32, i32
  }
  func.func @transform_4(%arg0: i32) -> (i32, i32) {
    %c0_i32 = arith.constant 0 : i32
    %c0_i32_0 = arith.constant 0 : i32
    %c0_i32_1 = arith.constant 0 : i32
    return %c0_i32, %c0_i32_0 : i32, i32
  }
  func.func @transform_5(%arg0: i32) -> (i32, i32) {
    %c0_i32 = arith.constant 0 : i32
    %c0_i32_0 = arith.constant 0 : i32
    %c0_i32_1 = arith.constant 0 : i32
    return %c0_i32, %c0_i32_0 : i32, i32
  }
  func.func @transform_6(%arg0: i32) -> (i32, i32) {
    %c0_i32 = arith.constant 0 : i32
    %c0_i32_0 = arith.constant 0 : i32
    %c0_i32_1 = arith.constant 0 : i32
    return %c0_i32, %c0_i32_0 : i32, i32
  }
  func.func @transform_7(%arg0: i32) -> (i32, i32) {
    %c0_i32 = arith.constant 0 : i32
    %c0_i32_0 = arith.constant 0 : i32
    %c0_i32_1 = arith.constant 0 : i32
    return %c0_i32, %c0_i32_0 : i32, i32
  }
  func.func @transform_8(%arg0: i32) -> (i32, i32) {
    %c0_i32 = arith.constant 0 : i32
    %c0_i32_0 = arith.constant 0 : i32
    %c0_i32_1 = arith.constant 0 : i32
    return %c0_i32, %c0_i32_0 : i32, i32
  }
  func.func @transform_9(%arg0: i32) -> (i32, i32) {
    %c0_i32 = arith.constant 0 : i32
    %c0_i32_0 = arith.constant 0 : i32
    %c0_i32_1 = arith.constant 0 : i32
    return %c0_i32, %c0_i32_0 : i32, i32
  }
  func.func @transform_10(%arg0: i32) -> (i32, i32) {
    %c0_i32 = arith.constant 0 : i32
    %c0_i32_0 = arith.constant 0 : i32
    %c0_i32_1 = arith.constant 0 : i32
    return %c0_i32, %c0_i32_0 : i32, i32
  }
  func.func @transform_11(%arg0: i32) -> (i32, i32) {
    %c0_i32 = arith.constant 0 : i32
    %c0_i32_0 = arith.constant 0 : i32
    %c0_i32_1 = arith.constant 0 : i32
    return %c0_i32, %c0_i32_0 : i32, i32
  }
  func.func @transform_12(%arg0: i32) -> (i32, i32) {
    %c0_i32 = arith.constant 0 : i32
    %c0_i32_0 = arith.constant 0 : i32
    %c0_i32_1 = arith.constant 0 : i32
    return %c0_i32, %c0_i32_0 : i32, i32
  }
  func.func @transform_13(%arg0: i32) -> (i32, i32) {
    %c0_i32 = arith.constant 0 : i32
    %c0_i32_0 = arith.constant 0 : i32
    %c0_i32_1 = arith.constant 0 : i32
    return %c0_i32, %c0_i32_0 : i32, i32
  }
  func.func @transform_14(%arg0: i32) -> (i32, i32) {
    %c0_i32 = arith.constant 0 : i32
    %c0_i32_0 = arith.constant 0 : i32
    %c0_i32_1 = arith.constant 0 : i32
    return %c0_i32, %c0_i32_0 : i32, i32
  }
  func.func @transform_15(%arg0: i32) -> (i32, i32) {
    %c0_i32 = arith.constant 0 : i32
    %c0_i32_0 = arith.constant 0 : i32
    %c0_i32_1 = arith.constant 0 : i32
    return %c0_i32, %c0_i32_0 : i32, i32
  }
  func.func @transform_16(%arg0: i32) -> (i32, i32) {
    %c0_i32 = arith.constant 0 : i32
    %c0_i32_0 = arith.constant 0 : i32
    %c0_i32_1 = arith.constant 0 : i32
    return %c0_i32, %c0_i32_0 : i32, i32
  }
  func.func @transform_17(%arg0: i32) -> (i32, i32, i32) {
    %c0_i32 = arith.constant 0 : i32
    %c0_i32_0 = arith.constant 0 : i32
    %c0_i32_1 = arith.constant 0 : i32
    return %arg0, %c0_i32, %c0_i32_0 : i32, i32, i32
  }
}

</mosaic_0001>

<llo_original>
// kernel: efficientnet_forward.3
$region0: #{efficientnet_forward.3}
  #allocation0 [shape = 'u32[]', space=smem, size = 0x4, offset = 0x4, fixed_abs, tag = 'smem constant byte address 0x4 - core index']
  #allocation1 [shape = 'u32[144,128]{1,0:T(1,128)}', space=vmem, size = 0x12000, scoped, tag = 'internal scratch']
  %s0 = inlined_call_operand.vmem [shape: bf16[128,27], index: 0, kind: input, shape index: {}]
  %s1 = inlined_call_operand.vmem [shape: bf16[27,128], index: 1, kind: input, shape index: {}]
  %s2 = inlined_call_operand.vmem [shape: f32[1,128], index: 2, kind: input, shape index: {}]
  %s3 = inlined_call_operand.vmem [shape: f32[1,128], index: 3, kind: input, shape index: {}]
  %s4 = inlined_call_operand.vmem [shape: bf16[128,128], index: 4, kind: output, shape index: {}]
  %s5 = sld [smem:[#allocation0]]
  $region49: #{efficientnet_forward.3} parent=0
    _
  %s7 = ssub.s32 1, %s5
  %s8 = scalar_select 0, %s7, %s5
  loop: start=0, step=1, limit=4
  $region2: #{efficientnet_forward.3} parent=0 // loop_pre_header
    _
  $region3: #{efficientnet_forward.3} parent=0 // loop_header
    %s10 = sphi 0, %s14
    %p11 = scmp.ge.s32.totalorder %s10, 4
    %s20 = sphi 0, %s22
    %s23 = sphi 0, %s20
    %s24 = sphi 0, %s23
    %s40 = sphi 0, %s24
    %s44 = sphi 0, %s44
    %s46 = sphi 0, %s44
    %s47 = sphi 0, %s46
    %s61 = sphi 0, %s47
    %s65 = sphi 0, %s65
    %s67 = sphi 0, %s65
    %s68 = sphi 0, %s67
    %s82 = sphi 0, %s68
    %s86 = sphi 0, %s86
    %s88 = sphi 0, %s86
    %s89 = sphi 0, %s88
    %s103 = sphi 0, %s89
    %s109 = sphi 0, %s111
    %s112 = sphi 0, %s109
    %s113 = sphi 0, %s112
    %s129 = sphi 0, %s113
  $region4: #{efficientnet_forward.3} parent=0 // loop_header_branch
    %13 = sbr.rel (%p11) target = $region8
  $region5: #{efficientnet_forward.3} parent=0 // loop_body
    %s15 = ssub.s32 %s10, 1
    %s16 = ssub.s32 %s10, 2
    %s17 = sadd.s32 %s10, 1
    %s18 = ssub.s32 %s10, %s17
    %p19 = scmp.eq.s32.totalorder %s18, 0
    %s21 = sadd.s32 %s20, 1
    %s22 = scalar_select %p19, %s20, %s21
    %p25 = pneg %p19
    %p26 = scmp.eq.s32.totalorder %s10, 1
    %p27 = por %p25, %p26
    %p28 = scmp.ne.s32.totalorder %s20, %s23
    %p29 = scmp.eq.s32.totalorder %s10, 0
    %p30 = por %p28, %p29
    %p31 = scmp.ne.s32.totalorder %s20, %s23
    %p32 = scmp.eq.s32.totalorder %s15, 1
    %p33 = por %p31, %p32
    %p34 = scmp.ne.s32.totalorder %s23, %s24
    %p35 = scmp.eq.s32.totalorder %s15, 0
    %p36 = por %p34, %p35
    %p37 = scmp.ne.s32.totalorder %s23, %s24
    %p38 = scmp.eq.s32.totalorder %s16, 1
    %p39 = por %p37, %p38
    %p41 = scmp.ne.s32.totalorder %s24, %s40
    %p42 = scmp.eq.s32.totalorder %s16, 0
    %p43 = por %p41, %p42
    %s45 = sadd.s32 %s44, 1
    %p48 = scmp.eq.s32.totalorder %s10, 1
    %p49 = scmp.ne.s32.totalorder %s44, %s46
    %p50 = scmp.eq.s32.totalorder %s10, 0
    %p51 = por %p49, %p50
    %p52 = scmp.ne.s32.totalorder %s44, %s46
    %p53 = scmp.eq.s32.totalorder %s15, 1
    %p54 = por %p52, %p53
    %p55 = scmp.ne.s32.totalorder %s46, %s47
    %p56 = scmp.eq.s32.totalorder %s15, 0
    %p57 = por %p55, %p56
    %p58 = scmp.ne.s32.totalorder %s46, %s47
    %p59 = scmp.eq.s32.totalorder %s16, 1
    %p60 = por %p58, %p59
    %p62 = scmp.ne.s32.totalorder %s47, %s61
    %p63 = scmp.eq.s32.totalorder %s16, 0
    %p64 = por %p62, %p63
    %s66 = sadd.s32 %s65, 1
    %p69 = scmp.eq.s32.totalorder %s10, 1
    %p70 = scmp.ne.s32.totalorder %s65, %s67
    %p71 = scmp.eq.s32.totalorder %s10, 0
    %p72 = por %p70, %p71
    %p73 = scmp.ne.s32.totalorder %s65, %s67
    %p74 = scmp.eq.s32.totalorder %s15, 1
    %p75 = por %p73, %p74
    %p76 = scmp.ne.s32.totalorder %s67, %s68
    %p77 = scmp.eq.s32.totalorder %s15, 0
    %p78 = por %p76, %p77
    %p79 = scmp.ne.s32.totalorder %s67, %s68
    %p80 = scmp.eq.s32.totalorder %s16, 1
    %p81 = por %p79, %p80
    %p83 = scmp.ne.s32.totalorder %s68, %s82
    %p84 = scmp.eq.s32.totalorder %s16, 0
    %p85 = por %p83, %p84
    %s87 = sadd.s32 %s86, 1
    %p90 = scmp.eq.s32.totalorder %s10, 1
    %p91 = scmp.ne.s32.totalorder %s86, %s88
    %p92 = scmp.eq.s32.totalorder %s10, 0
    %p93 = por %p91, %p92
    %p94 = scmp.ne.s32.totalorder %s86, %s88
    %p95 = scmp.eq.s32.totalorder %s15, 1
    %p96 = por %p94, %p95
    %p97 = scmp.ne.s32.totalorder %s88, %s89
    %p98 = scmp.eq.s32.totalorder %s15, 0
    %p99 = por %p97, %p98
    %p100 = scmp.ne.s32.totalorder %s88, %s89
    %p101 = scmp.eq.s32.totalorder %s16, 1
    %p102 = por %p100, %p101
    %p104 = scmp.ne.s32.totalorder %s89, %s103
    %p105 = scmp.eq.s32.totalorder %s16, 0
    %p106 = por %p104, %p105
    %s107 = ssub.s32 %s10, %s17
    %p108 = scmp.eq.s32.totalorder %s107, 0
    %s110 = sadd.s32 %s109, 1
    %s111 = scalar_select %p108, %s109, %s110
    %p114 = pneg %p108
    %p115 = scmp.eq.s32.totalorder %s10, 1
    %p116 = por %p114, %p115
    %p117 = scmp.ne.s32.totalorder %s109, %s112
    %p118 = scmp.eq.s32.totalorder %s10, 0
    %p119 = por %p117, %p118
    %p120 = scmp.ne.s32.totalorder %s109, %s112
    %p121 = scmp.eq.s32.totalorder %s15, 1
    %p122 = por %p120, %p121
    %p123 = scmp.ne.s32.totalorder %s112, %s113
    %p124 = scmp.eq.s32.totalorder %s15, 0
    %p125 = por %p123, %p124
    %p126 = scmp.ne.s32.totalorder %s112, %s113
    %p127 = scmp.eq.s32.totalorder %s16, 1
    %p128 = por %p126, %p127
    %p130 = scmp.ne.s32.totalorder %s113, %s129
    %p131 = scmp.eq.s32.totalorder %s16, 0
    %p132 = por %p130, %p131
    %p133 = scmp.le.s32.totalorder 1, %s10
    %p134 = scmp.lt.s32.totalorder %s10, 3
    %p135 = pnand %p133, %p134
    %p136 = pneg %p135
    // Predicated region
    $region9: #{efficientnet_forward.3} parent=5 // pred_check
      _
    $region10: #{efficientnet_forward.3} parent=5 // pred_check_branch
      %138 = sbr.rel (%p135) target = $region12
    $region11: #{efficientnet_forward.3} parent=5 // pred_region
      %s139 = ssub.s32 %s10, 1
      // Predicated region
      $region13: #{efficientnet_forward.3} parent=11 // pred_check
        %p140 = pneg %p57
      $region14: #{efficientnet_forward.3} parent=11 // pred_check_branch
        %142 = sbr.rel (%p140) target = $region16
      $region15: #{efficientnet_forward.3} parent=11 // pred_region
        _
      $region16: #{efficientnet_forward.3} parent=11 // pred_fallthru
        _
      // Predicated region
      $region17: #{efficientnet_forward.3} parent=11 // pred_check
        %p143 = pneg %p78
      $region18: #{efficientnet_forward.3} parent=11 // pred_check_branch
        %145 = sbr.rel (%p143) target = $region20
      $region19: #{efficientnet_forward.3} parent=11 // pred_region
        _
      $region20: #{efficientnet_forward.3} parent=11 // pred_fallthru
        _
      // Predicated region
      $region21: #{efficientnet_forward.3} parent=11 // pred_check
        %p146 = pneg %p99
      $region22: #{efficientnet_forward.3} parent=11 // pred_check_branch
        %148 = sbr.rel (%p146) target = $region24
      $region23: #{efficientnet_forward.3} parent=11 // pred_region
        _
      $region24: #{efficientnet_forward.3} parent=11 // pred_fallthru
        _
    $region12: #{efficientnet_forward.3} parent=5 // pred_fallthru
      _
    %p149 = scmp.lt.s32.totalorder %s10, 2
    // Predicated region
    $region25: #{efficientnet_forward.3} parent=5 // pred_check
      %p150 = pneg %p149
    $region26: #{efficientnet_forward.3} parent=5 // pred_check_branch
      %152 = sbr.rel (%p150) target = $region28
    $region27: #{efficientnet_forward.3} parent=5 // pred_region
      // Predicated region
      $region29: #{efficientnet_forward.3} parent=27 // pred_check
        %p153 = pneg %p30
      $region30: #{efficientnet_forward.3} parent=27 // pred_check_branch
        %155 = sbr.rel (%p153) target = $region32
      $region31: #{efficientnet_forward.3} parent=27 // pred_region
        %s156 = smul.u32 8, %s10
        %p157 = scmp.lt.s32.totalorder %s156, 15
        %s158 = scalar_select %p157, %s156, 15
        %s159 = smul.addr %s158, 4
        %s160 = scalar_lea.vmem %s0, %s159
        %s161 = smul.u32 8, %s10
      $region32: #{efficientnet_forward.3} parent=27 // pred_fallthru
        _
    $region28: #{efficientnet_forward.3} parent=5 // pred_fallthru
      _
    %p162 = scmp.le.s32.totalorder 1, %s10
    %p163 = scmp.lt.s32.totalorder %s10, 3
    %p164 = pnand %p162, %p163
    %p165 = pneg %p164
    // Predicated region
    $region33: #{efficientnet_forward.3} parent=5 // pred_check
      _
    $region34: #{efficientnet_forward.3} parent=5 // pred_check_branch
      %167 = sbr.rel (%p164) target = $region36
    $region35: #{efficientnet_forward.3} parent=5 // pred_region
      %s168 = ssub.s32 %s10, 1
      %s169 = smul.u32 8, %s15
      %p170 = scmp.lt.s32.totalorder %s169, 15
      %s171 = scalar_select %p170, %s169, 15
      %s172 = smul.addr %s171, 4
      %s173 = scalar_lea.vmem %s0, %s172
      %p174 = pneg %p36
      %p175 = pneg %p33
      %p176 = pneg %p57
      %p177 = pneg %p54
      %p178 = pneg %p78
      %p179 = pneg %p75
      %p180 = pneg %p99
      %p181 = pneg %p96
      %p182 = pneg %p125
      %p183 = pneg %p122
      %s184 = smul.u32 8, %s15
      %p185 = scmp.lt.s32.totalorder %s184, 15
      %s186 = scalar_select %p185, %s184, 15
      %s187 = smul.addr %s186, 4
      %s188 = scalar_lea.vmem %s4, %s187
      %s189 = smul.u32 8, %s15
      %p190 = scmp.lt.s32.totalorder %s189, 15
      %s191 = scalar_select %p190, %s189, 15
      %s192 = smul.addr %s191, 4
      %s193 = scalar_lea.vmem %s0, %s192
      %s194 = smul.u32 8, %s15
      %s195 = smul.u32 8, %s15
      %p196 = scmp.lt.s32.totalorder %s195, 15
      %s197 = scalar_select %p196, %s195, 15
      %s198 = smul.addr %s197, 4
      %s199 = scalar_lea.vmem %s4, %s198
      %s200 = smul.u32 8, %s15
      %v202 = vld [vmem:[%s193] sm:$0xf]
      %v203 = vld [vmem:[%s193 + $0x4] sm:$0xf]
      %v204 = vld [vmem:[%s193 + $0x8] sm:$0xf]
      %v205 = vld [vmem:[%s193 + $0xc] sm:$0xf]
      %v206 = vld [vmem:[%s193 + $0x10] sm:$0xf]
      %v207 = vld [vmem:[%s193 + $0x14] sm:$0xf]
      %v208 = vld [vmem:[%s193 + $0x18] sm:$0xf]
      %v209 = vld [vmem:[%s193 + $0x1c] sm:$0xf]
      %v210 = vld [vmem:[%s1] sm:$0xf]
      %v211 = vld [vmem:[%s1 + $0x4] sm:$0xf]
      %v212 = vld [vmem:[%s1 + $0x8] sm:$0xf]
      %v213 = vld [vmem:[%s1 + $0xc] sm:$0x3]
      %v222 = vunpack.c.l.b16 %v202
      %v223 = vunpack.c.l.b16 %v203
      %v224 = vunpack.c.l.b16 %v204
      %v225 = vunpack.c.l.b16 %v205
      %v226 = vunpack.c.l.b16 %v206
      %v227 = vunpack.c.l.b16 %v207
      %v228 = vunpack.c.l.b16 %v208
      %v229 = vunpack.c.l.b16 %v209
      %v230 = vpack.c.b16 %v223, %v222
      %v231 = vpack.c.b16 %v225, %v224
      %v232 = vpack.c.b16 %v227, %v226
      %v233 = vpack.c.b16 %v229, %v228
      %v238 = vunpack.c.l.b16 %v210
      %v239 = vunpack.c.l.b16 %v211
      %v240 = vunpack.c.l.b16 %v212
      %v241 = vunpack.c.l.b16 %v213
      %v242 = vpack.c.b16 %v239, %v238
      %v243 = vpack.c.b16 %v241, %v240
      %vm245 = vcmask 220160
      %v247 = vsel %vm245, %v230, 0
      %v250 = vsel %vm245, %v231, 0
      %v253 = vsel %vm245, %v232, 0
      %v256 = vsel %vm245, %v233, 0
      %vm258 = vcmask 1044480
      %vm259 = vcmask 1045504
      %v260 = vsel %vm258, 4294967295, 65535
      %v261 = vsel %vm259, %v260, 0
      %v263 = vand.u32 %v243, %v261
      %265 = vmatprep.subr.bf16.mxu0 0
      %266 = vmatpush1.bf16.msra.mxu0 0
      %267 = vmatprep.subr.bf16.mxu0 0
      %268 = vmatpush1.bf16.msra.mxu0 0
      %269 = vmatprep.subr.bf16.mxu0 0
      %270 = vmatpush1.bf16.msra.mxu0 0
      %271 = vmatprep.subr.bf16.mxu0 0
      %272 = vmatpush1.bf16.msra.mxu0 0
      %273 = vmatprep.subr.bf16.mxu0 0
      %274 = vmatpush1.bf16.msra.mxu0 0
      %275 = vmatprep.subr.bf16.mxu0 0
      %276 = vmatpush1.bf16.msra.mxu0 0
      %277 = vmatprep.subr.bf16.mxu0 0
      %278 = vmatpush1.bf16.msra.mxu0 %v263
      %279 = vmatprep.subr.bf16.mxu0 0
      %280 = vmatpush1.bf16.msra.mxu0 %v242
      %281 = vmatprep.subr.bf16.mxu0 0
      %282 = vmatpush2.bf16.msra.mxu0 0
      %283 = vmatprep.subr.bf16.mxu0 0
      %284 = vmatpush2.bf16.msra.mxu0 0
      %285 = vmatprep.subr.bf16.mxu0 0
      %286 = vmatpush2.bf16.msra.mxu0 0
      %287 = vmatprep.subr.bf16.mxu0 0
      %288 = vmatpush2.bf16.msra.mxu0 0
      %289 = vmatprep.subr.bf16.mxu0 0
      %290 = vmatpush2.bf16.msra.mxu0 0
      %291 = vmatprep.subr.bf16.mxu0 0
      %292 = vmatpush2.bf16.msra.mxu0 0
      %293 = vmatprep.subr.bf16.mxu0 0
      %294 = vmatpush2.bf16.msra.mxu0 0
      %295 = vmatprep.subr.bf16.mxu0 0
      %296 = vmatpush2.bf16.msra.mxu0 0
      %297 = vmatprep.mubr.bf16.mxu0 0
      %298 = vmatmul.mubr.bf16.gmra.mxu0 %v247
      %v299 = vpop.f32.mrf.mxu0
      %v300 = vadd.f32 0.0, %v299
      %v301 = vpop.f32.mrf.mxu0
      %v302 = vpop.f32.mrf.mxu0
      %v303 = vadd.f32 0.0, %v302
      %v304 = vpop.f32.mrf.mxu0
      %305 = vmatprep.mubr.bf16.mxu0 0
      %306 = vmatmul.mubr.bf16.gmra.mxu0 %v250
      %v307 = vpop.f32.mrf.mxu0
      %v308 = vadd.f32 0.0, %v307
      %v309 = vpop.f32.mrf.mxu0
      %v310 = vpop.f32.mrf.mxu0
      %v311 = vadd.f32 0.0, %v310
      %v312 = vpop.f32.mrf.mxu0
      %313 = vmatprep.mubr.bf16.mxu0 0
      %314 = vmatmul.mubr.bf16.gmra.mxu0 %v253
      %v315 = vpop.f32.mrf.mxu0
      %v316 = vadd.f32 0.0, %v315
      %v317 = vpop.f32.mrf.mxu0
      %v318 = vpop.f32.mrf.mxu0
      %v319 = vadd.f32 0.0, %v318
      %v320 = vpop.f32.mrf.mxu0
      %321 = vmatprep.mubr.bf16.mxu0 0
      %322 = vmatmul.mubr.bf16.gmra.mxu0 %v256
      %v323 = vpop.f32.mrf.mxu0
      %v324 = vadd.f32 0.0, %v323
      %v325 = vpop.f32.mrf.mxu0
      %v326 = vpop.f32.mrf.mxu0
      %v327 = vadd.f32 0.0, %v326
      %v328 = vpop.f32.mrf.mxu0
      %329 = vdwg.mxu0
      %v330 = vld [vmem:[%s2] sm:$0x1]
      %v332 = vlaneseq
      %v333 = vshrl.u32 %v332, 7
      %v334 = vsub.s32 0, %v333
      %v335 = vrot.slane %v330, %v334
      %v337 = vmul.f32 %v300, %v335
      %v338 = vmul.f32 %v303, %v335
      %v339 = vmul.f32 %v308, %v335
      %v340 = vmul.f32 %v311, %v335
      %v341 = vmul.f32 %v316, %v335
      %v342 = vmul.f32 %v319, %v335
      %v343 = vmul.f32 %v324, %v335
      %v344 = vmul.f32 %v327, %v335
      %v345 = vld [vmem:[%s3] sm:$0x1]
      %v347 = vlaneseq
      %v348 = vshrl.u32 %v347, 7
      %v349 = vsub.s32 0, %v348
      %v350 = vrot.slane %v345, %v349
      %v352 = vadd.f32 %v337, %v350
      %v353 = vadd.f32 %v338, %v350
      %v354 = vadd.f32 %v339, %v350
      %v355 = vadd.f32 %v340, %v350
      %v356 = vadd.f32 %v341, %v350
      %v357 = vadd.f32 %v342, %v350
      %v358 = vadd.f32 %v343, %v350
      %v359 = vadd.f32 %v344, %v350
      %v360 = vxor.u32 %v352, 2147483648
      %v361 = vxor.u32 %v353, 2147483648
      %v362 = vxor.u32 %v354, 2147483648
      %v363 = vxor.u32 %v355, 2147483648
      %v364 = vxor.u32 %v356, 2147483648
      %v365 = vxor.u32 %v357, 2147483648
      %v366 = vxor.u32 %v358, 2147483648
      %v367 = vxor.u32 %v359, 2147483648
      %v368 = vmul.f32 %v360, 1.442695
      %v369 = vpow.pop %v368
      %v370 = vmul.f32 %v361, 1.442695
      %v371 = vpow.pop %v370
      %v372 = vmul.f32 %v362, 1.442695
      %v373 = vpow.pop %v372
      %v374 = vmul.f32 %v363, 1.442695
      %v375 = vpow.pop %v374
      %v376 = vmul.f32 %v364, 1.442695
      %v377 = vpow.pop %v376
      %v378 = vmul.f32 %v365, 1.442695
      %v379 = vpow.pop %v378
      %v380 = vmul.f32 %v366, 1.442695
      %v381 = vpow.pop %v380
      %v382 = vmul.f32 %v367, 1.442695
      %v383 = vpow.pop %v382
      %v384 = vadd.f32 %v369, 1.0
      %v385 = vadd.f32 %v371, 1.0
      %v386 = vadd.f32 %v373, 1.0
      %v387 = vadd.f32 %v375, 1.0
      %v388 = vadd.f32 %v377, 1.0
      %v389 = vadd.f32 %v379, 1.0
      %v390 = vadd.f32 %v381, 1.0
      %v391 = vadd.f32 %v383, 1.0
      %v392 = vrcp.pop %v384
      %v393 = vmul.f32 1.0, %v392
      %v394 = vrcp.pop %v385
      %v395 = vmul.f32 1.0, %v394
      %v396 = vrcp.pop %v386
      %v397 = vmul.f32 1.0, %v396
      %v398 = vrcp.pop %v387
      %v399 = vmul.f32 1.0, %v398
      %v400 = vrcp.pop %v388
      %v401 = vmul.f32 1.0, %v400
      %v402 = vrcp.pop %v389
      %v403 = vmul.f32 1.0, %v402
      %v404 = vrcp.pop %v390
      %v405 = vmul.f32 1.0, %v404
      %v406 = vrcp.pop %v391
      %v407 = vmul.f32 1.0, %v406
      %v408 = vmul.f32 %v352, %v393
      %v409 = vmul.f32 %v353, %v395
      %v410 = vmul.f32 %v354, %v397
      %v411 = vmul.f32 %v355, %v399
      %v412 = vmul.f32 %v356, %v401
      %v413 = vmul.f32 %v357, %v403
      %v414 = vmul.f32 %v358, %v405
      %v415 = vmul.f32 %v359, %v407
      %v416 = vpack.c.bf16 %v409, %v408
      %v417 = vpack.c.bf16 %v411, %v410
      %v418 = vpack.c.bf16 %v413, %v412
      %v419 = vpack.c.bf16 %v415, %v414
      %v424 = vunpack.c.l.b16 %v416
      %v425 = vunpack.c.h.b16 %v416
      %v426 = vunpack.c.l.b16 %v417
      %v427 = vunpack.c.h.b16 %v417
      %v428 = vunpack.c.l.b16 %v418
      %v429 = vunpack.c.h.b16 %v418
      %v430 = vunpack.c.l.b16 %v419
      %v431 = vunpack.c.h.b16 %v419
      %v432 = vpack.c.b16 %v424, %v424
      %v433 = vpack.c.b16 %v425, %v425
      %v434 = vpack.c.b16 %v426, %v426
      %v435 = vpack.c.b16 %v427, %v427
      %v436 = vpack.c.b16 %v428, %v428
      %v437 = vpack.c.b16 %v429, %v429
      %v438 = vpack.c.b16 %v430, %v430
      %v439 = vpack.c.b16 %v431, %v431
      %448 = vst [vmem:[%s199] sm:$0xf] %v432
      %449 = vst [vmem:[%s199 + $0x4] sm:$0xf] %v433
      %450 = vst [vmem:[%s199 + $0x8] sm:$0xf] %v434
      %451 = vst [vmem:[%s199 + $0xc] sm:$0xf] %v435
      %452 = vst [vmem:[%s199 + $0x10] sm:$0xf] %v436
      %453 = vst [vmem:[%s199 + $0x14] sm:$0xf] %v437
      %454 = vst [vmem:[%s199 + $0x18] sm:$0xf] %v438
      %455 = vst [vmem:[%s199 + $0x1c] sm:$0xf] %v439
      %s456 = smul.u32 8, %s15
      %p457 = scmp.lt.s32.totalorder %s456, 15
      %s458 = scalar_select %p457, %s456, 15
      %s459 = smul.addr %s458, 4
      %s460 = scalar_lea.vmem %s4, %s459
      // Predicated region
      $region37: #{efficientnet_forward.3} parent=35 // pred_check
        %p461 = pneg %p122
      $region38: #{efficientnet_forward.3} parent=35 // pred_check_branch
        %463 = sbr.rel (%p461) target = $region40
      $region39: #{efficientnet_forward.3} parent=35 // pred_region
        %s464 = smul.u32 8, %s15
      $region40: #{efficientnet_forward.3} parent=35 // pred_fallthru
        _
    $region36: #{efficientnet_forward.3} parent=5 // pred_fallthru
      _
    %p465 = scmp.le.s32.totalorder 2, %s10
    // Predicated region
    $region41: #{efficientnet_forward.3} parent=5 // pred_check
      %p466 = pneg %p465
    $region42: #{efficientnet_forward.3} parent=5 // pred_check_branch
      %468 = sbr.rel (%p466) target = $region44
    $region43: #{efficientnet_forward.3} parent=5 // pred_region
      %s469 = ssub.s32 %s10, 2
      // Predicated region
      $region45: #{efficientnet_forward.3} parent=43 // pred_check
        %p470 = pneg %p128
      $region46: #{efficientnet_forward.3} parent=43 // pred_check_branch
        %472 = sbr.rel (%p470) target = $region48
      $region47: #{efficientnet_forward.3} parent=43 // pred_region
        %s473 = smul.u32 8, %s16
        %p474 = scmp.lt.s32.totalorder %s473, 15
        %s475 = scalar_select %p474, %s473, 15
        %s476 = smul.addr %s475, 4
        %s477 = scalar_lea.vmem %s4, %s476
      $region48: #{efficientnet_forward.3} parent=43 // pred_fallthru
        _
    $region44: #{efficientnet_forward.3} parent=5 // pred_fallthru
      _
  $region6: #{efficientnet_forward.3} parent=0 // loop_footer
    %s14 = sadd.s32 1, %s10
  $region7: #{efficientnet_forward.3} parent=0 // loop_footer_branch
    %9 = sbr.rel target = $region3
  $region8: #{efficientnet_forward.3} parent=0 // loop_exit
    _

// kernel: efficientnet_forward.4
$region0: #{efficientnet_forward.4}
  #allocation0 [shape = 'u32[]', space=smem, size = 0x4, offset = 0x4, fixed_abs, tag = 'smem constant byte address 0x4 - core index']
  #allocation1 [shape = 'u32[144,128]{1,0:T(1,128)}', space=vmem, size = 0x12000, scoped, tag = 'internal scratch']
  %s0 = inlined_call_operand.vmem [shape: bf16[2,10,10,128], index: 0, kind: input, shape index: {}]
  %s1 = inlined_call_operand.vmem [shape: bf16[9,128,128], index: 1, kind: input, shape index: {}]
  %s2 = inlined_call_operand.vmem [shape: f32[1,128], index: 2, kind: input, shape index: {}]
  %s3 = inlined_call_operand.vmem [shape: f32[1,128], index: 3, kind: input, shape index: {}]
  %s4 = inlined_call_operand.vmem [shape: bf16[128,128], index: 4, kind: input, shape index: {}]
  %s5 = inlined_call_operand.vmem [shape: f32[1,128], index: 5, kind: input, shape index: {}]
  %s6 = inlined_call_operand.vmem [shape: f32[1,128], index: 6, kind: input, shape index: {}]
  %s7 = inlined_call_operand.vmem [shape: bf16[2,64,128], index: 7, kind: output, shape index: {}]
  %s8 = sld [smem:[#allocation0]]
  $region61: #{efficientnet_forward.4} parent=0
    _
  %s10 = ssub.s32 1, %s8
  %s11 = scalar_select 0, %s10, %s8
  loop: start=0, step=1, limit=4
  $region2: #{efficientnet_forward.4} parent=0 // loop_pre_header
    _
  $region3: #{efficientnet_forward.4} parent=0 // loop_header
    %s13 = sphi 0, %s17
    %p14 = scmp.ge.s32.totalorder %s13, 4
    %s23 = sphi 0, %s25
    %s26 = sphi 0, %s23
    %s27 = sphi 0, %s26
    %s43 = sphi 0, %s27
    %s47 = sphi 0, %s47
    %s49 = sphi 0, %s47
    %s50 = sphi 0, %s49
    %s64 = sphi 0, %s50
    %s68 = sphi 0, %s68
    %s70 = sphi 0, %s68
    %s71 = sphi 0, %s70
    %s85 = sphi 0, %s71
    %s89 = sphi 0, %s89
    %s91 = sphi 0, %s89
    %s92 = sphi 0, %s91
    %s106 = sphi 0, %s92
    %s110 = sphi 0, %s110
    %s112 = sphi 0, %s110
    %s113 = sphi 0, %s112
    %s127 = sphi 0, %s113
    %s131 = sphi 0, %s131
    %s133 = sphi 0, %s131
    %s134 = sphi 0, %s133
    %s148 = sphi 0, %s134
    %s152 = sphi 0, %s152
    %s154 = sphi 0, %s152
    %s155 = sphi 0, %s154
    %s169 = sphi 0, %s155
    %s175 = sphi 0, %s177
    %s178 = sphi 0, %s175
    %s179 = sphi 0, %s178
    %s195 = sphi 0, %s179
  $region4: #{efficientnet_forward.4} parent=0 // loop_header_branch
    %16 = sbr.rel (%p14) target = $region8
  $region5: #{efficientnet_forward.4} parent=0 // loop_body
    %s18 = ssub.s32 %s13, 1
    %s19 = ssub.s32 %s13, 2
    %s20 = sadd.s32 %s13, 1
    %s21 = ssub.s32 %s13, %s20
    %p22 = scmp.eq.s32.totalorder %s21, 0
    %s24 = sadd.s32 %s23, 1
    %s25 = scalar_select %p22, %s23, %s24
    %p28 = pneg %p22
    %p29 = scmp.eq.s32.totalorder %s13, 1
    %p30 = por %p28, %p29
    %p31 = scmp.ne.s32.totalorder %s23, %s26
    %p32 = scmp.eq.s32.totalorder %s13, 0
    %p33 = por %p31, %p32
    %p34 = scmp.ne.s32.totalorder %s23, %s26
    %p35 = scmp.eq.s32.totalorder %s18, 1
    %p36 = por %p34, %p35
    %p37 = scmp.ne.s32.totalorder %s26, %s27
    %p38 = scmp.eq.s32.totalorder %s18, 0
    %p39 = por %p37, %p38
    %p40 = scmp.ne.s32.totalorder %s26, %s27
    %p41 = scmp.eq.s32.totalorder %s19, 1
    %p42 = por %p40, %p41
    %p44 = scmp.ne.s32.totalorder %s27, %s43
    %p45 = scmp.eq.s32.totalorder %s19, 0
    %p46 = por %p44, %p45
    %s48 = sadd.s32 %s47, 1
    %p51 = scmp.eq.s32.totalorder %s13, 1
    %p52 = scmp.ne.s32.totalorder %s47, %s49
    %p53 = scmp.eq.s32.totalorder %s13, 0
    %p54 = por %p52, %p53
    %p55 = scmp.ne.s32.totalorder %s47, %s49
    %p56 = scmp.eq.s32.totalorder %s18, 1
    %p57 = por %p55, %p56
    %p58 = scmp.ne.s32.totalorder %s49, %s50
    %p59 = scmp.eq.s32.totalorder %s18, 0
    %p60 = por %p58, %p59
    %p61 = scmp.ne.s32.totalorder %s49, %s50
    %p62 = scmp.eq.s32.totalorder %s19, 1
    %p63 = por %p61, %p62
    %p65 = scmp.ne.s32.totalorder %s50, %s64
    %p66 = scmp.eq.s32.totalorder %s19, 0
    %p67 = por %p65, %p66
    %s69 = sadd.s32 %s68, 1
    %p72 = scmp.eq.s32.totalorder %s13, 1
    %p73 = scmp.ne.s32.totalorder %s68, %s70
    %p74 = scmp.eq.s32.totalorder %s13, 0
    %p75 = por %p73, %p74
    %p76 = scmp.ne.s32.totalorder %s68, %s70
    %p77 = scmp.eq.s32.totalorder %s18, 1
    %p78 = por %p76, %p77
    %p79 = scmp.ne.s32.totalorder %s70, %s71
    %p80 = scmp.eq.s32.totalorder %s18, 0
    %p81 = por %p79, %p80
    %p82 = scmp.ne.s32.totalorder %s70, %s71
    %p83 = scmp.eq.s32.totalorder %s19, 1
    %p84 = por %p82, %p83
    %p86 = scmp.ne.s32.totalorder %s71, %s85
    %p87 = scmp.eq.s32.totalorder %s19, 0
    %p88 = por %p86, %p87
    %s90 = sadd.s32 %s89, 1
    %p93 = scmp.eq.s32.totalorder %s13, 1
    %p94 = scmp.ne.s32.totalorder %s89, %s91
    %p95 = scmp.eq.s32.totalorder %s13, 0
    %p96 = por %p94, %p95
    %p97 = scmp.ne.s32.totalorder %s89, %s91
    %p98 = scmp.eq.s32.totalorder %s18, 1
    %p99 = por %p97, %p98
    %p100 = scmp.ne.s32.totalorder %s91, %s92
    %p101 = scmp.eq.s32.totalorder %s18, 0
    %p102 = por %p100, %p101
    %p103 = scmp.ne.s32.totalorder %s91, %s92
    %p104 = scmp.eq.s32.totalorder %s19, 1
    %p105 = por %p103, %p104
    %p107 = scmp.ne.s32.totalorder %s92, %s106
    %p108 = scmp.eq.s32.totalorder %s19, 0
    %p109 = por %p107, %p108
    %s111 = sadd.s32 %s110, 1
    %p114 = scmp.eq.s32.totalorder %s13, 1
    %p115 = scmp.ne.s32.totalorder %s110, %s112
    %p116 = scmp.eq.s32.totalorder %s13, 0
    %p117 = por %p115, %p116
    %p118 = scmp.ne.s32.totalorder %s110, %s112
    %p119 = scmp.eq.s32.totalorder %s18, 1
    %p120 = por %p118, %p119
    %p121 = scmp.ne.s32.totalorder %s112, %s113
    %p122 = scmp.eq.s32.totalorder %s18, 0
    %p123 = por %p121, %p122
    %p124 = scmp.ne.s32.totalorder %s112, %s113
    %p125 = scmp.eq.s32.totalorder %s19, 1
    %p126 = por %p124, %p125
    %p128 = scmp.ne.s32.totalorder %s113, %s127
    %p129 = scmp.eq.s32.totalorder %s19, 0
    %p130 = por %p128, %p129
    %s132 = sadd.s32 %s131, 1
    %p135 = scmp.eq.s32.totalorder %s13, 1
    %p136 = scmp.ne.s32.totalorder %s131, %s133
    %p137 = scmp.eq.s32.totalorder %s13, 0
    %p138 = por %p136, %p137
    %p139 = scmp.ne.s32.totalorder %s131, %s133
    %p140 = scmp.eq.s32.totalorder %s18, 1
    %p141 = por %p139, %p140
    %p142 = scmp.ne.s32.totalorder %s133, %s134
    %p143 = scmp.eq.s32.totalorder %s18, 0
    %p144 = por %p142, %p143
    %p145 = scmp.ne.s32.totalorder %s133, %s134
    %p146 = scmp.eq.s32.totalorder %s19, 1
    %p147 = por %p145, %p146
    %p149 = scmp.ne.s32.totalorder %s134, %s148
    %p150 = scmp.eq.s32.totalorder %s19, 0
    %p151 = por %p149, %p150
    %s153 = sadd.s32 %s152, 1
    %p156 = scmp.eq.s32.totalorder %s13, 1
    %p157 = scmp.ne.s32.totalorder %s152, %s154
    %p158 = scmp.eq.s32.totalorder %s13, 0
    %p159 = por %p157, %p158
    %p160 = scmp.ne.s32.totalorder %s152, %s154
    %p161 = scmp.eq.s32.totalorder %s18, 1
    %p162 = por %p160, %p161
    %p163 = scmp.ne.s32.totalorder %s154, %s155
    %p164 = scmp.eq.s32.totalorder %s18, 0
    %p165 = por %p163, %p164
    %p166 = scmp.ne.s32.totalorder %s154, %s155
    %p167 = scmp.eq.s32.totalorder %s19, 1
    %p168 = por %p166, %p167
    %p170 = scmp.ne.s32.totalorder %s155, %s169
    %p171 = scmp.eq.s32.totalorder %s19, 0
    %p172 = por %p170, %p171
    %s173 = ssub.s32 %s13, %s20
    %p174 = scmp.eq.s32.totalorder %s173, 0
    %s176 = sadd.s32 %s175, 1
    %s177 = scalar_select %p174, %s175, %s176
    %p180 = pneg %p174
    %p181 = scmp.eq.s32.totalorder %s13, 1
    %p182 = por %p180, %p181
    %p183 = scmp.ne.s32.totalorder %s175, %s178
    %p184 = scmp.eq.s32.totalorder %s13, 0
    %p185 = por %p183, %p184
    %p186 = scmp.ne.s32.totalorder %s175, %s178
    %p187 = scmp.eq.s32.totalorder %s18, 1
    %p188 = por %p186, %p187
    %p189 = scmp.ne.s32.totalorder %s178, %s179
    %p190 = scmp.eq.s32.totalorder %s18, 0
    %p191 = por %p189, %p190
    %p192 = scmp.ne.s32.totalorder %s178, %s179
    %p193 = scmp.eq.s32.totalorder %s19, 1
    %p194 = por %p192, %p193
    %p196 = scmp.ne.s32.totalorder %s179, %s195
    %p197 = scmp.eq.s32.totalorder %s19, 0
    %p198 = por %p196, %p197
    %p199 = scmp.le.s32.totalorder 1, %s13
    %p200 = scmp.lt.s32.totalorder %s13, 3
    %p201 = pnand %p199, %p200
    %p202 = pneg %p201
    // Predicated region
    $region9: #{efficientnet_forward.4} parent=5 // pred_check
      _
    $region10: #{efficientnet_forward.4} parent=5 // pred_check_branch
      %204 = sbr.rel (%p201) target = $region12
    $region11: #{efficientnet_forward.4} parent=5 // pred_region
      %s205 = ssub.s32 %s13, 1
      // Predicated region
      $region13: #{efficientnet_forward.4} parent=11 // pred_check
        %p206 = pneg %p60
      $region14: #{efficientnet_forward.4} parent=11 // pred_check_branch
        %208 = sbr.rel (%p206) target = $region16
      $region15: #{efficientnet_forward.4} parent=11 // pred_region
        _
      $region16: #{efficientnet_forward.4} parent=11 // pred_fallthru
        _
      // Predicated region
      $region17: #{efficientnet_forward.4} parent=11 // pred_check
        %p209 = pneg %p81
      $region18: #{efficientnet_forward.4} parent=11 // pred_check_branch
        %211 = sbr.rel (%p209) target = $region20
      $region19: #{efficientnet_forward.4} parent=11 // pred_region
        _
      $region20: #{efficientnet_forward.4} parent=11 // pred_fallthru
        _
      // Predicated region
      $region21: #{efficientnet_forward.4} parent=11 // pred_check
        %p212 = pneg %p102
      $region22: #{efficientnet_forward.4} parent=11 // pred_check_branch
        %214 = sbr.rel (%p212) target = $region24
      $region23: #{efficientnet_forward.4} parent=11 // pred_region
        _
      $region24: #{efficientnet_forward.4} parent=11 // pred_fallthru
        _
      // Predicated region
      $region25: #{efficientnet_forward.4} parent=11 // pred_check
        %p215 = pneg %p123
      $region26: #{efficientnet_forward.4} parent=11 // pred_check_branch
        %217 = sbr.rel (%p215) target = $region28
      $region27: #{efficientnet_forward.4} parent=11 // pred_region
        _
      $region28: #{efficientnet_forward.4} parent=11 // pred_fallthru
        _
      // Predicated region
      $region29: #{efficientnet_forward.4} parent=11 // pred_check
        %p218 = pneg %p144
      $region30: #{efficientnet_forward.4} parent=11 // pred_check_branch
        %220 = sbr.rel (%p218) target = $region32
      $region31: #{efficientnet_forward.4} parent=11 // pred_region
        _
      $region32: #{efficientnet_forward.4} parent=11 // pred_fallthru
        _
      // Predicated region
      $region33: #{efficientnet_forward.4} parent=11 // pred_check
        %p221 = pneg %p165
      $region34: #{efficientnet_forward.4} parent=11 // pred_check_branch
        %223 = sbr.rel (%p221) target = $region36
      $region35: #{efficientnet_forward.4} parent=11 // pred_region
        _
      $region36: #{efficientnet_forward.4} parent=11 // pred_fallthru
        _
    $region12: #{efficientnet_forward.4} parent=5 // pred_fallthru
      _
    %p224 = scmp.lt.s32.totalorder %s13, 2
    // Predicated region
    $region37: #{efficientnet_forward.4} parent=5 // pred_check
      %p225 = pneg %p224
    $region38: #{efficientnet_forward.4} parent=5 // pred_check_branch
      %227 = sbr.rel (%p225) target = $region40
    $region39: #{efficientnet_forward.4} parent=5 // pred_region
      // Predicated region
      $region41: #{efficientnet_forward.4} parent=39 // pred_check
        %p228 = pneg %p33
      $region42: #{efficientnet_forward.4} parent=39 // pred_check_branch
        %230 = sbr.rel (%p228) target = $region44
      $region43: #{efficientnet_forward.4} parent=39 // pred_region
        %p231 = scmp.lt.s32.totalorder %s13, 1
        %s232 = scalar_select %p231, %s13, 1
        %s233 = smul.addr %s232, 20
        %s234 = smul.addr %s233, 4
        %s235 = scalar_lea.vmem %s0, %s234
      $region44: #{efficientnet_forward.4} parent=39 // pred_fallthru
        _
    $region40: #{efficientnet_forward.4} parent=5 // pred_fallthru
      _
    %p236 = scmp.le.s32.totalorder 1, %s13
    %p237 = scmp.lt.s32.totalorder %s13, 3
    %p238 = pnand %p236, %p237
    %p239 = pneg %p238
    // Predicated region
    $region45: #{efficientnet_forward.4} parent=5 // pred_check
      _
    $region46: #{efficientnet_forward.4} parent=5 // pred_check_branch
      %241 = sbr.rel (%p238) target = $region48
    $region47: #{efficientnet_forward.4} parent=5 // pred_region
      %s242 = ssub.s32 %s13, 1
      %p243 = scmp.lt.s32.totalorder %s18, 1
      %s244 = scalar_select %p243, %s18, 1
      %s245 = smul.addr %s244, 20
      %s246 = smul.addr %s245, 4
      %s247 = scalar_lea.vmem %s0, %s246
      %p248 = pneg %p39
      %p249 = pneg %p36
      %p250 = pneg %p60
      %p251 = pneg %p57
      %p252 = pneg %p81
      %p253 = pneg %p78
      %p254 = pneg %p102
      %p255 = pneg %p99
      %p256 = pneg %p123
      %p257 = pneg %p120
      %p258 = pneg %p144
      %p259 = pneg %p141
      %p260 = pneg %p165
      %p261 = pneg %p162
      %p262 = pneg %p191
      %p263 = pneg %p188
      %p264 = scmp.lt.s32.totalorder %s18, 1
      %s265 = scalar_select %p264, %s18, 1
      %s266 = smul.addr %s265, 8
      %s267 = smul.addr %s266, 4
      %s268 = scalar_lea.vmem %s7, %s267
      %p269 = scmp.lt.s32.totalorder %s18, 1
      %s270 = scalar_select %p269, %s18, 1
      %s271 = smul.addr %s270, 20
      %s272 = smul.addr %s271, 4
      %s273 = scalar_lea.vmem %s0, %s272
      %p274 = scmp.lt.s32.totalorder %s18, 1
      %s275 = scalar_select %p274, %s18, 1
      %s276 = smul.addr %s275, 8
      %s277 = smul.addr %s276, 4
      %s278 = scalar_lea.vmem %s7, %s277
      %v280 = vld [vmem:[%s273] sm:$0xf]
      %v281 = vld [vmem:[%s273 + $0x4] sm:$0x1]
      %v282 = vld [vmem:[%s273 + $0x8] sm:$0xf]
      %v283 = vld [vmem:[%s273 + $0xc] sm:$0x1]
      %v284 = vld [vmem:[%s273 + $0x10] sm:$0xf]
      %v285 = vld [vmem:[%s273 + $0x14] sm:$0x1]
      %v286 = vld [vmem:[%s273 + $0x18] sm:$0xf]
      %v287 = vld [vmem:[%s273 + $0x1c] sm:$0x1]
      %v288 = vld [vmem:[%s273 + $0x20] sm:$0xf]
      %v289 = vld [vmem:[%s273 + $0x24] sm:$0x1]
      %v290 = vld [vmem:[%s273 + $0x28] sm:$0xf]
      %v291 = vld [vmem:[%s273 + $0x2c] sm:$0x1]
      %v292 = vld [vmem:[%s273 + $0x30] sm:$0xf]
      %v293 = vld [vmem:[%s273 + $0x34] sm:$0x1]
      %v294 = vld [vmem:[%s273 + $0x38] sm:$0xf]
      %v295 = vld [vmem:[%s273 + $0x3c] sm:$0x1]
      %v296 = vld [vmem:[%s273 + $0x40] sm:$0xf]
      %v297 = vld [vmem:[%s273 + $0x44] sm:$0x1]
      %v298 = vld [vmem:[%s273 + $0x48] sm:$0xf]
      %v299 = vld [vmem:[%s273 + $0x4c] sm:$0x1]
      %v300 = vunpack.c.l.bf16 %v280
      %v301 = vunpack.c.l.bf16 %v281
      %v302 = vunpack.c.l.bf16 %v282
      %v303 = vunpack.c.l.bf16 %v283
      %v304 = vunpack.c.l.bf16 %v284
      %v305 = vunpack.c.l.bf16 %v285
      %v306 = vunpack.c.l.bf16 %v286
      %v307 = vunpack.c.l.bf16 %v287
      %v308 = vunpack.c.l.bf16 %v288
      %v309 = vunpack.c.l.bf16 %v289
      %v310 = vunpack.c.l.bf16 %v290
      %v311 = vunpack.c.l.bf16 %v291
      %v312 = vunpack.c.l.bf16 %v292
      %v313 = vunpack.c.l.bf16 %v293
      %v314 = vunpack.c.l.bf16 %v294
      %v315 = vunpack.c.l.bf16 %v295
      %v316 = vunpack.c.l.bf16 %v296
      %v317 = vunpack.c.l.bf16 %v297
      %v318 = vunpack.c.l.bf16 %v298
      %v319 = vunpack.c.l.bf16 %v299
      %v320 = vpack.c.bf16 %v302, %v300
      %v321 = vpack.c.bf16 %v306, %v304
      %v322 = vpack.c.bf16 %v310, %v308
      %v323 = vpack.c.bf16 %v314, %v312
      %v324 = vld [vmem:[%s1] sm:$0xf]
      %v325 = vld [vmem:[%s1 + $0x4] sm:$0xf]
      %v326 = vld [vmem:[%s1 + $0x8] sm:$0xf]
      %v327 = vld [vmem:[%s1 + $0xc] sm:$0xf]
      %v328 = vld [vmem:[%s1 + $0x10] sm:$0xf]
      %v329 = vld [vmem:[%s1 + $0x14] sm:$0xf]
      %v330 = vld [vmem:[%s1 + $0x18] sm:$0xf]
      %v331 = vld [vmem:[%s1 + $0x1c] sm:$0xf]
      %v332 = vld [vmem:[%s1 + $0x20] sm:$0xf]
      %v333 = vld [vmem:[%s1 + $0x24] sm:$0xf]
      %v334 = vld [vmem:[%s1 + $0x28] sm:$0xf]
      %v335 = vld [vmem:[%s1 + $0x2c] sm:$0xf]
      %v336 = vld [vmem:[%s1 + $0x30] sm:$0xf]
      %v337 = vld [vmem:[%s1 + $0x34] sm:$0xf]
      %v338 = vld [vmem:[%s1 + $0x38] sm:$0xf]
      %v339 = vld [vmem:[%s1 + $0x3c] sm:$0xf]
      %vm356 = vcmask 1046528
      %v357 = vrot.slane %v300, 1
      %v358 = vrot.slane %v301, 1
      %v359 = vsel %vm356, %v357, %v358
      %v360 = vrot.slane %v302, 1
      %v361 = vrot.slane %v303, 1
      %v362 = vsel %vm356, %v360, %v361
      %v363 = vrot.slane %v304, 1
      %v364 = vrot.slane %v305, 1
      %v365 = vsel %vm356, %v363, %v364
      %v366 = vrot.slane %v306, 1
      %v367 = vrot.slane %v307, 1
      %v368 = vsel %vm356, %v366, %v367
      %v369 = vrot.slane %v308, 1
      %v370 = vrot.slane %v309, 1
      %v371 = vsel %vm356, %v369, %v370
      %v372 = vrot.slane %v310, 1
      %v373 = vrot.slane %v311, 1
      %v374 = vsel %vm356, %v372, %v373
      %v375 = vrot.slane %v312, 1
      %v376 = vrot.slane %v313, 1
      %v377 = vsel %vm356, %v375, %v376
      %v378 = vrot.slane %v314, 1
      %v379 = vrot.slane %v315, 1
      %v380 = vsel %vm356, %v378, %v379
      %v389 = vpack.c.bf16 %v362, %v359
      %v390 = vpack.c.bf16 %v368, %v365
      %v391 = vpack.c.bf16 %v374, %v371
      %v392 = vpack.c.bf16 %v380, %v377
      %s393 = scalar_lea.vmem %s1, 64
      %v394 = vld [vmem:[%s393] sm:$0xf]
      %v395 = vld [vmem:[%s393 + $0x4] sm:$0xf]
      %v396 = vld [vmem:[%s393 + $0x8] sm:$0xf]
      %v397 = vld [vmem:[%s393 + $0xc] sm:$0xf]
      %v398 = vld [vmem:[%s393 + $0x10] sm:$0xf]
      %v399 = vld [vmem:[%s393 + $0x14] sm:$0xf]
      %v400 = vld [vmem:[%s393 + $0x18] sm:$0xf]
      %v401 = vld [vmem:[%s393 + $0x1c] sm:$0xf]
      %v402 = vld [vmem:[%s393 + $0x20] sm:$0xf]
      %v403 = vld [vmem:[%s393 + $0x24] sm:$0xf]
      %v404 = vld [vmem:[%s393 + $0x28] sm:$0xf]
      %v405 = vld [vmem:[%s393 + $0x2c] sm:$0xf]
      %v406 = vld [vmem:[%s393 + $0x30] sm:$0xf]
      %v407 = vld [vmem:[%s393 + $0x34] sm:$0xf]
      %v408 = vld [vmem:[%s393 + $0x38] sm:$0xf]
      %v409 = vld [vmem:[%s393 + $0x3c] sm:$0xf]
      %v426 = vunpack.c.l.b16 %v394
      %v427 = vunpack.c.l.b16 %v395
      %v428 = vunpack.c.l.b16 %v396
      %v429 = vunpack.c.l.b16 %v397
      %v430 = vunpack.c.l.b16 %v398
      %v431 = vunpack.c.l.b16 %v399
      %v432 = vunpack.c.l.b16 %v400
      %v433 = vunpack.c.l.b16 %v401
      %v434 = vunpack.c.l.b16 %v402
      %v435 = vunpack.c.l.b16 %v403
      %v436 = vunpack.c.l.b16 %v404
      %v437 = vunpack.c.l.b16 %v405
      %v438 = vunpack.c.l.b16 %v406
      %v439 = vunpack.c.l.b16 %v407
      %v440 = vunpack.c.l.b16 %v408
      %v441 = vunpack.c.l.b16 %v409
      %v442 = vpack.c.b16 %v427, %v426
      %v443 = vpack.c.b16 %v429, %v428
      %v444 = vpack.c.b16 %v431, %v430
      %v445 = vpack.c.b16 %v433, %v432
      %v446 = vpack.c.b16 %v435, %v434
      %v447 = vpack.c.b16 %v437, %v436
      %v448 = vpack.c.b16 %v439, %v438
      %v449 = vpack.c.b16 %v441, %v440
      %458 = vmatprep.subr.bf16.mxu0 0
      %459 = vmatpush1.bf16.msra.mxu0 %v449
      %460 = vmatprep.subr.bf16.mxu0 0
      %461 = vmatpush1.bf16.msra.mxu0 %v448
      %462 = vmatprep.subr.bf16.mxu0 0
      %463 = vmatpush1.bf16.msra.mxu0 %v447
      %464 = vmatprep.subr.bf16.mxu0 0
      %465 = vmatpush1.bf16.msra.mxu0 %v446
      %466 = vmatprep.subr.bf16.mxu0 0
      %467 = vmatpush1.bf16.msra.mxu0 %v445
      %468 = vmatprep.subr.bf16.mxu0 0
      %469 = vmatpush1.bf16.msra.mxu0 %v444
      %470 = vmatprep.subr.bf16.mxu0 0
      %471 = vmatpush1.bf16.msra.mxu0 %v443
      %472 = vmatprep.subr.bf16.mxu0 0
      %473 = vmatpush1.bf16.msra.mxu0 %v442
      %474 = vmatprep.subr.bf16.mxu0 0
      %475 = vmatpush2.bf16.msra.mxu0 0
      %476 = vmatprep.subr.bf16.mxu0 0
      %477 = vmatpush2.bf16.msra.mxu0 0
      %478 = vmatprep.subr.bf16.mxu0 0
      %479 = vmatpush2.bf16.msra.mxu0 0
      %480 = vmatprep.subr.bf16.mxu0 0
      %481 = vmatpush2.bf16.msra.mxu0 0
      %482 = vmatprep.subr.bf16.mxu0 0
      %483 = vmatpush2.bf16.msra.mxu0 0
      %484 = vmatprep.subr.bf16.mxu0 0
      %485 = vmatpush2.bf16.msra.mxu0 0
      %486 = vmatprep.subr.bf16.mxu0 0
      %487 = vmatpush2.bf16.msra.mxu0 0
      %488 = vmatprep.subr.bf16.mxu0 0
      %489 = vmatpush2.bf16.msra.mxu0 0
      %490 = vmatprep.mubr.bf16.mxu0 0
      %491 = vmatmul.mubr.bf16.gmra.mxu0 %v389
      %v492 = vpop.f32.mrf.mxu0
      %v493 = vadd.f32 0.0, %v492
      %v494 = vpop.f32.mrf.mxu0
      %v495 = vpop.f32.mrf.mxu0
      %v496 = vadd.f32 0.0, %v495
      %v497 = vpop.f32.mrf.mxu0
      %498 = vmatprep.mubr.bf16.mxu0 0
      %499 = vmatmul.mubr.bf16.gmra.mxu0 %v390
      %v500 = vpop.f32.mrf.mxu0
      %v501 = vadd.f32 0.0, %v500
      %v502 = vpop.f32.mrf.mxu0
      %v503 = vpop.f32.mrf.mxu0
      %v504 = vadd.f32 0.0, %v503
      %v505 = vpop.f32.mrf.mxu0
      %506 = vmatprep.mubr.bf16.mxu0 0
      %507 = vmatmul.mubr.bf16.gmra.mxu0 %v391
      %v508 = vpop.f32.mrf.mxu0
      %v509 = vadd.f32 0.0, %v508
      %v510 = vpop.f32.mrf.mxu0
      %v511 = vpop.f32.mrf.mxu0
      %v512 = vadd.f32 0.0, %v511
      %v513 = vpop.f32.mrf.mxu0
      %514 = vmatprep.mubr.bf16.mxu0 0
      %515 = vmatmul.mubr.bf16.gmra.mxu0 %v392
      %v516 = vpop.f32.mrf.mxu0
      %v517 = vadd.f32 0.0, %v516
      %v518 = vpop.f32.mrf.mxu0
      %v519 = vpop.f32.mrf.mxu0
      %v520 = vadd.f32 0.0, %v519
      %v521 = vpop.f32.mrf.mxu0
      %522 = vdwg.mxu0
      %v539 = vunpack.c.l.b16 %v324
      %v540 = vunpack.c.l.b16 %v325
      %v541 = vunpack.c.l.b16 %v326
      %v542 = vunpack.c.l.b16 %v327
      %v543 = vunpack.c.l.b16 %v328
      %v544 = vunpack.c.l.b16 %v329
      %v545 = vunpack.c.l.b16 %v330
      %v546 = vunpack.c.l.b16 %v331
      %v547 = vunpack.c.l.b16 %v332
      %v548 = vunpack.c.l.b16 %v333
      %v549 = vunpack.c.l.b16 %v334
      %v550 = vunpack.c.l.b16 %v335
      %v551 = vunpack.c.l.b16 %v336
      %v552 = vunpack.c.l.b16 %v337
      %v553 = vunpack.c.l.b16 %v338
      %v554 = vunpack.c.l.b16 %v339
      %v555 = vpack.c.b16 %v540, %v539
      %v556 = vpack.c.b16 %v542, %v541
      %v557 = vpack.c.b16 %v544, %v543
      %v558 = vpack.c.b16 %v546, %v545
      %v559 = vpack.c.b16 %v548, %v547
      %v560 = vpack.c.b16 %v550, %v549
      %v561 = vpack.c.b16 %v552, %v551
      %v562 = vpack.c.b16 %v554, %v553
      %571 = vmatprep.subr.bf16.mxu0 0
      %572 = vmatpush1.bf16.msra.mxu0 %v562
      %573 = vmatprep.subr.bf16.mxu0 0
      %574 = vmatpush1.bf16.msra.mxu0 %v561
      %575 = vmatprep.subr.bf16.mxu0 0
      %576 = vmatpush1.bf16.msra.mxu0 %v560
      %577 = vmatprep.subr.bf16.mxu0 0
      %578 = vmatpush1.bf16.msra.mxu0 %v559
      %579 = vmatprep.subr.bf16.mxu0 0
      %580 = vmatpush1.bf16.msra.mxu0 %v558
      %581 = vmatprep.subr.bf16.mxu0 0
      %582 = vmatpush1.bf16.msra.mxu0 %v557
      %583 = vmatprep.subr.bf16.mxu0 0
      %584 = vmatpush1.bf16.msra.mxu0 %v556
      %585 = vmatprep.subr.bf16.mxu0 0
      %586 = vmatpush1.bf16.msra.mxu0 %v555
      %587 = vmatprep.subr.bf16.mxu0 0
      %588 = vmatpush2.bf16.msra.mxu0 0
      %589 = vmatprep.subr.bf16.mxu0 0
      %590 = vmatpush2.bf16.msra.mxu0 0
      %591 = vmatprep.subr.bf16.mxu0 0
      %592 = vmatpush2.bf16.msra.mxu0 0
      %593 = vmatprep.subr.bf16.mxu0 0
      %594 = vmatpush2.bf16.msra.mxu0 0
      %595 = vmatprep.subr.bf16.mxu0 0
      %596 = vmatpush2.bf16.msra.mxu0 0
      %597 = vmatprep.subr.bf16.mxu0 0
      %598 = vmatpush2.bf16.msra.mxu0 0
      %599 = vmatprep.subr.bf16.mxu0 0
      %600 = vmatpush2.bf16.msra.mxu0 0
      %601 = vmatprep.subr.bf16.mxu0 0
      %602 = vmatpush2.bf16.msra.mxu0 0
      %603 = vmatprep.mubr.bf16.mxu0 0
      %604 = vmatmul.mubr.bf16.gmra.mxu0 %v320
      %v605 = vpop.f32.mrf.mxu0
      %v606 = vadd.f32 %v493, %v605
      %v607 = vpop.f32.mrf.mxu0
      %v608 = vpop.f32.mrf.mxu0
      %v609 = vadd.f32 %v496, %v608
      %v610 = vpop.f32.mrf.mxu0
      %611 = vmatprep.mubr.bf16.mxu0 0
      %612 = vmatmul.mubr.bf16.gmra.mxu0 %v321
      %v613 = vpop.f32.mrf.mxu0
      %v614 = vadd.f32 %v501, %v613
      %v615 = vpop.f32.mrf.mxu0
      %v616 = vpop.f32.mrf.mxu0
      %v617 = vadd.f32 %v504, %v616
      %v618 = vpop.f32.mrf.mxu0
      %619 = vmatprep.mubr.bf16.mxu0 0
      %620 = vmatmul.mubr.bf16.gmra.mxu0 %v322
      %v621 = vpop.f32.mrf.mxu0
      %v622 = vadd.f32 %v509, %v621
      %v623 = vpop.f32.mrf.mxu0
      %v624 = vpop.f32.mrf.mxu0
      %v625 = vadd.f32 %v512, %v624
      %v626 = vpop.f32.mrf.mxu0
      %627 = vmatprep.mubr.bf16.mxu0 0
      %628 = vmatmul.mubr.bf16.gmra.mxu0 %v323
      %v629 = vpop.f32.mrf.mxu0
      %v630 = vadd.f32 %v517, %v629
      %v631 = vpop.f32.mrf.mxu0
      %v632 = vpop.f32.mrf.mxu0
      %v633 = vadd.f32 %v520, %v632
      %v634 = vpop.f32.mrf.mxu0
      %635 = vdwg.mxu0
      %vm636 = vcmask 1045504
      %v637 = vrot.slane %v300, 2
      %v638 = vrot.slane %v301, 2
      %v639 = vsel %vm636, %v637, %v638
      %v640 = vrot.slane %v302, 2
      %v641 = vrot.slane %v303, 2
      %v642 = vsel %vm636, %v640, %v641
      %v643 = vrot.slane %v304, 2
      %v644 = vrot.slane %v305, 2
      %v645 = vsel %vm636, %v643, %v644
      %v646 = vrot.slane %v306, 2
      %v647 = vrot.slane %v307, 2
      %v648 = vsel %vm636, %v646, %v647
      %v649 = vrot.slane %v308, 2
      %v650 = vrot.slane %v309, 2
      %v651 = vsel %vm636, %v649, %v650
      %v652 = vrot.slane %v310, 2
      %v653 = vrot.slane %v311, 2
      %v654 = vsel %vm636, %v652, %v653
      %v655 = vrot.slane %v312, 2
      %v656 = vrot.slane %v313, 2
      %v657 = vsel %vm636, %v655, %v656
      %v658 = vrot.slane %v314, 2
      %v659 = vrot.slane %v315, 2
      %v660 = vsel %vm636, %v658, %v659
      %v669 = vpack.c.bf16 %v642, %v639
      %v670 = vpack.c.bf16 %v648, %v645
      %v671 = vpack.c.bf16 %v654, %v651
      %v672 = vpack.c.bf16 %v660, %v657
      %s673 = scalar_lea.vmem %s1, 128
      %v674 = vld [vmem:[%s673] sm:$0xf]
      %v675 = vld [vmem:[%s673 + $0x4] sm:$0xf]
      %v676 = vld [vmem:[%s673 + $0x8] sm:$0xf]
      %v677 = vld [vmem:[%s673 + $0xc] sm:$0xf]
      %v678 = vld [vmem:[%s673 + $0x10] sm:$0xf]
      %v679 = vld [vmem:[%s673 + $0x14] sm:$0xf]
      %v680 = vld [vmem:[%s673 + $0x18] sm:$0xf]
      %v681 = vld [vmem:[%s673 + $0x1c] sm:$0xf]
      %v682 = vld [vmem:[%s673 + $0x20] sm:$0xf]
      %v683 = vld [vmem:[%s673 + $0x24] sm:$0xf]
      %v684 = vld [vmem:[%s673 + $0x28] sm:$0xf]
      %v685 = vld [vmem:[%s673 + $0x2c] sm:$0xf]
      %v686 = vld [vmem:[%s673 + $0x30] sm:$0xf]
      %v687 = vld [vmem:[%s673 + $0x34] sm:$0xf]
      %v688 = vld [vmem:[%s673 + $0x38] sm:$0xf]
      %v689 = vld [vmem:[%s673 + $0x3c] sm:$0xf]
      %v706 = vunpack.c.l.b16 %v674
      %v707 = vunpack.c.l.b16 %v675
      %v708 = vunpack.c.l.b16 %v676
      %v709 = vunpack.c.l.b16 %v677
      %v710 = vunpack.c.l.b16 %v678
      %v711 = vunpack.c.l.b16 %v679
      %v712 = vunpack.c.l.b16 %v680
      %v713 = vunpack.c.l.b16 %v681
      %v714 = vunpack.c.l.b16 %v682
      %v715 = vunpack.c.l.b16 %v683
      %v716 = vunpack.c.l.b16 %v684
      %v717 = vunpack.c.l.b16 %v685
      %v718 = vunpack.c.l.b16 %v686
      %v719 = vunpack.c.l.b16 %v687
      %v720 = vunpack.c.l.b16 %v688
      %v721 = vunpack.c.l.b16 %v689
      %v722 = vpack.c.b16 %v707, %v706
      %v723 = vpack.c.b16 %v709, %v708
      %v724 = vpack.c.b16 %v711, %v710
      %v725 = vpack.c.b16 %v713, %v712
      %v726 = vpack.c.b16 %v715, %v714
      %v727 = vpack.c.b16 %v717, %v716
      %v728 = vpack.c.b16 %v719, %v718
      %v729 = vpack.c.b16 %v721, %v720
      %738 = vmatprep.subr.bf16.mxu0 0
      %739 = vmatpush1.bf16.msra.mxu0 %v729
      %740 = vmatprep.subr.bf16.mxu0 0
      %741 = vmatpush1.bf16.msra.mxu0 %v728
      %742 = vmatprep.subr.bf16.mxu0 0
      %743 = vmatpush1.bf16.msra.mxu0 %v727
      %744 = vmatprep.subr.bf16.mxu0 0
      %745 = vmatpush1.bf16.msra.mxu0 %v726
      %746 = vmatprep.subr.bf16.mxu0 0
      %747 = vmatpush1.bf16.msra.mxu0 %v725
      %748 = vmatprep.subr.bf16.mxu0 0
      %749 = vmatpush1.bf16.msra.mxu0 %v724
      %750 = vmatprep.subr.bf16.mxu0 0
      %751 = vmatpush1.bf16.msra.mxu0 %v723
      %752 = vmatprep.subr.bf16.mxu0 0
      %753 = vmatpush1.bf16.msra.mxu0 %v722
      %754 = vmatprep.subr.bf16.mxu0 0
      %755 = vmatpush2.bf16.msra.mxu0 0
      %756 = vmatprep.subr.bf16.mxu0 0
      %757 = vmatpush2.bf16.msra.mxu0 0
      %758 = vmatprep.subr.bf16.mxu0 0
      %759 = vmatpush2.bf16.msra.mxu0 0
      %760 = vmatprep.subr.bf16.mxu0 0
      %761 = vmatpush2.bf16.msra.mxu0 0
      %762 = vmatprep.subr.bf16.mxu0 0
      %763 = vmatpush2.bf16.msra.mxu0 0
      %764 = vmatprep.subr.bf16.mxu0 0
      %765 = vmatpush2.bf16.msra.mxu0 0
      %766 = vmatprep.subr.bf16.mxu0 0
      %767 = vmatpush2.bf16.msra.mxu0 0
      %768 = vmatprep.subr.bf16.mxu0 0
      %769 = vmatpush2.bf16.msra.mxu0 0
      %770 = vmatprep.mubr.bf16.mxu0 0
      %771 = vmatmul.mubr.bf16.gmra.mxu0 %v669
      %v772 = vpop.f32.mrf.mxu0
      %v773 = vadd.f32 0.0, %v772
      %v774 = vpop.f32.mrf.mxu0
      %v775 = vpop.f32.mrf.mxu0
      %v776 = vadd.f32 0.0, %v775
      %v777 = vpop.f32.mrf.mxu0
      %778 = vmatprep.mubr.bf16.mxu0 0
      %779 = vmatmul.mubr.bf16.gmra.mxu0 %v670
      %v780 = vpop.f32.mrf.mxu0
      %v781 = vadd.f32 0.0, %v780
      %v782 = vpop.f32.mrf.mxu0
      %v783 = vpop.f32.mrf.mxu0
      %v784 = vadd.f32 0.0, %v783
      %v785 = vpop.f32.mrf.mxu0
      %786 = vmatprep.mubr.bf16.mxu0 0
      %787 = vmatmul.mubr.bf16.gmra.mxu0 %v671
      %v788 = vpop.f32.mrf.mxu0
      %v789 = vadd.f32 0.0, %v788
      %v790 = vpop.f32.mrf.mxu0
      %v791 = vpop.f32.mrf.mxu0
      %v792 = vadd.f32 0.0, %v791
      %v793 = vpop.f32.mrf.mxu0
      %794 = vmatprep.mubr.bf16.mxu0 0
      %795 = vmatmul.mubr.bf16.gmra.mxu0 %v672
      %v796 = vpop.f32.mrf.mxu0
      %v797 = vadd.f32 0.0, %v796
      %v798 = vpop.f32.mrf.mxu0
      %v799 = vpop.f32.mrf.mxu0
      %v800 = vadd.f32 0.0, %v799
      %v801 = vpop.f32.mrf.mxu0
      %802 = vdwg.mxu0
      %v803 = vadd.f32 %v606, %v773
      %v804 = vadd.f32 %v609, %v776
      %v805 = vadd.f32 %v614, %v781
      %v806 = vadd.f32 %v617, %v784
      %v807 = vadd.f32 %v622, %v789
      %v808 = vadd.f32 %v625, %v792
      %v809 = vadd.f32 %v630, %v797
      %v810 = vadd.f32 %v633, %v800
      %v811 = vpack.c.bf16 %v304, %v302
      %v812 = vpack.c.bf16 %v308, %v306
      %v813 = vpack.c.bf16 %v312, %v310
      %v814 = vpack.c.bf16 %v316, %v314
      %s815 = scalar_lea.vmem %s1, 192
      %v816 = vld [vmem:[%s815] sm:$0xf]
      %v817 = vld [vmem:[%s815 + $0x4] sm:$0xf]
      %v818 = vld [vmem:[%s815 + $0x8] sm:$0xf]
      %v819 = vld [vmem:[%s815 + $0xc] sm:$0xf]
      %v820 = vld [vmem:[%s815 + $0x10] sm:$0xf]
      %v821 = vld [vmem:[%s815 + $0x14] sm:$0xf]
      %v822 = vld [vmem:[%s815 + $0x18] sm:$0xf]
      %v823 = vld [vmem:[%s815 + $0x1c] sm:$0xf]
      %v824 = vld [vmem:[%s815 + $0x20] sm:$0xf]
      %v825 = vld [vmem:[%s815 + $0x24] sm:$0xf]
      %v826 = vld [vmem:[%s815 + $0x28] sm:$0xf]
      %v827 = vld [vmem:[%s815 + $0x2c] sm:$0xf]
      %v828 = vld [vmem:[%s815 + $0x30] sm:$0xf]
      %v829 = vld [vmem:[%s815 + $0x34] sm:$0xf]
      %v830 = vld [vmem:[%s815 + $0x38] sm:$0xf]
      %v831 = vld [vmem:[%s815 + $0x3c] sm:$0xf]
      %v848 = vunpack.c.l.b16 %v816
      %v849 = vunpack.c.l.b16 %v817
      %v850 = vunpack.c.l.b16 %v818
      %v851 = vunpack.c.l.b16 %v819
      %v852 = vunpack.c.l.b16 %v820
      %v853 = vunpack.c.l.b16 %v821
      %v854 = vunpack.c.l.b16 %v822
      %v855 = vunpack.c.l.b16 %v823
      %v856 = vunpack.c.l.b16 %v824
      %v857 = vunpack.c.l.b16 %v825
      %v858 = vunpack.c.l.b16 %v826
      %v859 = vunpack.c.l.b16 %v827
      %v860 = vunpack.c.l.b16 %v828
      %v861 = vunpack.c.l.b16 %v829
      %v862 = vunpack.c.l.b16 %v830
      %v863 = vunpack.c.l.b16 %v831
      %v864 = vpack.c.b16 %v849, %v848
      %v865 = vpack.c.b16 %v851, %v850
      %v866 = vpack.c.b16 %v853, %v852
      %v867 = vpack.c.b16 %v855, %v854
      %v868 = vpack.c.b16 %v857, %v856
      %v869 = vpack.c.b16 %v859, %v858
      %v870 = vpack.c.b16 %v861, %v860
      %v871 = vpack.c.b16 %v863, %v862
      %880 = vmatprep.subr.bf16.mxu0 0
      %881 = vmatpush1.bf16.msra.mxu0 %v871
      %882 = vmatprep.subr.bf16.mxu0 0
      %883 = vmatpush1.bf16.msra.mxu0 %v870
      %884 = vmatprep.subr.bf16.mxu0 0
      %885 = vmatpush1.bf16.msra.mxu0 %v869
      %886 = vmatprep.subr.bf16.mxu0 0
      %887 = vmatpush1.bf16.msra.mxu0 %v868
      %888 = vmatprep.subr.bf16.mxu0 0
      %889 = vmatpush1.bf16.msra.mxu0 %v867
      %890 = vmatprep.subr.bf16.mxu0 0
      %891 = vmatpush1.bf16.msra.mxu0 %v866
      %892 = vmatprep.subr.bf16.mxu0 0
      %893 = vmatpush1.bf16.msra.mxu0 %v865
      %894 = vmatprep.subr.bf16.mxu0 0
      %895 = vmatpush1.bf16.msra.mxu0 %v864
      %896 = vmatprep.subr.bf16.mxu0 0
      %897 = vmatpush2.bf16.msra.mxu0 0
      %898 = vmatprep.subr.bf16.mxu0 0
      %899 = vmatpush2.bf16.msra.mxu0 0
      %900 = vmatprep.subr.bf16.mxu0 0
      %901 = vmatpush2.bf16.msra.mxu0 0
      %902 = vmatprep.subr.bf16.mxu0 0
      %903 = vmatpush2.bf16.msra.mxu0 0
      %904 = vmatprep.subr.bf16.mxu0 0
      %905 = vmatpush2.bf16.msra.mxu0 0
      %906 = vmatprep.subr.bf16.mxu0 0
      %907 = vmatpush2.bf16.msra.mxu0 0
      %908 = vmatprep.subr.bf16.mxu0 0
      %909 = vmatpush2.bf16.msra.mxu0 0
      %910 = vmatprep.subr.bf16.mxu0 0
      %911 = vmatpush2.bf16.msra.mxu0 0
      %912 = vmatprep.mubr.bf16.mxu0 0
      %913 = vmatmul.mubr.bf16.gmra.mxu0 %v811
      %v914 = vpop.f32.mrf.mxu0
      %v915 = vadd.f32 0.0, %v914
      %v916 = vpop.f32.mrf.mxu0
      %v917 = vpop.f32.mrf.mxu0
      %v918 = vadd.f32 0.0, %v917
      %v919 = vpop.f32.mrf.mxu0
      %920 = vmatprep.mubr.bf16.mxu0 0
      %921 = vmatmul.mubr.bf16.gmra.mxu0 %v812
      %v922 = vpop.f32.mrf.mxu0
      %v923 = vadd.f32 0.0, %v922
      %v924 = vpop.f32.mrf.mxu0
      %v925 = vpop.f32.mrf.mxu0
      %v926 = vadd.f32 0.0, %v925
      %v927 = vpop.f32.mrf.mxu0
      %928 = vmatprep.mubr.bf16.mxu0 0
      %929 = vmatmul.mubr.bf16.gmra.mxu0 %v813
      %v930 = vpop.f32.mrf.mxu0
      %v931 = vadd.f32 0.0, %v930
      %v932 = vpop.f32.mrf.mxu0
      %v933 = vpop.f32.mrf.mxu0
      %v934 = vadd.f32 0.0, %v933
      %v935 = vpop.f32.mrf.mxu0
      %936 = vmatprep.mubr.bf16.mxu0 0
      %937 = vmatmul.mubr.bf16.gmra.mxu0 %v814
      %v938 = vpop.f32.mrf.mxu0
      %v939 = vadd.f32 0.0, %v938
      %v940 = vpop.f32.mrf.mxu0
      %v941 = vpop.f32.mrf.mxu0
      %v942 = vadd.f32 0.0, %v941
      %v943 = vpop.f32.mrf.mxu0
      %944 = vdwg.mxu0
      %v945 = vadd.f32 %v803, %v915
      %v946 = vadd.f32 %v804, %v918
      %v947 = vadd.f32 %v805, %v923
      %v948 = vadd.f32 %v806, %v926
      %v949 = vadd.f32 %v807, %v931
      %v950 = vadd.f32 %v808, %v934
      %v951 = vadd.f32 %v809, %v939
      %v952 = vadd.f32 %v810, %v942
      %v955 = vrot.slane %v316, 1
      %v956 = vrot.slane %v317, 1
      %v957 = vsel %vm356, %v955, %v956
      %v959 = vpack.c.bf16 %v365, %v362
      %v960 = vpack.c.bf16 %v371, %v368
      %v961 = vpack.c.bf16 %v377, %v374
      %v962 = vpack.c.bf16 %v957, %v380
      %s963 = scalar_lea.vmem %s1, 256
      %v964 = vld [vmem:[%s963] sm:$0xf]
      %v965 = vld [vmem:[%s963 + $0x4] sm:$0xf]
      %v966 = vld [vmem:[%s963 + $0x8] sm:$0xf]
      %v967 = vld [vmem:[%s963 + $0xc] sm:$0xf]
      %v968 = vld [vmem:[%s963 + $0x10] sm:$0xf]
      %v969 = vld [vmem:[%s963 + $0x14] sm:$0xf]
      %v970 = vld [vmem:[%s963 + $0x18] sm:$0xf]
      %v971 = vld [vmem:[%s963 + $0x1c] sm:$0xf]
      %v972 = vld [vmem:[%s963 + $0x20] sm:$0xf]
      %v973 = vld [vmem:[%s963 + $0x24] sm:$0xf]
      %v974 = vld [vmem:[%s963 + $0x28] sm:$0xf]
      %v975 = vld [vmem:[%s963 + $0x2c] sm:$0xf]
      %v976 = vld [vmem:[%s963 + $0x30] sm:$0xf]
      %v977 = vld [vmem:[%s963 + $0x34] sm:$0xf]
      %v978 = vld [vmem:[%s963 + $0x38] sm:$0xf]
      %v979 = vld [vmem:[%s963 + $0x3c] sm:$0xf]
      %v996 = vunpack.c.l.b16 %v964
      %v997 = vunpack.c.l.b16 %v965
      %v998 = vunpack.c.l.b16 %v966
      %v999 = vunpack.c.l.b16 %v967
      %v1000 = vunpack.c.l.b16 %v968
      %v1001 = vunpack.c.l.b16 %v969
      %v1002 = vunpack.c.l.b16 %v970
      %v1003 = vunpack.c.l.b16 %v971
      %v1004 = vunpack.c.l.b16 %v972
      %v1005 = vunpack.c.l.b16 %v973
      %v1006 = vunpack.c.l.b16 %v974
      %v1007 = vunpack.c.l.b16 %v975
      %v1008 = vunpack.c.l.b16 %v976
      %v1009 = vunpack.c.l.b16 %v977
      %v1010 = vunpack.c.l.b16 %v978
      %v1011 = vunpack.c.l.b16 %v979
      %v1012 = vpack.c.b16 %v997, %v996
      %v1013 = vpack.c.b16 %v999, %v998
      %v1014 = vpack.c.b16 %v1001, %v1000
      %v1015 = vpack.c.b16 %v1003, %v1002
      %v1016 = vpack.c.b16 %v1005, %v1004
      %v1017 = vpack.c.b16 %v1007, %v1006
      %v1018 = vpack.c.b16 %v1009, %v1008
      %v1019 = vpack.c.b16 %v1011, %v1010
      %1028 = vmatprep.subr.bf16.mxu0 0
      %1029 = vmatpush1.bf16.msra.mxu0 %v1019
      %1030 = vmatprep.subr.bf16.mxu0 0
      %1031 = vmatpush1.bf16.msra.mxu0 %v1018
      %1032 = vmatprep.subr.bf16.mxu0 0
      %1033 = vmatpush1.bf16.msra.mxu0 %v1017
      %1034 = vmatprep.subr.bf16.mxu0 0
      %1035 = vmatpush1.bf16.msra.mxu0 %v1016
      %1036 = vmatprep.subr.bf16.mxu0 0
      %1037 = vmatpush1.bf16.msra.mxu0 %v1015
      %1038 = vmatprep.subr.bf16.mxu0 0
      %1039 = vmatpush1.bf16.msra.mxu0 %v1014
      %1040 = vmatprep.subr.bf16.mxu0 0
      %1041 = vmatpush1.bf16.msra.mxu0 %v1013
      %1042 = vmatprep.subr.bf16.mxu0 0
      %1043 = vmatpush1.bf16.msra.mxu0 %v1012
      %1044 = vmatprep.subr.bf16.mxu0 0
      %1045 = vmatpush2.bf16.msra.mxu0 0
      %1046 = vmatprep.subr.bf16.mxu0 0
      %1047 = vmatpush2.bf16.msra.mxu0 0
      %1048 = vmatprep.subr.bf16.mxu0 0
      %1049 = vmatpush2.bf16.msra.mxu0 0
      %1050 = vmatprep.subr.bf16.mxu0 0
      %1051 = vmatpush2.bf16.msra.mxu0 0
      %1052 = vmatprep.subr.bf16.mxu0 0
      %1053 = vmatpush2.bf16.msra.mxu0 0
      %1054 = vmatprep.subr.bf16.mxu0 0
      %1055 = vmatpush2.bf16.msra.mxu0 0
      %1056 = vmatprep.subr.bf16.mxu0 0
      %1057 = vmatpush2.bf16.msra.mxu0 0
      %1058 = vmatprep.subr.bf16.mxu0 0
      %1059 = vmatpush2.bf16.msra.mxu0 0
      %1060 = vmatprep.mubr.bf16.mxu0 0
      %1061 = vmatmul.mubr.bf16.gmra.mxu0 %v959
      %v1062 = vpop.f32.mrf.mxu0
      %v1063 = vadd.f32 0.0, %v1062
      %v1064 = vpop.f32.mrf.mxu0
      %v1065 = vpop.f32.mrf.mxu0
      %v1066 = vadd.f32 0.0, %v1065
      %v1067 = vpop.f32.mrf.mxu0
      %1068 = vmatprep.mubr.bf16.mxu0 0
      %1069 = vmatmul.mubr.bf16.gmra.mxu0 %v960
      %v1070 = vpop.f32.mrf.mxu0
      %v1071 = vadd.f32 0.0, %v1070
      %v1072 = vpop.f32.mrf.mxu0
      %v1073 = vpop.f32.mrf.mxu0
      %v1074 = vadd.f32 0.0, %v1073
      %v1075 = vpop.f32.mrf.mxu0
      %1076 = vmatprep.mubr.bf16.mxu0 0
      %1077 = vmatmul.mubr.bf16.gmra.mxu0 %v961
      %v1078 = vpop.f32.mrf.mxu0
      %v1079 = vadd.f32 0.0, %v1078
      %v1080 = vpop.f32.mrf.mxu0
      %v1081 = vpop.f32.mrf.mxu0
      %v1082 = vadd.f32 0.0, %v1081
      %v1083 = vpop.f32.mrf.mxu0
      %1084 = vmatprep.mubr.bf16.mxu0 0
      %1085 = vmatmul.mubr.bf16.gmra.mxu0 %v962
      %v1086 = vpop.f32.mrf.mxu0
      %v1087 = vadd.f32 0.0, %v1086
      %v1088 = vpop.f32.mrf.mxu0
      %v1089 = vpop.f32.mrf.mxu0
      %v1090 = vadd.f32 0.0, %v1089
      %v1091 = vpop.f32.mrf.mxu0
      %1092 = vdwg.mxu0
      %v1093 = vadd.f32 %v945, %v1063
      %v1094 = vadd.f32 %v946, %v1066
      %v1095 = vadd.f32 %v947, %v1071
      %v1096 = vadd.f32 %v948, %v1074
      %v1097 = vadd.f32 %v949, %v1079
      %v1098 = vadd.f32 %v950, %v1082
      %v1099 = vadd.f32 %v951, %v1087
      %v1100 = vadd.f32 %v952, %v1090
      %v1101 = vrot.slane %v316, 2
      %v1102 = vrot.slane %v317, 2
      %v1103 = vsel %vm636, %v1101, %v1102
      %v1105 = vpack.c.bf16 %v645, %v642
      %v1106 = vpack.c.bf16 %v651, %v648
      %v1107 = vpack.c.bf16 %v657, %v654
      %v1108 = vpack.c.bf16 %v1103, %v660
      %s1109 = scalar_lea.vmem %s1, 320
      %v1110 = vld [vmem:[%s1109] sm:$0xf]
      %v1111 = vld [vmem:[%s1109 + $0x4] sm:$0xf]
      %v1112 = vld [vmem:[%s1109 + $0x8] sm:$0xf]
      %v1113 = vld [vmem:[%s1109 + $0xc] sm:$0xf]
      %v1114 = vld [vmem:[%s1109 + $0x10] sm:$0xf]
      %v1115 = vld [vmem:[%s1109 + $0x14] sm:$0xf]
      %v1116 = vld [vmem:[%s1109 + $0x18] sm:$0xf]
      %v1117 = vld [vmem:[%s1109 + $0x1c] sm:$0xf]
      %v1118 = vld [vmem:[%s1109 + $0x20] sm:$0xf]
      %v1119 = vld [vmem:[%s1109 + $0x24] sm:$0xf]
      %v1120 = vld [vmem:[%s1109 + $0x28] sm:$0xf]
      %v1121 = vld [vmem:[%s1109 + $0x2c] sm:$0xf]
      %v1122 = vld [vmem:[%s1109 + $0x30] sm:$0xf]
      %v1123 = vld [vmem:[%s1109 + $0x34] sm:$0xf]
      %v1124 = vld [vmem:[%s1109 + $0x38] sm:$0xf]
      %v1125 = vld [vmem:[%s1109 + $0x3c] sm:$0xf]
      %v1142 = vunpack.c.l.b16 %v1110
      %v1143 = vunpack.c.l.b16 %v1111
      %v1144 = vunpack.c.l.b16 %v1112
      %v1145 = vunpack.c.l.b16 %v1113
      %v1146 = vunpack.c.l.b16 %v1114
      %v1147 = vunpack.c.l.b16 %v1115
      %v1148 = vunpack.c.l.b16 %v1116
      %v1149 = vunpack.c.l.b16 %v1117
      %v1150 = vunpack.c.l.b16 %v1118
      %v1151 = vunpack.c.l.b16 %v1119
      %v1152 = vunpack.c.l.b16 %v1120
      %v1153 = vunpack.c.l.b16 %v1121
      %v1154 = vunpack.c.l.b16 %v1122
      %v1155 = vunpack.c.l.b16 %v1123
      %v1156 = vunpack.c.l.b16 %v1124
      %v1157 = vunpack.c.l.b16 %v1125
      %v1158 = vpack.c.b16 %v1143, %v1142
      %v1159 = vpack.c.b16 %v1145, %v1144
      %v1160 = vpack.c.b16 %v1147, %v1146
      %v1161 = vpack.c.b16 %v1149, %v1148
      %v1162 = vpack.c.b16 %v1151, %v1150
      %v1163 = vpack.c.b16 %v1153, %v1152
      %v1164 = vpack.c.b16 %v1155, %v1154
      %v1165 = vpack.c.b16 %v1157, %v1156
      %1174 = vmatprep.subr.bf16.mxu0 0
      %1175 = vmatpush1.bf16.msra.mxu0 %v1165
      %1176 = vmatprep.subr.bf16.mxu0 0
      %1177 = vmatpush1.bf16.msra.mxu0 %v1164
      %1178 = vmatprep.subr.bf16.mxu0 0
      %1179 = vmatpush1.bf16.msra.mxu0 %v1163
      %1180 = vmatprep.subr.bf16.mxu0 0
      %1181 = vmatpush1.bf16.msra.mxu0 %v1162
      %1182 = vmatprep.subr.bf16.mxu0 0
      %1183 = vmatpush1.bf16.msra.mxu0 %v1161
      %1184 = vmatprep.subr.bf16.mxu0 0
      %1185 = vmatpush1.bf16.msra.mxu0 %v1160
      %1186 = vmatprep.subr.bf16.mxu0 0
      %1187 = vmatpush1.bf16.msra.mxu0 %v1159
      %1188 = vmatprep.subr.bf16.mxu0 0
      %1189 = vmatpush1.bf16.msra.mxu0 %v1158
      %1190 = vmatprep.subr.bf16.mxu0 0
      %1191 = vmatpush2.bf16.msra.mxu0 0
      %1192 = vmatprep.subr.bf16.mxu0 0
      %1193 = vmatpush2.bf16.msra.mxu0 0
      %1194 = vmatprep.subr.bf16.mxu0 0
      %1195 = vmatpush2.bf16.msra.mxu0 0
      %1196 = vmatprep.subr.bf16.mxu0 0
      %1197 = vmatpush2.bf16.msra.mxu0 0
      %1198 = vmatprep.subr.bf16.mxu0 0
      %1199 = vmatpush2.bf16.msra.mxu0 0
      %1200 = vmatprep.subr.bf16.mxu0 0
      %1201 = vmatpush2.bf16.msra.mxu0 0
      %1202 = vmatprep.subr.bf16.mxu0 0
      %1203 = vmatpush2.bf16.msra.mxu0 0
      %1204 = vmatprep.subr.bf16.mxu0 0
      %1205 = vmatpush2.bf16.msra.mxu0 0
      %1206 = vmatprep.mubr.bf16.mxu0 0
      %1207 = vmatmul.mubr.bf16.gmra.mxu0 %v1105
      %v1208 = vpop.f32.mrf.mxu0
      %v1209 = vadd.f32 0.0, %v1208
      %v1210 = vpop.f32.mrf.mxu0
      %v1211 = vpop.f32.mrf.mxu0
      %v1212 = vadd.f32 0.0, %v1211
      %v1213 = vpop.f32.mrf.mxu0
      %1214 = vmatprep.mubr.bf16.mxu0 0
      %1215 = vmatmul.mubr.bf16.gmra.mxu0 %v1106
      %v1216 = vpop.f32.mrf.mxu0
      %v1217 = vadd.f32 0.0, %v1216
      %v1218 = vpop.f32.mrf.mxu0
      %v1219 = vpop.f32.mrf.mxu0
      %v1220 = vadd.f32 0.0, %v1219
      %v1221 = vpop.f32.mrf.mxu0
      %1222 = vmatprep.mubr.bf16.mxu0 0
      %1223 = vmatmul.mubr.bf16.gmra.mxu0 %v1107
      %v1224 = vpop.f32.mrf.mxu0
      %v1225 = vadd.f32 0.0, %v1224
      %v1226 = vpop.f32.mrf.mxu0
      %v1227 = vpop.f32.mrf.mxu0
      %v1228 = vadd.f32 0.0, %v1227
      %v1229 = vpop.f32.mrf.mxu0
      %1230 = vmatprep.mubr.bf16.mxu0 0
      %1231 = vmatmul.mubr.bf16.gmra.mxu0 %v1108
      %v1232 = vpop.f32.mrf.mxu0
      %v1233 = vadd.f32 0.0, %v1232
      %v1234 = vpop.f32.mrf.mxu0
      %v1235 = vpop.f32.mrf.mxu0
      %v1236 = vadd.f32 0.0, %v1235
      %v1237 = vpop.f32.mrf.mxu0
      %1238 = vdwg.mxu0
      %v1239 = vadd.f32 %v1093, %v1209
      %v1240 = vadd.f32 %v1094, %v1212
      %v1241 = vadd.f32 %v1095, %v1217
      %v1242 = vadd.f32 %v1096, %v1220
      %v1243 = vadd.f32 %v1097, %v1225
      %v1244 = vadd.f32 %v1098, %v1228
      %v1245 = vadd.f32 %v1099, %v1233
      %v1246 = vadd.f32 %v1100, %v1236
      %v1247 = vpack.c.bf16 %v318, %v316
      %s1248 = scalar_lea.vmem %s1, 384
      %v1249 = vld [vmem:[%s1248] sm:$0xf]
      %v1250 = vld [vmem:[%s1248 + $0x4] sm:$0xf]
      %v1251 = vld [vmem:[%s1248 + $0x8] sm:$0xf]
      %v1252 = vld [vmem:[%s1248 + $0xc] sm:$0xf]
      %v1253 = vld [vmem:[%s1248 + $0x10] sm:$0xf]
      %v1254 = vld [vmem:[%s1248 + $0x14] sm:$0xf]
      %v1255 = vld [vmem:[%s1248 + $0x18] sm:$0xf]
      %v1256 = vld [vmem:[%s1248 + $0x1c] sm:$0xf]
      %v1257 = vld [vmem:[%s1248 + $0x20] sm:$0xf]
      %v1258 = vld [vmem:[%s1248 + $0x24] sm:$0xf]
      %v1259 = vld [vmem:[%s1248 + $0x28] sm:$0xf]
      %v1260 = vld [vmem:[%s1248 + $0x2c] sm:$0xf]
      %v1261 = vld [vmem:[%s1248 + $0x30] sm:$0xf]
      %v1262 = vld [vmem:[%s1248 + $0x34] sm:$0xf]
      %v1263 = vld [vmem:[%s1248 + $0x38] sm:$0xf]
      %v1264 = vld [vmem:[%s1248 + $0x3c] sm:$0xf]
      %v1281 = vunpack.c.l.b16 %v1249
      %v1282 = vunpack.c.l.b16 %v1250
      %v1283 = vunpack.c.l.b16 %v1251
      %v1284 = vunpack.c.l.b16 %v1252
      %v1285 = vunpack.c.l.b16 %v1253
      %v1286 = vunpack.c.l.b16 %v1254
      %v1287 = vunpack.c.l.b16 %v1255
      %v1288 = vunpack.c.l.b16 %v1256
      %v1289 = vunpack.c.l.b16 %v1257
      %v1290 = vunpack.c.l.b16 %v1258
      %v1291 = vunpack.c.l.b16 %v1259
      %v1292 = vunpack.c.l.b16 %v1260
      %v1293 = vunpack.c.l.b16 %v1261
      %v1294 = vunpack.c.l.b16 %v1262
      %v1295 = vunpack.c.l.b16 %v1263
      %v1296 = vunpack.c.l.b16 %v1264
      %v1297 = vpack.c.b16 %v1282, %v1281
      %v1298 = vpack.c.b16 %v1284, %v1283
      %v1299 = vpack.c.b16 %v1286, %v1285
      %v1300 = vpack.c.b16 %v1288, %v1287
      %v1301 = vpack.c.b16 %v1290, %v1289
      %v1302 = vpack.c.b16 %v1292, %v1291
      %v1303 = vpack.c.b16 %v1294, %v1293
      %v1304 = vpack.c.b16 %v1296, %v1295
      %1313 = vmatprep.subr.bf16.mxu0 0
      %1314 = vmatpush1.bf16.msra.mxu0 %v1304
      %1315 = vmatprep.subr.bf16.mxu0 0
      %1316 = vmatpush1.bf16.msra.mxu0 %v1303
      %1317 = vmatprep.subr.bf16.mxu0 0
      %1318 = vmatpush1.bf16.msra.mxu0 %v1302
      %1319 = vmatprep.subr.bf16.mxu0 0
      %1320 = vmatpush1.bf16.msra.mxu0 %v1301
      %1321 = vmatprep.subr.bf16.mxu0 0
      %1322 = vmatpush1.bf16.msra.mxu0 %v1300
      %1323 = vmatprep.subr.bf16.mxu0 0
      %1324 = vmatpush1.bf16.msra.mxu0 %v1299
      %1325 = vmatprep.subr.bf16.mxu0 0
      %1326 = vmatpush1.bf16.msra.mxu0 %v1298
      %1327 = vmatprep.subr.bf16.mxu0 0
      %1328 = vmatpush1.bf16.msra.mxu0 %v1297
      %1329 = vmatprep.subr.bf16.mxu0 0
      %1330 = vmatpush2.bf16.msra.mxu0 0
      %1331 = vmatprep.subr.bf16.mxu0 0
      %1332 = vmatpush2.bf16.msra.mxu0 0
      %1333 = vmatprep.subr.bf16.mxu0 0
      %1334 = vmatpush2.bf16.msra.mxu0 0
      %1335 = vmatprep.subr.bf16.mxu0 0
      %1336 = vmatpush2.bf16.msra.mxu0 0
      %1337 = vmatprep.subr.bf16.mxu0 0
      %1338 = vmatpush2.bf16.msra.mxu0 0
      %1339 = vmatprep.subr.bf16.mxu0 0
      %1340 = vmatpush2.bf16.msra.mxu0 0
      %1341 = vmatprep.subr.bf16.mxu0 0
      %1342 = vmatpush2.bf16.msra.mxu0 0
      %1343 = vmatprep.subr.bf16.mxu0 0
      %1344 = vmatpush2.bf16.msra.mxu0 0
      %1345 = vmatprep.mubr.bf16.mxu0 0
      %1346 = vmatmul.mubr.bf16.gmra.mxu0 %v321
      %v1347 = vpop.f32.mrf.mxu0
      %v1348 = vadd.f32 0.0, %v1347
      %v1349 = vpop.f32.mrf.mxu0
      %v1350 = vpop.f32.mrf.mxu0
      %v1351 = vadd.f32 0.0, %v1350
      %v1352 = vpop.f32.mrf.mxu0
      %1353 = vmatprep.mubr.bf16.mxu0 0
      %1354 = vmatmul.mubr.bf16.gmra.mxu0 %v322
      %v1355 = vpop.f32.mrf.mxu0
      %v1356 = vadd.f32 0.0, %v1355
      %v1357 = vpop.f32.mrf.mxu0
      %v1358 = vpop.f32.mrf.mxu0
      %v1359 = vadd.f32 0.0, %v1358
      %v1360 = vpop.f32.mrf.mxu0
      %1361 = vmatprep.mubr.bf16.mxu0 0
      %1362 = vmatmul.mubr.bf16.gmra.mxu0 %v323
      %v1363 = vpop.f32.mrf.mxu0
      %v1364 = vadd.f32 0.0, %v1363
      %v1365 = vpop.f32.mrf.mxu0
      %v1366 = vpop.f32.mrf.mxu0
      %v1367 = vadd.f32 0.0, %v1366
      %v1368 = vpop.f32.mrf.mxu0
      %1369 = vmatprep.mubr.bf16.mxu0 0
      %1370 = vmatmul.mubr.bf16.gmra.mxu0 %v1247
      %v1371 = vpop.f32.mrf.mxu0
      %v1372 = vadd.f32 0.0, %v1371
      %v1373 = vpop.f32.mrf.mxu0
      %v1374 = vpop.f32.mrf.mxu0
      %v1375 = vadd.f32 0.0, %v1374
      %v1376 = vpop.f32.mrf.mxu0
      %1377 = vdwg.mxu0
      %v1378 = vadd.f32 %v1239, %v1348
      %v1379 = vadd.f32 %v1240, %v1351
      %v1380 = vadd.f32 %v1241, %v1356
      %v1381 = vadd.f32 %v1242, %v1359
      %v1382 = vadd.f32 %v1243, %v1364
      %v1383 = vadd.f32 %v1244, %v1367
      %v1384 = vadd.f32 %v1245, %v1372
      %v1385 = vadd.f32 %v1246, %v1375
      %v1388 = vrot.slane %v318, 1
      %v1389 = vrot.slane %v319, 1
      %v1390 = vsel %vm356, %v1388, %v1389
      %v1392 = vpack.c.bf16 %v1390, %v957
      %s1393 = scalar_lea.vmem %s1, 448
      %v1394 = vld [vmem:[%s1393] sm:$0xf]
      %v1395 = vld [vmem:[%s1393 + $0x4] sm:$0xf]
      %v1396 = vld [vmem:[%s1393 + $0x8] sm:$0xf]
      %v1397 = vld [vmem:[%s1393 + $0xc] sm:$0xf]
      %v1398 = vld [vmem:[%s1393 + $0x10] sm:$0xf]
      %v1399 = vld [vmem:[%s1393 + $0x14] sm:$0xf]
      %v1400 = vld [vmem:[%s1393 + $0x18] sm:$0xf]
      %v1401 = vld [vmem:[%s1393 + $0x1c] sm:$0xf]
      %v1402 = vld [vmem:[%s1393 + $0x20] sm:$0xf]
      %v1403 = vld [vmem:[%s1393 + $0x24] sm:$0xf]
      %v1404 = vld [vmem:[%s1393 + $0x28] sm:$0xf]
      %v1405 = vld [vmem:[%s1393 + $0x2c] sm:$0xf]
      %v1406 = vld [vmem:[%s1393 + $0x30] sm:$0xf]
      %v1407 = vld [vmem:[%s1393 + $0x34] sm:$0xf]
      %v1408 = vld [vmem:[%s1393 + $0x38] sm:$0xf]
      %v1409 = vld [vmem:[%s1393 + $0x3c] sm:$0xf]
      %v1426 = vunpack.c.l.b16 %v1394
      %v1427 = vunpack.c.l.b16 %v1395
      %v1428 = vunpack.c.l.b16 %v1396
      %v1429 = vunpack.c.l.b16 %v1397
      %v1430 = vunpack.c.l.b16 %v1398
      %v1431 = vunpack.c.l.b16 %v1399
      %v1432 = vunpack.c.l.b16 %v1400
      %v1433 = vunpack.c.l.b16 %v1401
      %v1434 = vunpack.c.l.b16 %v1402
      %v1435 = vunpack.c.l.b16 %v1403
      %v1436 = vunpack.c.l.b16 %v1404
      %v1437 = vunpack.c.l.b16 %v1405
      %v1438 = vunpack.c.l.b16 %v1406
      %v1439 = vunpack.c.l.b16 %v1407
      %v1440 = vunpack.c.l.b16 %v1408
      %v1441 = vunpack.c.l.b16 %v1409
      %v1442 = vpack.c.b16 %v1427, %v1426
      %v1443 = vpack.c.b16 %v1429, %v1428
      %v1444 = vpack.c.b16 %v1431, %v1430
      %v1445 = vpack.c.b16 %v1433, %v1432
      %v1446 = vpack.c.b16 %v1435, %v1434
      %v1447 = vpack.c.b16 %v1437, %v1436
      %v1448 = vpack.c.b16 %v1439, %v1438
      %v1449 = vpack.c.b16 %v1441, %v1440
      %1458 = vmatprep.subr.bf16.mxu0 0
      %1459 = vmatpush1.bf16.msra.mxu0 %v1449
      %1460 = vmatprep.subr.bf16.mxu0 0
      %1461 = vmatpush1.bf16.msra.mxu0 %v1448
      %1462 = vmatprep.subr.bf16.mxu0 0
      %1463 = vmatpush1.bf16.msra.mxu0 %v1447
      %1464 = vmatprep.subr.bf16.mxu0 0
      %1465 = vmatpush1.bf16.msra.mxu0 %v1446
      %1466 = vmatprep.subr.bf16.mxu0 0
      %1467 = vmatpush1.bf16.msra.mxu0 %v1445
      %1468 = vmatprep.subr.bf16.mxu0 0
      %1469 = vmatpush1.bf16.msra.mxu0 %v1444
      %1470 = vmatprep.subr.bf16.mxu0 0
      %1471 = vmatpush1.bf16.msra.mxu0 %v1443
      %1472 = vmatprep.subr.bf16.mxu0 0
      %1473 = vmatpush1.bf16.msra.mxu0 %v1442
      %1474 = vmatprep.subr.bf16.mxu0 0
      %1475 = vmatpush2.bf16.msra.mxu0 0
      %1476 = vmatprep.subr.bf16.mxu0 0
      %1477 = vmatpush2.bf16.msra.mxu0 0
      %1478 = vmatprep.subr.bf16.mxu0 0
      %1479 = vmatpush2.bf16.msra.mxu0 0
      %1480 = vmatprep.subr.bf16.mxu0 0
      %1481 = vmatpush2.bf16.msra.mxu0 0
      %1482 = vmatprep.subr.bf16.mxu0 0
      %1483 = vmatpush2.bf16.msra.mxu0 0
      %1484 = vmatprep.subr.bf16.mxu0 0
      %1485 = vmatpush2.bf16.msra.mxu0 0
      %1486 = vmatprep.subr.bf16.mxu0 0
      %1487 = vmatpush2.bf16.msra.mxu0 0
      %1488 = vmatprep.subr.bf16.mxu0 0
      %1489 = vmatpush2.bf16.msra.mxu0 0
      %1490 = vmatprep.mubr.bf16.mxu0 0
      %1491 = vmatmul.mubr.bf16.gmra.mxu0 %v390
      %v1492 = vpop.f32.mrf.mxu0
      %v1493 = vadd.f32 0.0, %v1492
      %v1494 = vpop.f32.mrf.mxu0
      %v1495 = vpop.f32.mrf.mxu0
      %v1496 = vadd.f32 0.0, %v1495
      %v1497 = vpop.f32.mrf.mxu0
      %1498 = vmatprep.mubr.bf16.mxu0 0
      %1499 = vmatmul.mubr.bf16.gmra.mxu0 %v391
      %v1500 = vpop.f32.mrf.mxu0
      %v1501 = vadd.f32 0.0, %v1500
      %v1502 = vpop.f32.mrf.mxu0
      %v1503 = vpop.f32.mrf.mxu0
      %v1504 = vadd.f32 0.0, %v1503
      %v1505 = vpop.f32.mrf.mxu0
      %1506 = vmatprep.mubr.bf16.mxu0 0
      %1507 = vmatmul.mubr.bf16.gmra.mxu0 %v392
      %v1508 = vpop.f32.mrf.mxu0
      %v1509 = vadd.f32 0.0, %v1508
      %v1510 = vpop.f32.mrf.mxu0
      %v1511 = vpop.f32.mrf.mxu0
      %v1512 = vadd.f32 0.0, %v1511
      %v1513 = vpop.f32.mrf.mxu0
      %1514 = vmatprep.mubr.bf16.mxu0 0
      %1515 = vmatmul.mubr.bf16.gmra.mxu0 %v1392
      %v1516 = vpop.f32.mrf.mxu0
      %v1517 = vadd.f32 0.0, %v1516
      %v1518 = vpop.f32.mrf.mxu0
      %v1519 = vpop.f32.mrf.mxu0
      %v1520 = vadd.f32 0.0, %v1519
      %v1521 = vpop.f32.mrf.mxu0
      %1522 = vdwg.mxu0
      %v1523 = vadd.f32 %v1378, %v1493
      %v1524 = vadd.f32 %v1379, %v1496
      %v1525 = vadd.f32 %v1380, %v1501
      %v1526 = vadd.f32 %v1381, %v1504
      %v1527 = vadd.f32 %v1382, %v1509
      %v1528 = vadd.f32 %v1383, %v1512
      %v1529 = vadd.f32 %v1384, %v1517
      %v1530 = vadd.f32 %v1385, %v1520
      %v1531 = vrot.slane %v318, 2
      %v1532 = vrot.slane %v319, 2
      %v1533 = vsel %vm636, %v1531, %v1532
      %v1535 = vpack.c.bf16 %v1533, %v1103
      %s1536 = scalar_lea.vmem %s1, 512
      %v1537 = vld [vmem:[%s1536] sm:$0xf]
      %v1538 = vld [vmem:[%s1536 + $0x4] sm:$0xf]
      %v1539 = vld [vmem:[%s1536 + $0x8] sm:$0xf]
      %v1540 = vld [vmem:[%s1536 + $0xc] sm:$0xf]
      %v1541 = vld [vmem:[%s1536 + $0x10] sm:$0xf]
      %v1542 = vld [vmem:[%s1536 + $0x14] sm:$0xf]
      %v1543 = vld [vmem:[%s1536 + $0x18] sm:$0xf]
      %v1544 = vld [vmem:[%s1536 + $0x1c] sm:$0xf]
      %v1545 = vld [vmem:[%s1536 + $0x20] sm:$0xf]
      %v1546 = vld [vmem:[%s1536 + $0x24] sm:$0xf]
      %v1547 = vld [vmem:[%s1536 + $0x28] sm:$0xf]
      %v1548 = vld [vmem:[%s1536 + $0x2c] sm:$0xf]
      %v1549 = vld [vmem:[%s1536 + $0x30] sm:$0xf]
      %v1550 = vld [vmem:[%s1536 + $0x34] sm:$0xf]
      %v1551 = vld [vmem:[%s1536 + $0x38] sm:$0xf]
      %v1552 = vld [vmem:[%s1536 + $0x3c] sm:$0xf]
      %v1569 = vunpack.c.l.b16 %v1537
      %v1570 = vunpack.c.l.b16 %v1538
      %v1571 = vunpack.c.l.b16 %v1539
      %v1572 = vunpack.c.l.b16 %v1540
      %v1573 = vunpack.c.l.b16 %v1541
      %v1574 = vunpack.c.l.b16 %v1542
      %v1575 = vunpack.c.l.b16 %v1543
      %v1576 = vunpack.c.l.b16 %v1544
      %v1577 = vunpack.c.l.b16 %v1545
      %v1578 = vunpack.c.l.b16 %v1546
      %v1579 = vunpack.c.l.b16 %v1547
      %v1580 = vunpack.c.l.b16 %v1548
      %v1581 = vunpack.c.l.b16 %v1549
      %v1582 = vunpack.c.l.b16 %v1550
      %v1583 = vunpack.c.l.b16 %v1551
      %v1584 = vunpack.c.l.b16 %v1552
      %v1585 = vpack.c.b16 %v1570, %v1569
      %v1586 = vpack.c.b16 %v1572, %v1571
      %v1587 = vpack.c.b16 %v1574, %v1573
      %v1588 = vpack.c.b16 %v1576, %v1575
      %v1589 = vpack.c.b16 %v1578, %v1577
      %v1590 = vpack.c.b16 %v1580, %v1579
      %v1591 = vpack.c.b16 %v1582, %v1581
      %v1592 = vpack.c.b16 %v1584, %v1583
      %1601 = vmatprep.subr.bf16.mxu0 0
      %1602 = vmatpush1.bf16.msra.mxu0 %v1592
      %1603 = vmatprep.subr.bf16.mxu0 0
      %1604 = vmatpush1.bf16.msra.mxu0 %v1591
      %1605 = vmatprep.subr.bf16.mxu0 0
      %1606 = vmatpush1.bf16.msra.mxu0 %v1590
      %1607 = vmatprep.subr.bf16.mxu0 0
      %1608 = vmatpush1.bf16.msra.mxu0 %v1589
      %1609 = vmatprep.subr.bf16.mxu0 0
      %1610 = vmatpush1.bf16.msra.mxu0 %v1588
      %1611 = vmatprep.subr.bf16.mxu0 0
      %1612 = vmatpush1.bf16.msra.mxu0 %v1587
      %1613 = vmatprep.subr.bf16.mxu0 0
      %1614 = vmatpush1.bf16.msra.mxu0 %v1586
      %1615 = vmatprep.subr.bf16.mxu0 0
      %1616 = vmatpush1.bf16.msra.mxu0 %v1585
      %1617 = vmatprep.subr.bf16.mxu0 0
      %1618 = vmatpush2.bf16.msra.mxu0 0
      %1619 = vmatprep.subr.bf16.mxu0 0
      %1620 = vmatpush2.bf16.msra.mxu0 0
      %1621 = vmatprep.subr.bf16.mxu0 0
      %1622 = vmatpush2.bf16.msra.mxu0 0
      %1623 = vmatprep.subr.bf16.mxu0 0
      %1624 = vmatpush2.bf16.msra.mxu0 0
      %1625 = vmatprep.subr.bf16.mxu0 0
      %1626 = vmatpush2.bf16.msra.mxu0 0
      %1627 = vmatprep.subr.bf16.mxu0 0
      %1628 = vmatpush2.bf16.msra.mxu0 0
      %1629 = vmatprep.subr.bf16.mxu0 0
      %1630 = vmatpush2.bf16.msra.mxu0 0
      %1631 = vmatprep.subr.bf16.mxu0 0
      %1632 = vmatpush2.bf16.msra.mxu0 0
      %1633 = vmatprep.mubr.bf16.mxu0 0
      %1634 = vmatmul.mubr.bf16.gmra.mxu0 %v670
      %v1635 = vpop.f32.mrf.mxu0
      %v1636 = vadd.f32 0.0, %v1635
      %v1637 = vpop.f32.mrf.mxu0
      %v1638 = vpop.f32.mrf.mxu0
      %v1639 = vadd.f32 0.0, %v1638
      %v1640 = vpop.f32.mrf.mxu0
      %1641 = vmatprep.mubr.bf16.mxu0 0
      %1642 = vmatmul.mubr.bf16.gmra.mxu0 %v671
      %v1643 = vpop.f32.mrf.mxu0
      %v1644 = vadd.f32 0.0, %v1643
      %v1645 = vpop.f32.mrf.mxu0
      %v1646 = vpop.f32.mrf.mxu0
      %v1647 = vadd.f32 0.0, %v1646
      %v1648 = vpop.f32.mrf.mxu0
      %1649 = vmatprep.mubr.bf16.mxu0 0
      %1650 = vmatmul.mubr.bf16.gmra.mxu0 %v672
      %v1651 = vpop.f32.mrf.mxu0
      %v1652 = vadd.f32 0.0, %v1651
      %v1653 = vpop.f32.mrf.mxu0
      %v1654 = vpop.f32.mrf.mxu0
      %v1655 = vadd.f32 0.0, %v1654
      %v1656 = vpop.f32.mrf.mxu0
      %1657 = vmatprep.mubr.bf16.mxu0 0
      %1658 = vmatmul.mubr.bf16.gmra.mxu0 %v1535
      %v1659 = vpop.f32.mrf.mxu0
      %v1660 = vadd.f32 0.0, %v1659
      %v1661 = vpop.f32.mrf.mxu0
      %v1662 = vpop.f32.mrf.mxu0
      %v1663 = vadd.f32 0.0, %v1662
      %v1664 = vpop.f32.mrf.mxu0
      %1665 = vdwg.mxu0
      %v1666 = vadd.f32 %v1523, %v1636
      %v1667 = vadd.f32 %v1524, %v1639
      %v1668 = vadd.f32 %v1525, %v1644
      %v1669 = vadd.f32 %v1526, %v1647
      %v1670 = vadd.f32 %v1527, %v1652
      %v1671 = vadd.f32 %v1528, %v1655
      %v1672 = vadd.f32 %v1529, %v1660
      %v1673 = vadd.f32 %v1530, %v1663
      %v1674 = vld [vmem:[%s2] sm:$0x1]
      %v1676 = vlaneseq
      %v1677 = vshrl.u32 %v1676, 7
      %v1678 = vsub.s32 0, %v1677
      %v1679 = vrot.slane %v1674, %v1678
      %v1681 = vmul.f32 %v1666, %v1679
      %v1682 = vmul.f32 %v1667, %v1679
      %v1683 = vmul.f32 %v1668, %v1679
      %v1684 = vmul.f32 %v1669, %v1679
      %v1685 = vmul.f32 %v1670, %v1679
      %v1686 = vmul.f32 %v1671, %v1679
      %v1687 = vmul.f32 %v1672, %v1679
      %v1688 = vmul.f32 %v1673, %v1679
      %v1689 = vld [vmem:[%s3] sm:$0x1]
      %v1691 = vlaneseq
      %v1692 = vshrl.u32 %v1691, 7
      %v1693 = vsub.s32 0, %v1692
      %v1694 = vrot.slane %v1689, %v1693
      %v1696 = vadd.f32 %v1681, %v1694
      %v1697 = vadd.f32 %v1682, %v1694
      %v1698 = vadd.f32 %v1683, %v1694
      %v1699 = vadd.f32 %v1684, %v1694
      %v1700 = vadd.f32 %v1685, %v1694
      %v1701 = vadd.f32 %v1686, %v1694
      %v1702 = vadd.f32 %v1687, %v1694
      %v1703 = vadd.f32 %v1688, %v1694
      %v1704 = vxor.u32 %v1696, 2147483648
      %v1705 = vxor.u32 %v1697, 2147483648
      %v1706 = vxor.u32 %v1698, 2147483648
      %v1707 = vxor.u32 %v1699, 2147483648
      %v1708 = vxor.u32 %v1700, 2147483648
      %v1709 = vxor.u32 %v1701, 2147483648
      %v1710 = vxor.u32 %v1702, 2147483648
      %v1711 = vxor.u32 %v1703, 2147483648
      %v1712 = vmul.f32 %v1704, 1.442695
      %v1713 = vpow.pop %v1712
      %v1714 = vmul.f32 %v1705, 1.442695
      %v1715 = vpow.pop %v1714
      %v1716 = vmul.f32 %v1706, 1.442695
      %v1717 = vpow.pop %v1716
      %v1718 = vmul.f32 %v1707, 1.442695
      %v1719 = vpow.pop %v1718
      %v1720 = vmul.f32 %v1708, 1.442695
      %v1721 = vpow.pop %v1720
      %v1722 = vmul.f32 %v1709, 1.442695
      %v1723 = vpow.pop %v1722
      %v1724 = vmul.f32 %v1710, 1.442695
      %v1725 = vpow.pop %v1724
      %v1726 = vmul.f32 %v1711, 1.442695
      %v1727 = vpow.pop %v1726
      %v1728 = vadd.f32 %v1713, 1.0
      %v1729 = vadd.f32 %v1715, 1.0
      %v1730 = vadd.f32 %v1717, 1.0
      %v1731 = vadd.f32 %v1719, 1.0
      %v1732 = vadd.f32 %v1721, 1.0
      %v1733 = vadd.f32 %v1723, 1.0
      %v1734 = vadd.f32 %v1725, 1.0
      %v1735 = vadd.f32 %v1727, 1.0
      %v1736 = vrcp.pop %v1728
      %v1737 = vmul.f32 1.0, %v1736
      %v1738 = vrcp.pop %v1729
      %v1739 = vmul.f32 1.0, %v1738
      %v1740 = vrcp.pop %v1730
      %v1741 = vmul.f32 1.0, %v1740
      %v1742 = vrcp.pop %v1731
      %v1743 = vmul.f32 1.0, %v1742
      %v1744 = vrcp.pop %v1732
      %v1745 = vmul.f32 1.0, %v1744
      %v1746 = vrcp.pop %v1733
      %v1747 = vmul.f32 1.0, %v1746
      %v1748 = vrcp.pop %v1734
      %v1749 = vmul.f32 1.0, %v1748
      %v1750 = vrcp.pop %v1735
      %v1751 = vmul.f32 1.0, %v1750
      %v1752 = vmul.f32 %v1696, %v1737
      %v1753 = vmul.f32 %v1697, %v1739
      %v1754 = vmul.f32 %v1698, %v1741
      %v1755 = vmul.f32 %v1699, %v1743
      %v1756 = vmul.f32 %v1700, %v1745
      %v1757 = vmul.f32 %v1701, %v1747
      %v1758 = vmul.f32 %v1702, %v1749
      %v1759 = vmul.f32 %v1703, %v1751
      %v1760 = vadd.f32 %v1752, %v362
      %v1761 = vadd.f32 %v1753, %v365
      %v1762 = vadd.f32 %v1754, %v368
      %v1763 = vadd.f32 %v1755, %v371
      %v1764 = vadd.f32 %v1756, %v374
      %v1765 = vadd.f32 %v1757, %v377
      %v1766 = vadd.f32 %v1758, %v380
      %v1767 = vadd.f32 %v1759, %v957
      %v1768 = vpack.c.bf16 %v1761, %v1760
      %v1769 = vpack.c.bf16 %v1763, %v1762
      %v1770 = vpack.c.bf16 %v1765, %v1764
      %v1771 = vpack.c.bf16 %v1767, %v1766
      %v1772 = vld [vmem:[%s4] sm:$0xf]
      %v1773 = vld [vmem:[%s4 + $0x4] sm:$0xf]
      %v1774 = vld [vmem:[%s4 + $0x8] sm:$0xf]
      %v1775 = vld [vmem:[%s4 + $0xc] sm:$0xf]
      %v1776 = vld [vmem:[%s4 + $0x10] sm:$0xf]
      %v1777 = vld [vmem:[%s4 + $0x14] sm:$0xf]
      %v1778 = vld [vmem:[%s4 + $0x18] sm:$0xf]
      %v1779 = vld [vmem:[%s4 + $0x1c] sm:$0xf]
      %v1780 = vld [vmem:[%s4 + $0x20] sm:$0xf]
      %v1781 = vld [vmem:[%s4 + $0x24] sm:$0xf]
      %v1782 = vld [vmem:[%s4 + $0x28] sm:$0xf]
      %v1783 = vld [vmem:[%s4 + $0x2c] sm:$0xf]
      %v1784 = vld [vmem:[%s4 + $0x30] sm:$0xf]
      %v1785 = vld [vmem:[%s4 + $0x34] sm:$0xf]
      %v1786 = vld [vmem:[%s4 + $0x38] sm:$0xf]
      %v1787 = vld [vmem:[%s4 + $0x3c] sm:$0xf]
      %v1804 = vunpack.c.l.b16 %v1772
      %v1805 = vunpack.c.l.b16 %v1773
      %v1806 = vunpack.c.l.b16 %v1774
      %v1807 = vunpack.c.l.b16 %v1775
      %v1808 = vunpack.c.l.b16 %v1776
      %v1809 = vunpack.c.l.b16 %v1777
      %v1810 = vunpack.c.l.b16 %v1778
      %v1811 = vunpack.c.l.b16 %v1779
      %v1812 = vunpack.c.l.b16 %v1780
      %v1813 = vunpack.c.l.b16 %v1781
      %v1814 = vunpack.c.l.b16 %v1782
      %v1815 = vunpack.c.l.b16 %v1783
      %v1816 = vunpack.c.l.b16 %v1784
      %v1817 = vunpack.c.l.b16 %v1785
      %v1818 = vunpack.c.l.b16 %v1786
      %v1819 = vunpack.c.l.b16 %v1787
      %v1820 = vpack.c.b16 %v1805, %v1804
      %v1821 = vpack.c.b16 %v1807, %v1806
      %v1822 = vpack.c.b16 %v1809, %v1808
      %v1823 = vpack.c.b16 %v1811, %v1810
      %v1824 = vpack.c.b16 %v1813, %v1812
      %v1825 = vpack.c.b16 %v1815, %v1814
      %v1826 = vpack.c.b16 %v1817, %v1816
      %v1827 = vpack.c.b16 %v1819, %v1818
      %1836 = vmatprep.subr.bf16.mxu0 0
      %1837 = vmatpush1.bf16.msra.mxu0 %v1827
      %1838 = vmatprep.subr.bf16.mxu0 0
      %1839 = vmatpush1.bf16.msra.mxu0 %v1826
      %1840 = vmatprep.subr.bf16.mxu0 0
      %1841 = vmatpush1.bf16.msra.mxu0 %v1825
      %1842 = vmatprep.subr.bf16.mxu0 0
      %1843 = vmatpush1.bf16.msra.mxu0 %v1824
      %1844 = vmatprep.subr.bf16.mxu0 0
      %1845 = vmatpush1.bf16.msra.mxu0 %v1823
      %1846 = vmatprep.subr.bf16.mxu0 0
      %1847 = vmatpush1.bf16.msra.mxu0 %v1822
      %1848 = vmatprep.subr.bf16.mxu0 0
      %1849 = vmatpush1.bf16.msra.mxu0 %v1821
      %1850 = vmatprep.subr.bf16.mxu0 0
      %1851 = vmatpush1.bf16.msra.mxu0 %v1820
      %1852 = vmatprep.subr.bf16.mxu0 0
      %1853 = vmatpush2.bf16.msra.mxu0 0
      %1854 = vmatprep.subr.bf16.mxu0 0
      %1855 = vmatpush2.bf16.msra.mxu0 0
      %1856 = vmatprep.subr.bf16.mxu0 0
      %1857 = vmatpush2.bf16.msra.mxu0 0
      %1858 = vmatprep.subr.bf16.mxu0 0
      %1859 = vmatpush2.bf16.msra.mxu0 0
      %1860 = vmatprep.subr.bf16.mxu0 0
      %1861 = vmatpush2.bf16.msra.mxu0 0
      %1862 = vmatprep.subr.bf16.mxu0 0
      %1863 = vmatpush2.bf16.msra.mxu0 0
      %1864 = vmatprep.subr.bf16.mxu0 0
      %1865 = vmatpush2.bf16.msra.mxu0 0
      %1866 = vmatprep.subr.bf16.mxu0 0
      %1867 = vmatpush2.bf16.msra.mxu0 0
      %1868 = vmatprep.mubr.bf16.mxu0 0
      %1869 = vmatmul.mubr.bf16.gmra.mxu0 %v1768
      %v1870 = vpop.f32.mrf.mxu0
      %v1871 = vadd.f32 0.0, %v1870
      %v1872 = vpop.f32.mrf.mxu0
      %v1873 = vpop.f32.mrf.mxu0
      %v1874 = vadd.f32 0.0, %v1873
      %v1875 = vpop.f32.mrf.mxu0
      %1876 = vmatprep.mubr.bf16.mxu0 0
      %1877 = vmatmul.mubr.bf16.gmra.mxu0 %v1769
      %v1878 = vpop.f32.mrf.mxu0
      %v1879 = vadd.f32 0.0, %v1878
      %v1880 = vpop.f32.mrf.mxu0
      %v1881 = vpop.f32.mrf.mxu0
      %v1882 = vadd.f32 0.0, %v1881
      %v1883 = vpop.f32.mrf.mxu0
      %1884 = vmatprep.mubr.bf16.mxu0 0
      %1885 = vmatmul.mubr.bf16.gmra.mxu0 %v1770
      %v1886 = vpop.f32.mrf.mxu0
      %v1887 = vadd.f32 0.0, %v1886
      %v1888 = vpop.f32.mrf.mxu0
      %v1889 = vpop.f32.mrf.mxu0
      %v1890 = vadd.f32 0.0, %v1889
      %v1891 = vpop.f32.mrf.mxu0
      %1892 = vmatprep.mubr.bf16.mxu0 0
      %1893 = vmatmul.mubr.bf16.gmra.mxu0 %v1771
      %v1894 = vpop.f32.mrf.mxu0
      %v1895 = vadd.f32 0.0, %v1894
      %v1896 = vpop.f32.mrf.mxu0
      %v1897 = vpop.f32.mrf.mxu0
      %v1898 = vadd.f32 0.0, %v1897
      %v1899 = vpop.f32.mrf.mxu0
      %1900 = vdwg.mxu0
      %v1901 = vld [vmem:[%s5] sm:$0x1]
      %v1903 = vlaneseq
      %v1904 = vshrl.u32 %v1903, 7
      %v1905 = vsub.s32 0, %v1904
      %v1906 = vrot.slane %v1901, %v1905
      %v1908 = vmul.f32 %v1871, %v1906
      %v1909 = vmul.f32 %v1874, %v1906
      %v1910 = vmul.f32 %v1879, %v1906
      %v1911 = vmul.f32 %v1882, %v1906
      %v1912 = vmul.f32 %v1887, %v1906
      %v1913 = vmul.f32 %v1890, %v1906
      %v1914 = vmul.f32 %v1895, %v1906
      %v1915 = vmul.f32 %v1898, %v1906
      %v1916 = vld [vmem:[%s6] sm:$0x1]
      %v1918 = vlaneseq
      %v1919 = vshrl.u32 %v1918, 7
      %v1920 = vsub.s32 0, %v1919
      %v1921 = vrot.slane %v1916, %v1920
      %v1923 = vadd.f32 %v1908, %v1921
      %v1924 = vadd.f32 %v1909, %v1921
      %v1925 = vadd.f32 %v1910, %v1921
      %v1926 = vadd.f32 %v1911, %v1921
      %v1927 = vadd.f32 %v1912, %v1921
      %v1928 = vadd.f32 %v1913, %v1921
      %v1929 = vadd.f32 %v1914, %v1921
      %v1930 = vadd.f32 %v1915, %v1921
      %v1931 = vxor.u32 %v1923, 2147483648
      %v1932 = vxor.u32 %v1924, 2147483648
      %v1933 = vxor.u32 %v1925, 2147483648
      %v1934 = vxor.u32 %v1926, 2147483648
      %v1935 = vxor.u32 %v1927, 2147483648
      %v1936 = vxor.u32 %v1928, 2147483648
      %v1937 = vxor.u32 %v1929, 2147483648
      %v1938 = vxor.u32 %v1930, 2147483648
      %v1939 = vmul.f32 %v1931, 1.442695
      %v1940 = vpow.pop %v1939
      %v1941 = vmul.f32 %v1932, 1.442695
      %v1942 = vpow.pop %v1941
      %v1943 = vmul.f32 %v1933, 1.442695
      %v1944 = vpow.pop %v1943
      %v1945 = vmul.f32 %v1934, 1.442695
      %v1946 = vpow.pop %v1945
      %v1947 = vmul.f32 %v1935, 1.442695
      %v1948 = vpow.pop %v1947
      %v1949 = vmul.f32 %v1936, 1.442695
      %v1950 = vpow.pop %v1949
      %v1951 = vmul.f32 %v1937, 1.442695
      %v1952 = vpow.pop %v1951
      %v1953 = vmul.f32 %v1938, 1.442695
      %v1954 = vpow.pop %v1953
      %v1955 = vadd.f32 %v1940, 1.0
      %v1956 = vadd.f32 %v1942, 1.0
      %v1957 = vadd.f32 %v1944, 1.0
      %v1958 = vadd.f32 %v1946, 1.0
      %v1959 = vadd.f32 %v1948, 1.0
      %v1960 = vadd.f32 %v1950, 1.0
      %v1961 = vadd.f32 %v1952, 1.0
      %v1962 = vadd.f32 %v1954, 1.0
      %v1963 = vrcp.pop %v1955
      %v1964 = vmul.f32 1.0, %v1963
      %v1965 = vrcp.pop %v1956
      %v1966 = vmul.f32 1.0, %v1965
      %v1967 = vrcp.pop %v1957
      %v1968 = vmul.f32 1.0, %v1967
      %v1969 = vrcp.pop %v1958
      %v1970 = vmul.f32 1.0, %v1969
      %v1971 = vrcp.pop %v1959
      %v1972 = vmul.f32 1.0, %v1971
      %v1973 = vrcp.pop %v1960
      %v1974 = vmul.f32 1.0, %v1973
      %v1975 = vrcp.pop %v1961
      %v1976 = vmul.f32 1.0, %v1975
      %v1977 = vrcp.pop %v1962
      %v1978 = vmul.f32 1.0, %v1977
      %v1979 = vmul.f32 %v1923, %v1964
      %v1980 = vmul.f32 %v1924, %v1966
      %v1981 = vmul.f32 %v1925, %v1968
      %v1982 = vmul.f32 %v1926, %v1970
      %v1983 = vmul.f32 %v1927, %v1972
      %v1984 = vmul.f32 %v1928, %v1974
      %v1985 = vmul.f32 %v1929, %v1976
      %v1986 = vmul.f32 %v1930, %v1978
      %v1987 = vpack.c.bf16 %v1980, %v1979
      %v1988 = vpack.c.bf16 %v1982, %v1981
      %v1989 = vpack.c.bf16 %v1984, %v1983
      %v1990 = vpack.c.bf16 %v1986, %v1985
      %v1995 = vunpack.c.l.b16 %v1987
      %v1996 = vunpack.c.h.b16 %v1987
      %v1997 = vunpack.c.l.b16 %v1988
      %v1998 = vunpack.c.h.b16 %v1988
      %v1999 = vunpack.c.l.b16 %v1989
      %v2000 = vunpack.c.h.b16 %v1989
      %v2001 = vunpack.c.l.b16 %v1990
      %v2002 = vunpack.c.h.b16 %v1990
      %v2003 = vpack.c.b16 %v1995, %v1995
      %v2004 = vpack.c.b16 %v1996, %v1996
      %v2005 = vpack.c.b16 %v1997, %v1997
      %v2006 = vpack.c.b16 %v1998, %v1998
      %v2007 = vpack.c.b16 %v1999, %v1999
      %v2008 = vpack.c.b16 %v2000, %v2000
      %v2009 = vpack.c.b16 %v2001, %v2001
      %v2010 = vpack.c.b16 %v2002, %v2002
      %2019 = vst [vmem:[%s278] sm:$0xf] %v2003
      %2020 = vst [vmem:[%s278 + $0x4] sm:$0xf] %v2004
      %2021 = vst [vmem:[%s278 + $0x8] sm:$0xf] %v2005
      %2022 = vst [vmem:[%s278 + $0xc] sm:$0xf] %v2006
      %2023 = vst [vmem:[%s278 + $0x10] sm:$0xf] %v2007
      %2024 = vst [vmem:[%s278 + $0x14] sm:$0xf] %v2008
      %2025 = vst [vmem:[%s278 + $0x18] sm:$0xf] %v2009
      %2026 = vst [vmem:[%s278 + $0x1c] sm:$0xf] %v2010
      %p2027 = scmp.lt.s32.totalorder %s18, 1
      %s2028 = scalar_select %p2027, %s18, 1
      %s2029 = smul.addr %s2028, 8
      %s2030 = smul.addr %s2029, 4
      %s2031 = scalar_lea.vmem %s7, %s2030
      // Predicated region
      $region49: #{efficientnet_forward.4} parent=47 // pred_check
        %p2032 = pneg %p188
      $region50: #{efficientnet_forward.4} parent=47 // pred_check_branch
        %2034 = sbr.rel (%p2032) target = $region52
      $region51: #{efficientnet_forward.4} parent=47 // pred_region
        _
      $region52: #{efficientnet_forward.4} parent=47 // pred_fallthru
        _
    $region48: #{efficientnet_forward.4} parent=5 // pred_fallthru
      _
    %p2035 = scmp.le.s32.totalorder 2, %s13
    // Predicated region
    $region53: #{efficientnet_forward.4} parent=5 // pred_check
      %p2036 = pneg %p2035
    $region54: #{efficientnet_forward.4} parent=5 // pred_check_branch
      %2038 = sbr.rel (%p2036) target = $region56
    $region55: #{efficientnet_forward.4} parent=5 // pred_region
      %s2039 = ssub.s32 %s13, 2
      // Predicated region
      $region57: #{efficientnet_forward.4} parent=55 // pred_check
        %p2040 = pneg %p194
      $region58: #{efficientnet_forward.4} parent=55 // pred_check_branch
        %2042 = sbr.rel (%p2040) target = $region60
      $region59: #{efficientnet_forward.4} parent=55 // pred_region
        %p2043 = scmp.lt.s32.totalorder %s19, 1
        %s2044 = scalar_select %p2043, %s19, 1
        %s2045 = smul.addr %s2044, 8
        %s2046 = smul.addr %s2045, 4
        %s2047 = scalar_lea.vmem %s7, %s2046
      $region60: #{efficientnet_forward.4} parent=55 // pred_fallthru
        _
    $region56: #{efficientnet_forward.4} parent=5 // pred_fallthru
      _
  $region6: #{efficientnet_forward.4} parent=0 // loop_footer
    %s17 = sadd.s32 1, %s13
  $region7: #{efficientnet_forward.4} parent=0 // loop_footer_branch
    %12 = sbr.rel target = $region3
  $region8: #{efficientnet_forward.4} parent=0 // loop_exit
    _

// kernel: efficientnet_forward.5
$region0: #{efficientnet_forward.5}
  #allocation0 [shape = 'u32[]', space=smem, size = 0x4, offset = 0x4, fixed_abs, tag = 'smem constant byte address 0x4 - core index']
  #allocation1 [shape = 'u32[144,128]{1,0:T(1,128)}', space=vmem, size = 0x12000, scoped, tag = 'internal scratch']
  %s0 = inlined_call_operand.vmem [shape: bf16[2,5,5,128], index: 0, kind: input, shape index: {}]
  %s1 = inlined_call_operand.vmem [shape: bf16[2,5,5,128], index: 1, kind: input, shape index: {}]
  %s2 = inlined_call_operand.vmem [shape: bf16[2,5,5,128], index: 2, kind: input, shape index: {}]
  %s3 = inlined_call_operand.vmem [shape: bf16[2,5,5,128], index: 3, kind: input, shape index: {}]
  %s4 = inlined_call_operand.vmem [shape: f32[9,128], index: 4, kind: input, shape index: {}]
  %s5 = inlined_call_operand.vmem [shape: f32[1,128], index: 5, kind: input, shape index: {}]
  %s6 = inlined_call_operand.vmem [shape: f32[1,128], index: 6, kind: input, shape index: {}]
  %s7 = inlined_call_operand.vmem [shape: bf16[128,128], index: 7, kind: input, shape index: {}]
  %s8 = inlined_call_operand.vmem [shape: f32[1,128], index: 8, kind: input, shape index: {}]
  %s9 = inlined_call_operand.vmem [shape: bf16[128,128], index: 9, kind: input, shape index: {}]
  %s10 = inlined_call_operand.vmem [shape: f32[1,128], index: 10, kind: input, shape index: {}]
  %s11 = inlined_call_operand.vmem [shape: bf16[128,128], index: 11, kind: input, shape index: {}]
  %s12 = inlined_call_operand.vmem [shape: f32[1,128], index: 12, kind: input, shape index: {}]
  %s13 = inlined_call_operand.vmem [shape: f32[1,128], index: 13, kind: input, shape index: {}]
  %s14 = inlined_call_operand.vmem [shape: bf16[128,128], index: 14, kind: input, shape index: {}]
  %s15 = inlined_call_operand.vmem [shape: f32[1,128], index: 15, kind: input, shape index: {}]
  %s16 = inlined_call_operand.vmem [shape: f32[1,128], index: 16, kind: input, shape index: {}]
  %s17 = inlined_call_operand.hbm [shape: f32[2,1,128], index: 17, kind: output, shape index: {}]
  %s18 = sld [smem:[#allocation0]]
  $region101: #{efficientnet_forward.5} parent=0
    _
  %s20 = ssub.s32 1, %s18
  %s21 = scalar_select 0, %s20, %s18
  $region1: #{efficientnet_forward.5} parent=0
    #allocation2 [shape = 'u8[1024]{0}', space=vmem, size = 0x400, scoped, tag = 'output window, operand 0']
    #allocation3 [shape = 's32[2]{0}', space=sflag, size = 0x8, scoped, tag = 'scoped memory for efficientnet_forward.5']
    %22 = vsyncpa [#allocation3], 0
    %s23 = scalar_lea.sflag [#allocation3], 1
    %24 = vsyncpa %s23, 0
    loop: start=0, step=1, limit=4
    $region2: #{efficientnet_forward.5} parent=1 // loop_pre_header
      _
    $region3: #{efficientnet_forward.5} parent=1 // loop_header
      %s26 = sphi 0, %s30
      %p27 = scmp.ge.s32.totalorder %s26, 4
      %s36 = sphi 0, %s38
      %s39 = sphi 0, %s36
      %s40 = sphi 0, %s39
      %s56 = sphi 0, %s40
      %s62 = sphi 0, %s64
      %s65 = sphi 0, %s62
      %s66 = sphi 0, %s65
      %s82 = sphi 0, %s66
      %s88 = sphi 0, %s90
      %s91 = sphi 0, %s88
      %s92 = sphi 0, %s91
      %s108 = sphi 0, %s92
      %s114 = sphi 0, %s116
      %s117 = sphi 0, %s114
      %s118 = sphi 0, %s117
      %s134 = sphi 0, %s118
      %s138 = sphi 0, %s138
      %s140 = sphi 0, %s138
      %s141 = sphi 0, %s140
      %s155 = sphi 0, %s141
      %s159 = sphi 0, %s159
      %s161 = sphi 0, %s159
      %s162 = sphi 0, %s161
      %s176 = sphi 0, %s162
      %s180 = sphi 0, %s180
      %s182 = sphi 0, %s180
      %s183 = sphi 0, %s182
      %s197 = sphi 0, %s183
      %s201 = sphi 0, %s201
      %s203 = sphi 0, %s201
      %s204 = sphi 0, %s203
      %s218 = sphi 0, %s204
      %s222 = sphi 0, %s222
      %s224 = sphi 0, %s222
      %s225 = sphi 0, %s224
      %s239 = sphi 0, %s225
      %s243 = sphi 0, %s243
      %s245 = sphi 0, %s243
      %s246 = sphi 0, %s245
      %s260 = sphi 0, %s246
      %s264 = sphi 0, %s264
      %s266 = sphi 0, %s264
      %s267 = sphi 0, %s266
      %s281 = sphi 0, %s267
      %s285 = sphi 0, %s285
      %s287 = sphi 0, %s285
      %s288 = sphi 0, %s287
      %s302 = sphi 0, %s288
      %s306 = sphi 0, %s306
      %s308 = sphi 0, %s306
      %s309 = sphi 0, %s308
      %s323 = sphi 0, %s309
      %s327 = sphi 0, %s327
      %s329 = sphi 0, %s327
      %s330 = sphi 0, %s329
      %s344 = sphi 0, %s330
      %s348 = sphi 0, %s348
      %s350 = sphi 0, %s348
      %s351 = sphi 0, %s350
      %s365 = sphi 0, %s351
      %s369 = sphi 0, %s369
      %s371 = sphi 0, %s369
      %s372 = sphi 0, %s371
      %s386 = sphi 0, %s372
      %s390 = sphi 0, %s390
      %s392 = sphi 0, %s390
      %s393 = sphi 0, %s392
      %s407 = sphi 0, %s393
      %s413 = sphi 0, %s415
      %s416 = sphi 0, %s413
      %s417 = sphi 0, %s416
      %s433 = sphi 0, %s417
    $region4: #{efficientnet_forward.5} parent=1 // loop_header_branch
      %29 = sbr.rel (%p27) target = $region8
    $region5: #{efficientnet_forward.5} parent=1 // loop_body
      %s31 = ssub.s32 %s26, 1
      %s32 = ssub.s32 %s26, 2
      %s33 = sadd.s32 %s26, 1
      %s34 = ssub.s32 %s26, %s33
      %p35 = scmp.eq.s32.totalorder %s34, 0
      %s37 = sadd.s32 %s36, 1
      %s38 = scalar_select %p35, %s36, %s37
      %p41 = pneg %p35
      %p42 = scmp.eq.s32.totalorder %s26, 1
      %p43 = por %p41, %p42
      %p44 = scmp.ne.s32.totalorder %s36, %s39
      %p45 = scmp.eq.s32.totalorder %s26, 0
      %p46 = por %p44, %p45
      %p47 = scmp.ne.s32.totalorder %s36, %s39
      %p48 = scmp.eq.s32.totalorder %s31, 1
      %p49 = por %p47, %p48
      %p50 = scmp.ne.s32.totalorder %s39, %s40
      %p51 = scmp.eq.s32.totalorder %s31, 0
      %p52 = por %p50, %p51
      %p53 = scmp.ne.s32.totalorder %s39, %s40
      %p54 = scmp.eq.s32.totalorder %s32, 1
      %p55 = por %p53, %p54
      %p57 = scmp.ne.s32.totalorder %s40, %s56
      %p58 = scmp.eq.s32.totalorder %s32, 0
      %p59 = por %p57, %p58
      %s60 = ssub.s32 %s26, %s33
      %p61 = scmp.eq.s32.totalorder %s60, 0
      %s63 = sadd.s32 %s62, 1
      %s64 = scalar_select %p61, %s62, %s63
      %p67 = pneg %p61
      %p68 = scmp.eq.s32.totalorder %s26, 1
      %p69 = por %p67, %p68
      %p70 = scmp.ne.s32.totalorder %s62, %s65
      %p71 = scmp.eq.s32.totalorder %s26, 0
      %p72 = por %p70, %p71
      %p73 = scmp.ne.s32.totalorder %s62, %s65
      %p74 = scmp.eq.s32.totalorder %s31, 1
      %p75 = por %p73, %p74
      %p76 = scmp.ne.s32.totalorder %s65, %s66
      %p77 = scmp.eq.s32.totalorder %s31, 0
      %p78 = por %p76, %p77
      %p79 = scmp.ne.s32.totalorder %s65, %s66
      %p80 = scmp.eq.s32.totalorder %s32, 1
      %p81 = por %p79, %p80
      %p83 = scmp.ne.s32.totalorder %s66, %s82
      %p84 = scmp.eq.s32.totalorder %s32, 0
      %p85 = por %p83, %p84
      %s86 = ssub.s32 %s26, %s33
      %p87 = scmp.eq.s32.totalorder %s86, 0
      %s89 = sadd.s32 %s88, 1
      %s90 = scalar_select %p87, %s88, %s89
      %p93 = pneg %p87
      %p94 = scmp.eq.s32.totalorder %s26, 1
      %p95 = por %p93, %p94
      %p96 = scmp.ne.s32.totalorder %s88, %s91
      %p97 = scmp.eq.s32.totalorder %s26, 0
      %p98 = por %p96, %p97
      %p99 = scmp.ne.s32.totalorder %s88, %s91
      %p100 = scmp.eq.s32.totalorder %s31, 1
      %p101 = por %p99, %p100
      %p102 = scmp.ne.s32.totalorder %s91, %s92
      %p103 = scmp.eq.s32.totalorder %s31, 0
      %p104 = por %p102, %p103
      %p105 = scmp.ne.s32.totalorder %s91, %s92
      %p106 = scmp.eq.s32.totalorder %s32, 1
      %p107 = por %p105, %p106
      %p109 = scmp.ne.s32.totalorder %s92, %s108
      %p110 = scmp.eq.s32.totalorder %s32, 0
      %p111 = por %p109, %p110
      %s112 = ssub.s32 %s26, %s33
      %p113 = scmp.eq.s32.totalorder %s112, 0
      %s115 = sadd.s32 %s114, 1
      %s116 = scalar_select %p113, %s114, %s115
      %p119 = pneg %p113
      %p120 = scmp.eq.s32.totalorder %s26, 1
      %p121 = por %p119, %p120
      %p122 = scmp.ne.s32.totalorder %s114, %s117
      %p123 = scmp.eq.s32.totalorder %s26, 0
      %p124 = por %p122, %p123
      %p125 = scmp.ne.s32.totalorder %s114, %s117
      %p126 = scmp.eq.s32.totalorder %s31, 1
      %p127 = por %p125, %p126
      %p128 = scmp.ne.s32.totalorder %s117, %s118
      %p129 = scmp.eq.s32.totalorder %s31, 0
      %p130 = por %p128, %p129
      %p131 = scmp.ne.s32.totalorder %s117, %s118
      %p132 = scmp.eq.s32.totalorder %s32, 1
      %p133 = por %p131, %p132
      %p135 = scmp.ne.s32.totalorder %s118, %s134
      %p136 = scmp.eq.s32.totalorder %s32, 0
      %p137 = por %p135, %p136
      %s139 = sadd.s32 %s138, 1
      %p142 = scmp.eq.s32.totalorder %s26, 1
      %p143 = scmp.ne.s32.totalorder %s138, %s140
      %p144 = scmp.eq.s32.totalorder %s26, 0
      %p145 = por %p143, %p144
      %p146 = scmp.ne.s32.totalorder %s138, %s140
      %p147 = scmp.eq.s32.totalorder %s31, 1
      %p148 = por %p146, %p147
      %p149 = scmp.ne.s32.totalorder %s140, %s141
      %p150 = scmp.eq.s32.totalorder %s31, 0
      %p151 = por %p149, %p150
      %p152 = scmp.ne.s32.totalorder %s140, %s141
      %p153 = scmp.eq.s32.totalorder %s32, 1
      %p154 = por %p152, %p153
      %p156 = scmp.ne.s32.totalorder %s141, %s155
      %p157 = scmp.eq.s32.totalorder %s32, 0
      %p158 = por %p156, %p157
      %s160 = sadd.s32 %s159, 1
      %p163 = scmp.eq.s32.totalorder %s26, 1
      %p164 = scmp.ne.s32.totalorder %s159, %s161
      %p165 = scmp.eq.s32.totalorder %s26, 0
      %p166 = por %p164, %p165
      %p167 = scmp.ne.s32.totalorder %s159, %s161
      %p168 = scmp.eq.s32.totalorder %s31, 1
      %p169 = por %p167, %p168
      %p170 = scmp.ne.s32.totalorder %s161, %s162
      %p171 = scmp.eq.s32.totalorder %s31, 0
      %p172 = por %p170, %p171
      %p173 = scmp.ne.s32.totalorder %s161, %s162
      %p174 = scmp.eq.s32.totalorder %s32, 1
      %p175 = por %p173, %p174
      %p177 = scmp.ne.s32.totalorder %s162, %s176
      %p178 = scmp.eq.s32.totalorder %s32, 0
      %p179 = por %p177, %p178
      %s181 = sadd.s32 %s180, 1
      %p184 = scmp.eq.s32.totalorder %s26, 1
      %p185 = scmp.ne.s32.totalorder %s180, %s182
      %p186 = scmp.eq.s32.totalorder %s26, 0
      %p187 = por %p185, %p186
      %p188 = scmp.ne.s32.totalorder %s180, %s182
      %p189 = scmp.eq.s32.totalorder %s31, 1
      %p190 = por %p188, %p189
      %p191 = scmp.ne.s32.totalorder %s182, %s183
      %p192 = scmp.eq.s32.totalorder %s31, 0
      %p193 = por %p191, %p192
      %p194 = scmp.ne.s32.totalorder %s182, %s183
      %p195 = scmp.eq.s32.totalorder %s32, 1
      %p196 = por %p194, %p195
      %p198 = scmp.ne.s32.totalorder %s183, %s197
      %p199 = scmp.eq.s32.totalorder %s32, 0
      %p200 = por %p198, %p199
      %s202 = sadd.s32 %s201, 1
      %p205 = scmp.eq.s32.totalorder %s26, 1
      %p206 = scmp.ne.s32.totalorder %s201, %s203
      %p207 = scmp.eq.s32.totalorder %s26, 0
      %p208 = por %p206, %p207
      %p209 = scmp.ne.s32.totalorder %s201, %s203
      %p210 = scmp.eq.s32.totalorder %s31, 1
      %p211 = por %p209, %p210
      %p212 = scmp.ne.s32.totalorder %s203, %s204
      %p213 = scmp.eq.s32.totalorder %s31, 0
      %p214 = por %p212, %p213
      %p215 = scmp.ne.s32.totalorder %s203, %s204
      %p216 = scmp.eq.s32.totalorder %s32, 1
      %p217 = por %p215, %p216
      %p219 = scmp.ne.s32.totalorder %s204, %s218
      %p220 = scmp.eq.s32.totalorder %s32, 0
      %p221 = por %p219, %p220
      %s223 = sadd.s32 %s222, 1
      %p226 = scmp.eq.s32.totalorder %s26, 1
      %p227 = scmp.ne.s32.totalorder %s222, %s224
      %p228 = scmp.eq.s32.totalorder %s26, 0
      %p229 = por %p227, %p228
      %p230 = scmp.ne.s32.totalorder %s222, %s224
      %p231 = scmp.eq.s32.totalorder %s31, 1
      %p232 = por %p230, %p231
      %p233 = scmp.ne.s32.totalorder %s224, %s225
      %p234 = scmp.eq.s32.totalorder %s31, 0
      %p235 = por %p233, %p234
      %p236 = scmp.ne.s32.totalorder %s224, %s225
      %p237 = scmp.eq.s32.totalorder %s32, 1
      %p238 = por %p236, %p237
      %p240 = scmp.ne.s32.totalorder %s225, %s239
      %p241 = scmp.eq.s32.totalorder %s32, 0
      %p242 = por %p240, %p241
      %s244 = sadd.s32 %s243, 1
      %p247 = scmp.eq.s32.totalorder %s26, 1
      %p248 = scmp.ne.s32.totalorder %s243, %s245
      %p249 = scmp.eq.s32.totalorder %s26, 0
      %p250 = por %p248, %p249
      %p251 = scmp.ne.s32.totalorder %s243, %s245
      %p252 = scmp.eq.s32.totalorder %s31, 1
      %p253 = por %p251, %p252
      %p254 = scmp.ne.s32.totalorder %s245, %s246
      %p255 = scmp.eq.s32.totalorder %s31, 0
      %p256 = por %p254, %p255
      %p257 = scmp.ne.s32.totalorder %s245, %s246
      %p258 = scmp.eq.s32.totalorder %s32, 1
      %p259 = por %p257, %p258
      %p261 = scmp.ne.s32.totalorder %s246, %s260
      %p262 = scmp.eq.s32.totalorder %s32, 0
      %p263 = por %p261, %p262
      %s265 = sadd.s32 %s264, 1
      %p268 = scmp.eq.s32.totalorder %s26, 1
      %p269 = scmp.ne.s32.totalorder %s264, %s266
      %p270 = scmp.eq.s32.totalorder %s26, 0
      %p271 = por %p269, %p270
      %p272 = scmp.ne.s32.totalorder %s264, %s266
      %p273 = scmp.eq.s32.totalorder %s31, 1
      %p274 = por %p272, %p273
      %p275 = scmp.ne.s32.totalorder %s266, %s267
      %p276 = scmp.eq.s32.totalorder %s31, 0
      %p277 = por %p275, %p276
      %p278 = scmp.ne.s32.totalorder %s266, %s267
      %p279 = scmp.eq.s32.totalorder %s32, 1
      %p280 = por %p278, %p279
      %p282 = scmp.ne.s32.totalorder %s267, %s281
      %p283 = scmp.eq.s32.totalorder %s32, 0
      %p284 = por %p282, %p283
      %s286 = sadd.s32 %s285, 1
      %p289 = scmp.eq.s32.totalorder %s26, 1
      %p290 = scmp.ne.s32.totalorder %s285, %s287
      %p291 = scmp.eq.s32.totalorder %s26, 0
      %p292 = por %p290, %p291
      %p293 = scmp.ne.s32.totalorder %s285, %s287
      %p294 = scmp.eq.s32.totalorder %s31, 1
      %p295 = por %p293, %p294
      %p296 = scmp.ne.s32.totalorder %s287, %s288
      %p297 = scmp.eq.s32.totalorder %s31, 0
      %p298 = por %p296, %p297
      %p299 = scmp.ne.s32.totalorder %s287, %s288
      %p300 = scmp.eq.s32.totalorder %s32, 1
      %p301 = por %p299, %p300
      %p303 = scmp.ne.s32.totalorder %s288, %s302
      %p304 = scmp.eq.s32.totalorder %s32, 0
      %p305 = por %p303, %p304
      %s307 = sadd.s32 %s306, 1
      %p310 = scmp.eq.s32.totalorder %s26, 1
      %p311 = scmp.ne.s32.totalorder %s306, %s308
      %p312 = scmp.eq.s32.totalorder %s26, 0
      %p313 = por %p311, %p312
      %p314 = scmp.ne.s32.totalorder %s306, %s308
      %p315 = scmp.eq.s32.totalorder %s31, 1
      %p316 = por %p314, %p315
      %p317 = scmp.ne.s32.totalorder %s308, %s309
      %p318 = scmp.eq.s32.totalorder %s31, 0
      %p319 = por %p317, %p318
      %p320 = scmp.ne.s32.totalorder %s308, %s309
      %p321 = scmp.eq.s32.totalorder %s32, 1
      %p322 = por %p320, %p321
      %p324 = scmp.ne.s32.totalorder %s309, %s323
      %p325 = scmp.eq.s32.totalorder %s32, 0
      %p326 = por %p324, %p325
      %s328 = sadd.s32 %s327, 1
      %p331 = scmp.eq.s32.totalorder %s26, 1
      %p332 = scmp.ne.s32.totalorder %s327, %s329
      %p333 = scmp.eq.s32.totalorder %s26, 0
      %p334 = por %p332, %p333
      %p335 = scmp.ne.s32.totalorder %s327, %s329
      %p336 = scmp.eq.s32.totalorder %s31, 1
      %p337 = por %p335, %p336
      %p338 = scmp.ne.s32.totalorder %s329, %s330
      %p339 = scmp.eq.s32.totalorder %s31, 0
      %p340 = por %p338, %p339
      %p341 = scmp.ne.s32.totalorder %s329, %s330
      %p342 = scmp.eq.s32.totalorder %s32, 1
      %p343 = por %p341, %p342
      %p345 = scmp.ne.s32.totalorder %s330, %s344
      %p346 = scmp.eq.s32.totalorder %s32, 0
      %p347 = por %p345, %p346
      %s349 = sadd.s32 %s348, 1
      %p352 = scmp.eq.s32.totalorder %s26, 1
      %p353 = scmp.ne.s32.totalorder %s348, %s350
      %p354 = scmp.eq.s32.totalorder %s26, 0
      %p355 = por %p353, %p354
      %p356 = scmp.ne.s32.totalorder %s348, %s350
      %p357 = scmp.eq.s32.totalorder %s31, 1
      %p358 = por %p356, %p357
      %p359 = scmp.ne.s32.totalorder %s350, %s351
      %p360 = scmp.eq.s32.totalorder %s31, 0
      %p361 = por %p359, %p360
      %p362 = scmp.ne.s32.totalorder %s350, %s351
      %p363 = scmp.eq.s32.totalorder %s32, 1
      %p364 = por %p362, %p363
      %p366 = scmp.ne.s32.totalorder %s351, %s365
      %p367 = scmp.eq.s32.totalorder %s32, 0
      %p368 = por %p366, %p367
      %s370 = sadd.s32 %s369, 1
      %p373 = scmp.eq.s32.totalorder %s26, 1
      %p374 = scmp.ne.s32.totalorder %s369, %s371
      %p375 = scmp.eq.s32.totalorder %s26, 0
      %p376 = por %p374, %p375
      %p377 = scmp.ne.s32.totalorder %s369, %s371
      %p378 = scmp.eq.s32.totalorder %s31, 1
      %p379 = por %p377, %p378
      %p380 = scmp.ne.s32.totalorder %s371, %s372
      %p381 = scmp.eq.s32.totalorder %s31, 0
      %p382 = por %p380, %p381
      %p383 = scmp.ne.s32.totalorder %s371, %s372
      %p384 = scmp.eq.s32.totalorder %s32, 1
      %p385 = por %p383, %p384
      %p387 = scmp.ne.s32.totalorder %s372, %s386
      %p388 = scmp.eq.s32.totalorder %s32, 0
      %p389 = por %p387, %p388
      %s391 = sadd.s32 %s390, 1
      %p394 = scmp.eq.s32.totalorder %s26, 1
      %p395 = scmp.ne.s32.totalorder %s390, %s392
      %p396 = scmp.eq.s32.totalorder %s26, 0
      %p397 = por %p395, %p396
      %p398 = scmp.ne.s32.totalorder %s390, %s392
      %p399 = scmp.eq.s32.totalorder %s31, 1
      %p400 = por %p398, %p399
      %p401 = scmp.ne.s32.totalorder %s392, %s393
      %p402 = scmp.eq.s32.totalorder %s31, 0
      %p403 = por %p401, %p402
      %p404 = scmp.ne.s32.totalorder %s392, %s393
      %p405 = scmp.eq.s32.totalorder %s32, 1
      %p406 = por %p404, %p405
      %p408 = scmp.ne.s32.totalorder %s393, %s407
      %p409 = scmp.eq.s32.totalorder %s32, 0
      %p410 = por %p408, %p409
      %s411 = ssub.s32 %s26, %s33
      %p412 = scmp.eq.s32.totalorder %s411, 0
      %s414 = sadd.s32 %s413, 1
      %s415 = scalar_select %p412, %s413, %s414
      %p418 = pneg %p412
      %p419 = scmp.eq.s32.totalorder %s26, 1
      %p420 = por %p418, %p419
      %p421 = scmp.ne.s32.totalorder %s413, %s416
      %p422 = scmp.eq.s32.totalorder %s26, 0
      %p423 = por %p421, %p422
      %p424 = scmp.ne.s32.totalorder %s413, %s416
      %p425 = scmp.eq.s32.totalorder %s31, 1
      %p426 = por %p424, %p425
      %p427 = scmp.ne.s32.totalorder %s416, %s417
      %p428 = scmp.eq.s32.totalorder %s31, 0
      %p429 = por %p427, %p428
      %p430 = scmp.ne.s32.totalorder %s416, %s417
      %p431 = scmp.eq.s32.totalorder %s32, 1
      %p432 = por %p430, %p431
      %p434 = scmp.ne.s32.totalorder %s417, %s433
      %p435 = scmp.eq.s32.totalorder %s32, 0
      %p436 = por %p434, %p435
      %p437 = scmp.le.s32.totalorder 1, %s26
      %p438 = scmp.lt.s32.totalorder %s26, 3
      %p439 = pnand %p437, %p438
      %p440 = pneg %p439
      // Predicated region
      $region9: #{efficientnet_forward.5} parent=5 // pred_check
        _
      $region10: #{efficientnet_forward.5} parent=5 // pred_check_branch
        %442 = sbr.rel (%p439) target = $region12
      $region11: #{efficientnet_forward.5} parent=5 // pred_region
        %s443 = ssub.s32 %s26, 1
        // Predicated region
        $region13: #{efficientnet_forward.5} parent=11 // pred_check
          %p444 = pneg %p151
        $region14: #{efficientnet_forward.5} parent=11 // pred_check_branch
          %446 = sbr.rel (%p444) target = $region16
        $region15: #{efficientnet_forward.5} parent=11 // pred_region
          _
        $region16: #{efficientnet_forward.5} parent=11 // pred_fallthru
          _
        // Predicated region
        $region17: #{efficientnet_forward.5} parent=11 // pred_check
          %p447 = pneg %p172
        $region18: #{efficientnet_forward.5} parent=11 // pred_check_branch
          %449 = sbr.rel (%p447) target = $region20
        $region19: #{efficientnet_forward.5} parent=11 // pred_region
          _
        $region20: #{efficientnet_forward.5} parent=11 // pred_fallthru
          _
        // Predicated region
        $region21: #{efficientnet_forward.5} parent=11 // pred_check
          %p450 = pneg %p193
        $region22: #{efficientnet_forward.5} parent=11 // pred_check_branch
          %452 = sbr.rel (%p450) target = $region24
        $region23: #{efficientnet_forward.5} parent=11 // pred_region
          _
        $region24: #{efficientnet_forward.5} parent=11 // pred_fallthru
          _
        // Predicated region
        $region25: #{efficientnet_forward.5} parent=11 // pred_check
          %p453 = pneg %p214
        $region26: #{efficientnet_forward.5} parent=11 // pred_check_branch
          %455 = sbr.rel (%p453) target = $region28
        $region27: #{efficientnet_forward.5} parent=11 // pred_region
          _
        $region28: #{efficientnet_forward.5} parent=11 // pred_fallthru
          _
        // Predicated region
        $region29: #{efficientnet_forward.5} parent=11 // pred_check
          %p456 = pneg %p235
        $region30: #{efficientnet_forward.5} parent=11 // pred_check_branch
          %458 = sbr.rel (%p456) target = $region32
        $region31: #{efficientnet_forward.5} parent=11 // pred_region
          _
        $region32: #{efficientnet_forward.5} parent=11 // pred_fallthru
          _
        // Predicated region
        $region33: #{efficientnet_forward.5} parent=11 // pred_check
          %p459 = pneg %p256
        $region34: #{efficientnet_forward.5} parent=11 // pred_check_branch
          %461 = sbr.rel (%p459) target = $region36
        $region35: #{efficientnet_forward.5} parent=11 // pred_region
          _
        $region36: #{efficientnet_forward.5} parent=11 // pred_fallthru
          _
        // Predicated region
        $region37: #{efficientnet_forward.5} parent=11 // pred_check
          %p462 = pneg %p277
        $region38: #{efficientnet_forward.5} parent=11 // pred_check_branch
          %464 = sbr.rel (%p462) target = $region40
        $region39: #{efficientnet_forward.5} parent=11 // pred_region
          _
        $region40: #{efficientnet_forward.5} parent=11 // pred_fallthru
          _
        // Predicated region
        $region41: #{efficientnet_forward.5} parent=11 // pred_check
          %p465 = pneg %p298
        $region42: #{efficientnet_forward.5} parent=11 // pred_check_branch
          %467 = sbr.rel (%p465) target = $region44
        $region43: #{efficientnet_forward.5} parent=11 // pred_region
          _
        $region44: #{efficientnet_forward.5} parent=11 // pred_fallthru
          _
        // Predicated region
        $region45: #{efficientnet_forward.5} parent=11 // pred_check
          %p468 = pneg %p319
        $region46: #{efficientnet_forward.5} parent=11 // pred_check_branch
          %470 = sbr.rel (%p468) target = $region48
        $region47: #{efficientnet_forward.5} parent=11 // pred_region
          _
        $region48: #{efficientnet_forward.5} parent=11 // pred_fallthru
          _
        // Predicated region
        $region49: #{efficientnet_forward.5} parent=11 // pred_check
          %p471 = pneg %p340
        $region50: #{efficientnet_forward.5} parent=11 // pred_check_branch
          %473 = sbr.rel (%p471) target = $region52
        $region51: #{efficientnet_forward.5} parent=11 // pred_region
          _
        $region52: #{efficientnet_forward.5} parent=11 // pred_fallthru
          _
        // Predicated region
        $region53: #{efficientnet_forward.5} parent=11 // pred_check
          %p474 = pneg %p361
        $region54: #{efficientnet_forward.5} parent=11 // pred_check_branch
          %476 = sbr.rel (%p474) target = $region56
        $region55: #{efficientnet_forward.5} parent=11 // pred_region
          _
        $region56: #{efficientnet_forward.5} parent=11 // pred_fallthru
          _
        // Predicated region
        $region57: #{efficientnet_forward.5} parent=11 // pred_check
          %p477 = pneg %p382
        $region58: #{efficientnet_forward.5} parent=11 // pred_check_branch
          %479 = sbr.rel (%p477) target = $region60
        $region59: #{efficientnet_forward.5} parent=11 // pred_region
          _
        $region60: #{efficientnet_forward.5} parent=11 // pred_fallthru
          _
        // Predicated region
        $region61: #{efficientnet_forward.5} parent=11 // pred_check
          %p480 = pneg %p403
        $region62: #{efficientnet_forward.5} parent=11 // pred_check_branch
          %482 = sbr.rel (%p480) target = $region64
        $region63: #{efficientnet_forward.5} parent=11 // pred_region
          _
        $region64: #{efficientnet_forward.5} parent=11 // pred_fallthru
          _
      $region12: #{efficientnet_forward.5} parent=5 // pred_fallthru
        _
      %p483 = scmp.lt.s32.totalorder %s26, 2
      // Predicated region
      $region65: #{efficientnet_forward.5} parent=5 // pred_check
        %p484 = pneg %p483
      $region66: #{efficientnet_forward.5} parent=5 // pred_check_branch
        %486 = sbr.rel (%p484) target = $region68
      $region67: #{efficientnet_forward.5} parent=5 // pred_region
        // Predicated region
        $region69: #{efficientnet_forward.5} parent=67 // pred_check
          %p487 = pneg %p46
        $region70: #{efficientnet_forward.5} parent=67 // pred_check_branch
          %489 = sbr.rel (%p487) target = $region72
        $region71: #{efficientnet_forward.5} parent=67 // pred_region
          %p490 = scmp.lt.s32.totalorder %s26, 1
          %s491 = scalar_select %p490, %s26, 1
          %s492 = smul.addr %s491, 5
          %s493 = smul.addr %s492, 4
          %s494 = scalar_lea.vmem %s0, %s493
        $region72: #{efficientnet_forward.5} parent=67 // pred_fallthru
          _
        // Predicated region
        $region73: #{efficientnet_forward.5} parent=67 // pred_check
          %p495 = pneg %p72
        $region74: #{efficientnet_forward.5} parent=67 // pred_check_branch
          %497 = sbr.rel (%p495) target = $region76
        $region75: #{efficientnet_forward.5} parent=67 // pred_region
          %p498 = scmp.lt.s32.totalorder %s26, 1
          %s499 = scalar_select %p498, %s26, 1
          %s500 = smul.addr %s499, 5
          %s501 = smul.addr %s500, 4
          %s502 = scalar_lea.vmem %s1, %s501
        $region76: #{efficientnet_forward.5} parent=67 // pred_fallthru
          _
        // Predicated region
        $region77: #{efficientnet_forward.5} parent=67 // pred_check
          %p503 = pneg %p98
        $region78: #{efficientnet_forward.5} parent=67 // pred_check_branch
          %505 = sbr.rel (%p503) target = $region80
        $region79: #{efficientnet_forward.5} parent=67 // pred_region
          %p506 = scmp.lt.s32.totalorder %s26, 1
          %s507 = scalar_select %p506, %s26, 1
          %s508 = smul.addr %s507, 5
          %s509 = smul.addr %s508, 4
          %s510 = scalar_lea.vmem %s2, %s509
        $region80: #{efficientnet_forward.5} parent=67 // pred_fallthru
          _
        // Predicated region
        $region81: #{efficientnet_forward.5} parent=67 // pred_check
          %p511 = pneg %p124
        $region82: #{efficientnet_forward.5} parent=67 // pred_check_branch
          %513 = sbr.rel (%p511) target = $region84
        $region83: #{efficientnet_forward.5} parent=67 // pred_region
          %p514 = scmp.lt.s32.totalorder %s26, 1
          %s515 = scalar_select %p514, %s26, 1
          %s516 = smul.addr %s515, 5
          %s517 = smul.addr %s516, 4
          %s518 = scalar_lea.vmem %s3, %s517
        $region84: #{efficientnet_forward.5} parent=67 // pred_fallthru
          _
      $region68: #{efficientnet_forward.5} parent=5 // pred_fallthru
        _
      %p519 = scmp.le.s32.totalorder 1, %s26
      %p520 = scmp.lt.s32.totalorder %s26, 3
      %p521 = pnand %p519, %p520
      %p522 = pneg %p521
      // Predicated region
      $region85: #{efficientnet_forward.5} parent=5 // pred_check
        _
      $region86: #{efficientnet_forward.5} parent=5 // pred_check_branch
        %524 = sbr.rel (%p521) target = $region88
      $region87: #{efficientnet_forward.5} parent=5 // pred_region
        %s525 = ssub.s32 %s26, 1
        %p526 = scmp.lt.s32.totalorder %s31, 1
        %s527 = scalar_select %p526, %s31, 1
        %s528 = smul.addr %s527, 5
        %s529 = smul.addr %s528, 4
        %s530 = scalar_lea.vmem %s0, %s529
        %p531 = pneg %p52
        %p532 = pneg %p49
        %p533 = scmp.lt.s32.totalorder %s31, 1
        %s534 = scalar_select %p533, %s31, 1
        %s535 = smul.addr %s534, 5
        %s536 = smul.addr %s535, 4
        %s537 = scalar_lea.vmem %s1, %s536
        %p538 = pneg %p78
        %p539 = pneg %p75
        %p540 = scmp.lt.s32.totalorder %s31, 1
        %s541 = scalar_select %p540, %s31, 1
        %s542 = smul.addr %s541, 5
        %s543 = smul.addr %s542, 4
        %s544 = scalar_lea.vmem %s2, %s543
        %p545 = pneg %p104
        %p546 = pneg %p101
        %p547 = scmp.lt.s32.totalorder %s31, 1
        %s548 = scalar_select %p547, %s31, 1
        %s549 = smul.addr %s548, 5
        %s550 = smul.addr %s549, 4
        %s551 = scalar_lea.vmem %s3, %s550
        %p552 = pneg %p130
        %p553 = pneg %p127
        %p554 = pneg %p151
        %p555 = pneg %p148
        %p556 = pneg %p172
        %p557 = pneg %p169
        %p558 = pneg %p193
        %p559 = pneg %p190
        %p560 = pneg %p214
        %p561 = pneg %p211
        %p562 = pneg %p235
        %p563 = pneg %p232
        %p564 = pneg %p256
        %p565 = pneg %p253
        %p566 = pneg %p277
        %p567 = pneg %p274
        %p568 = pneg %p298
        %p569 = pneg %p295
        %p570 = pneg %p319
        %p571 = pneg %p316
        %p572 = pneg %p340
        %p573 = pneg %p337
        %p574 = pneg %p361
        %p575 = pneg %p358
        %p576 = pneg %p382
        %p577 = pneg %p379
        %p578 = pneg %p403
        %p579 = pneg %p400
        %p580 = pneg %p429
        %p581 = pneg %p426
        %s582 = sand.u32 %s416, 1
        %s583 = scalar_lea.sflag [#allocation3], %s582
        %s584 = sand.u32 %s416, 1
        %s585 = scalar_lea.vmem [#allocation2], %s584
        %p586 = scmp.lt.s32.totalorder %s31, 1
        %s587 = scalar_select %p586, %s31, 1
        %s588 = smul.addr %s587, 5
        %s589 = smul.addr %s588, 4
        %s590 = scalar_lea.vmem %s0, %s589
        %p591 = scmp.lt.s32.totalorder %s31, 1
        %s592 = scalar_select %p591, %s31, 1
        %s593 = smul.addr %s592, 5
        %s594 = smul.addr %s593, 4
        %s595 = scalar_lea.vmem %s1, %s594
        %p596 = scmp.lt.s32.totalorder %s31, 1
        %s597 = scalar_select %p596, %s31, 1
        %s598 = smul.addr %s597, 5
        %s599 = smul.addr %s598, 4
        %s600 = scalar_lea.vmem %s2, %s599
        %p601 = scmp.lt.s32.totalorder %s31, 1
        %s602 = scalar_select %p601, %s31, 1
        %s603 = smul.addr %s602, 5
        %s604 = smul.addr %s603, 4
        %s605 = scalar_lea.vmem %s3, %s604
        %v607 = vld [vmem:[%s590] sm:$0x7]
        %v608 = vld [vmem:[%s590 + $0x4] sm:$0x7]
        %v609 = vld [vmem:[%s590 + $0x8] sm:$0x7]
        %v610 = vld [vmem:[%s590 + $0xc] sm:$0x7]
        %v611 = vld [vmem:[%s590 + $0x10] sm:$0x7]
        %v612 = vunpack.c.l.bf16 %v607
        %v613 = vunpack.c.l.bf16 %v608
        %v614 = vunpack.c.l.bf16 %v609
        %v615 = vunpack.c.l.bf16 %v610
        %v616 = vunpack.c.l.bf16 %v611
        %v617 = vld [vmem:[%s595] sm:$0x7]
        %v618 = vld [vmem:[%s595 + $0x4] sm:$0x7]
        %v619 = vld [vmem:[%s595 + $0x8] sm:$0x7]
        %v620 = vld [vmem:[%s595 + $0xc] sm:$0x7]
        %v621 = vld [vmem:[%s595 + $0x10] sm:$0x7]
        %v622 = vunpack.c.l.bf16 %v617
        %v623 = vunpack.c.l.bf16 %v618
        %v624 = vunpack.c.l.bf16 %v619
        %v625 = vunpack.c.l.bf16 %v620
        %v626 = vunpack.c.l.bf16 %v621
        %v627 = vld [vmem:[%s600] sm:$0x7]
        %v628 = vld [vmem:[%s600 + $0x4] sm:$0x7]
        %v629 = vld [vmem:[%s600 + $0x8] sm:$0x7]
        %v630 = vld [vmem:[%s600 + $0xc] sm:$0x7]
        %v631 = vunpack.c.l.bf16 %v627
        %v632 = vunpack.c.l.bf16 %v628
        %v633 = vunpack.c.l.bf16 %v629
        %v634 = vunpack.c.l.bf16 %v630
        %v635 = vld [vmem:[%s605] sm:$0x7]
        %v636 = vld [vmem:[%s605 + $0x4] sm:$0x7]
        %v637 = vld [vmem:[%s605 + $0x8] sm:$0x7]
        %v638 = vld [vmem:[%s605 + $0xc] sm:$0x7]
        %v639 = vunpack.c.l.bf16 %v635
        %v640 = vunpack.c.l.bf16 %v636
        %v641 = vunpack.c.l.bf16 %v637
        %v642 = vunpack.c.l.bf16 %v638
        %v643 = vld [vmem:[%s4] sm:$0x1]
        %v644 = vlaneseq
        %v645 = vshrl.u32 %v644, 7
        %v646 = vsub.s32 0, %v645
        %v647 = vrot.slane %v643, %v646
        %v648 = vmul.f32 %v612, %v647
        %v649 = vmul.f32 %v613, %v647
        %v650 = vmul.f32 %v614, %v647
        %v651 = vmul.f32 %v615, %v647
        %v652 = vadd.f32 %v648, 0.0
        %v653 = vadd.f32 %v649, 0.0
        %v654 = vadd.f32 %v650, 0.0
        %v655 = vadd.f32 %v651, 0.0
        %v656 = vld [vmem:[%s4 + $0x1] sm:$0x1]
        %v657 = vlaneseq
        %v658 = vshrl.u32 %v657, 7
        %v659 = vsub.s32 0, %v658
        %v660 = vrot.slane %v656, %v659
        %v661 = vmul.f32 %v622, %v660
        %v662 = vmul.f32 %v623, %v660
        %v663 = vmul.f32 %v624, %v660
        %v664 = vmul.f32 %v625, %v660
        %v665 = vadd.f32 %v652, %v661
        %v666 = vadd.f32 %v653, %v662
        %v667 = vadd.f32 %v654, %v663
        %v668 = vadd.f32 %v655, %v664
        %v669 = vld [vmem:[%s4 + $0x2] sm:$0x1]
        %v670 = vlaneseq
        %v671 = vshrl.u32 %v670, 7
        %v672 = vsub.s32 0, %v671
        %v673 = vrot.slane %v669, %v672
        %v674 = vmul.f32 %v612, %v673
        %v675 = vmul.f32 %v613, %v673
        %v676 = vmul.f32 %v614, %v673
        %v677 = vmul.f32 %v615, %v673
        %v682 = vrot.slane %v674, 1
        %v683 = vrot.slane %v675, 1
        %v684 = vrot.slane %v676, 1
        %v685 = vrot.slane %v677, 1
        %v690 = vadd.f32 %v665, %v682
        %v691 = vadd.f32 %v666, %v683
        %v692 = vadd.f32 %v667, %v684
        %v693 = vadd.f32 %v668, %v685
        %v694 = vld [vmem:[%s4 + $0x3] sm:$0x1]
        %v695 = vlaneseq
        %v696 = vshrl.u32 %v695, 7
        %v697 = vsub.s32 0, %v696
        %v698 = vrot.slane %v694, %v697
        %v699 = vmul.f32 %v631, %v698
        %v700 = vmul.f32 %v632, %v698
        %v701 = vmul.f32 %v633, %v698
        %v702 = vmul.f32 %v634, %v698
        %v703 = vadd.f32 %v690, %v699
        %v704 = vadd.f32 %v691, %v700
        %v705 = vadd.f32 %v692, %v701
        %v706 = vadd.f32 %v693, %v702
        %v707 = vld [vmem:[%s4 + $0x4] sm:$0x1]
        %v708 = vlaneseq
        %v709 = vshrl.u32 %v708, 7
        %v710 = vsub.s32 0, %v709
        %v711 = vrot.slane %v707, %v710
        %v712 = vmul.f32 %v639, %v711
        %v713 = vmul.f32 %v640, %v711
        %v714 = vmul.f32 %v641, %v711
        %v715 = vmul.f32 %v642, %v711
        %v716 = vadd.f32 %v703, %v712
        %v717 = vadd.f32 %v704, %v713
        %v718 = vadd.f32 %v705, %v714
        %v719 = vadd.f32 %v706, %v715
        %v720 = vld [vmem:[%s4 + $0x5] sm:$0x1]
        %v721 = vlaneseq
        %v722 = vshrl.u32 %v721, 7
        %v723 = vsub.s32 0, %v722
        %v724 = vrot.slane %v720, %v723
        %v725 = vmul.f32 %v631, %v724
        %v726 = vmul.f32 %v632, %v724
        %v727 = vmul.f32 %v633, %v724
        %v728 = vmul.f32 %v634, %v724
        %v733 = vrot.slane %v725, 1
        %v734 = vrot.slane %v726, 1
        %v735 = vrot.slane %v727, 1
        %v736 = vrot.slane %v728, 1
        %v741 = vadd.f32 %v716, %v733
        %v742 = vadd.f32 %v717, %v734
        %v743 = vadd.f32 %v718, %v735
        %v744 = vadd.f32 %v719, %v736
        %v745 = vld [vmem:[%s4 + $0x6] sm:$0x1]
        %v746 = vlaneseq
        %v747 = vshrl.u32 %v746, 7
        %v748 = vsub.s32 0, %v747
        %v749 = vrot.slane %v745, %v748
        %v750 = vmul.f32 %v613, %v749
        %v751 = vmul.f32 %v614, %v749
        %v752 = vmul.f32 %v615, %v749
        %v753 = vmul.f32 %v616, %v749
        %v754 = vadd.f32 %v741, %v750
        %v755 = vadd.f32 %v742, %v751
        %v756 = vadd.f32 %v743, %v752
        %v757 = vadd.f32 %v744, %v753
        %v758 = vld [vmem:[%s4 + $0x7] sm:$0x1]
        %v759 = vlaneseq
        %v760 = vshrl.u32 %v759, 7
        %v761 = vsub.s32 0, %v760
        %v762 = vrot.slane %v758, %v761
        %v763 = vmul.f32 %v623, %v762
        %v764 = vmul.f32 %v624, %v762
        %v765 = vmul.f32 %v625, %v762
        %v766 = vmul.f32 %v626, %v762
        %v767 = vadd.f32 %v754, %v763
        %v768 = vadd.f32 %v755, %v764
        %v769 = vadd.f32 %v756, %v765
        %v770 = vadd.f32 %v757, %v766
        %v771 = vld [vmem:[%s4 + $0x8] sm:$0x1]
        %v772 = vlaneseq
        %v773 = vshrl.u32 %v772, 7
        %v774 = vsub.s32 0, %v773
        %v775 = vrot.slane %v771, %v774
        %v776 = vmul.f32 %v613, %v775
        %v777 = vmul.f32 %v614, %v775
        %v778 = vmul.f32 %v615, %v775
        %v779 = vmul.f32 %v616, %v775
        %v784 = vrot.slane %v776, 1
        %v785 = vrot.slane %v777, 1
        %v786 = vrot.slane %v778, 1
        %v787 = vrot.slane %v779, 1
        %v792 = vadd.f32 %v767, %v784
        %v793 = vadd.f32 %v768, %v785
        %v794 = vadd.f32 %v769, %v786
        %v795 = vadd.f32 %v770, %v787
        %v796 = vld [vmem:[%s5] sm:$0x1]
        %v798 = vlaneseq
        %v799 = vshrl.u32 %v798, 7
        %v800 = vsub.s32 0, %v799
        %v801 = vrot.slane %v796, %v800
        %v803 = vmul.f32 %v792, %v801
        %v804 = vmul.f32 %v793, %v801
        %v805 = vmul.f32 %v794, %v801
        %v806 = vmul.f32 %v795, %v801
        %v807 = vld [vmem:[%s6] sm:$0x1]
        %v809 = vlaneseq
        %v810 = vshrl.u32 %v809, 7
        %v811 = vsub.s32 0, %v810
        %v812 = vrot.slane %v807, %v811
        %v814 = vadd.f32 %v803, %v812
        %v815 = vadd.f32 %v804, %v812
        %v816 = vadd.f32 %v805, %v812
        %v817 = vadd.f32 %v806, %v812
        %v818 = vxor.u32 %v814, 2147483648
        %v819 = vxor.u32 %v815, 2147483648
        %v820 = vxor.u32 %v816, 2147483648
        %v821 = vxor.u32 %v817, 2147483648
        %v822 = vmul.f32 %v818, 1.442695
        %v823 = vpow.pop %v822
        %v824 = vmul.f32 %v819, 1.442695
        %v825 = vpow.pop %v824
        %v826 = vmul.f32 %v820, 1.442695
        %v827 = vpow.pop %v826
        %v828 = vmul.f32 %v821, 1.442695
        %v829 = vpow.pop %v828
        %v830 = vadd.f32 %v823, 1.0
        %v831 = vadd.f32 %v825, 1.0
        %v832 = vadd.f32 %v827, 1.0
        %v833 = vadd.f32 %v829, 1.0
        %v834 = vrcp.pop %v830
        %v835 = vmul.f32 1.0, %v834
        %v836 = vrcp.pop %v831
        %v837 = vmul.f32 1.0, %v836
        %v838 = vrcp.pop %v832
        %v839 = vmul.f32 1.0, %v838
        %v840 = vrcp.pop %v833
        %v841 = vmul.f32 1.0, %v840
        %v842 = vmul.f32 %v814, %v835
        %v843 = vmul.f32 %v815, %v837
        %v844 = vmul.f32 %v816, %v839
        %v845 = vmul.f32 %v817, %v841
        %vm846 = vcmask 1043456
        %v847 = vsel %vm846, %v842, 0.0
        %v848 = vsel %vm846, %v843, 0.0
        %v849 = vadd.f32 %v847, %v848
        %v850 = vsel %vm846, %v844, 0.0
        %v851 = vadd.f32 %v849, %v850
        %v852 = vsel %vm846, %v845, 0.0
        %v853 = vadd.f32 %v851, %v852
        %v854 = vrot.slane %v853, 4
        %v855 = vadd.f32 %v853, %v854
        %v856 = vrot.slane %v855, 2
        %v857 = vadd.f32 %v855, %v856
        %v858 = vrot.slane %v857, 1
        %v859 = vadd.f32 %v857, %v858
        %v860 = vmul.f32 %v859, 0.0625
        %v861 = vpack.c.bf16 %v860, %v860
        %v862 = vld [vmem:[%s7] sm:$0xf]
        %v863 = vld [vmem:[%s7 + $0x4] sm:$0xf]
        %v864 = vld [vmem:[%s7 + $0x8] sm:$0xf]
        %v865 = vld [vmem:[%s7 + $0xc] sm:$0xf]
        %v866 = vld [vmem:[%s7 + $0x10] sm:$0xf]
        %v867 = vld [vmem:[%s7 + $0x14] sm:$0xf]
        %v868 = vld [vmem:[%s7 + $0x18] sm:$0xf]
        %v869 = vld [vmem:[%s7 + $0x1c] sm:$0xf]
        %v870 = vld [vmem:[%s7 + $0x20] sm:$0xf]
        %v871 = vld [vmem:[%s7 + $0x24] sm:$0xf]
        %v872 = vld [vmem:[%s7 + $0x28] sm:$0xf]
        %v873 = vld [vmem:[%s7 + $0x2c] sm:$0xf]
        %v874 = vld [vmem:[%s7 + $0x30] sm:$0xf]
        %v875 = vld [vmem:[%s7 + $0x34] sm:$0xf]
        %v876 = vld [vmem:[%s7 + $0x38] sm:$0xf]
        %v877 = vld [vmem:[%s7 + $0x3c] sm:$0xf]
        %v878 = vld [vmem:[%s8] sm:$0x1]
        %v895 = vunpack.c.l.b16 %v862
        %v896 = vunpack.c.l.b16 %v863
        %v897 = vunpack.c.l.b16 %v864
        %v898 = vunpack.c.l.b16 %v865
        %v899 = vunpack.c.l.b16 %v866
        %v900 = vunpack.c.l.b16 %v867
        %v901 = vunpack.c.l.b16 %v868
        %v902 = vunpack.c.l.b16 %v869
        %v903 = vunpack.c.l.b16 %v870
        %v904 = vunpack.c.l.b16 %v871
        %v905 = vunpack.c.l.b16 %v872
        %v906 = vunpack.c.l.b16 %v873
        %v907 = vunpack.c.l.b16 %v874
        %v908 = vunpack.c.l.b16 %v875
        %v909 = vunpack.c.l.b16 %v876
        %v910 = vunpack.c.l.b16 %v877
        %v911 = vpack.c.b16 %v896, %v895
        %v912 = vpack.c.b16 %v898, %v897
        %v913 = vpack.c.b16 %v900, %v899
        %v914 = vpack.c.b16 %v902, %v901
        %v915 = vpack.c.b16 %v904, %v903
        %v916 = vpack.c.b16 %v906, %v905
        %v917 = vpack.c.b16 %v908, %v907
        %v918 = vpack.c.b16 %v910, %v909
        %927 = vmatprep.subr.bf16.mxu0 0
        %928 = vmatpush1.bf16.msra.mxu0 %v918
        %929 = vmatprep.subr.bf16.mxu0 0
        %930 = vmatpush1.bf16.msra.mxu0 %v917
        %931 = vmatprep.subr.bf16.mxu0 0
        %932 = vmatpush1.bf16.msra.mxu0 %v916
        %933 = vmatprep.subr.bf16.mxu0 0
        %934 = vmatpush1.bf16.msra.mxu0 %v915
        %935 = vmatprep.subr.bf16.mxu0 0
        %936 = vmatpush1.bf16.msra.mxu0 %v914
        %937 = vmatprep.subr.bf16.mxu0 0
        %938 = vmatpush1.bf16.msra.mxu0 %v913
        %939 = vmatprep.subr.bf16.mxu0 0
        %940 = vmatpush1.bf16.msra.mxu0 %v912
        %941 = vmatprep.subr.bf16.mxu0 0
        %942 = vmatpush1.bf16.msra.mxu0 %v911
        %943 = vmatprep.subr.bf16.mxu0 0
        %944 = vmatpush2.bf16.msra.mxu0 0
        %945 = vmatprep.subr.bf16.mxu0 0
        %946 = vmatpush2.bf16.msra.mxu0 0
        %947 = vmatprep.subr.bf16.mxu0 0
        %948 = vmatpush2.bf16.msra.mxu0 0
        %949 = vmatprep.subr.bf16.mxu0 0
        %950 = vmatpush2.bf16.msra.mxu0 0
        %951 = vmatprep.subr.bf16.mxu0 0
        %952 = vmatpush2.bf16.msra.mxu0 0
        %953 = vmatprep.subr.bf16.mxu0 0
        %954 = vmatpush2.bf16.msra.mxu0 0
        %955 = vmatprep.subr.bf16.mxu0 0
        %956 = vmatpush2.bf16.msra.mxu0 0
        %957 = vmatprep.subr.bf16.mxu0 0
        %958 = vmatpush2.bf16.msra.mxu0 0
        %959 = vmatprep.mubr.bf16.mxu0 0
        %960 = vmatmul.mubr.bf16.gmra.mxu0 %v861
        %v961 = vpop.f32.mrf.mxu0
        %v962 = vadd.f32 %v878, %v961
        %v963 = vpop.f32.mrf.mxu0
        %v964 = vpop.f32.mrf.mxu0
        %v965 = vpop.f32.mrf.mxu0
        %966 = vdwg.mxu0
        %v967 = vxor.u32 %v962, 2147483648
        %v968 = vmul.f32 %v967, 1.442695
        %v969 = vpow.pop %v968
        %v970 = vadd.f32 %v969, 1.0
        %v971 = vrcp.pop %v970
        %v972 = vmul.f32 1.0, %v971
        %v973 = vmul.f32 %v962, %v972
        %v974 = vpack.c.bf16 %v973, %v973
        %v975 = vld [vmem:[%s9] sm:$0xf]
        %v976 = vld [vmem:[%s9 + $0x4] sm:$0xf]
        %v977 = vld [vmem:[%s9 + $0x8] sm:$0xf]
        %v978 = vld [vmem:[%s9 + $0xc] sm:$0xf]
        %v979 = vld [vmem:[%s9 + $0x10] sm:$0xf]
        %v980 = vld [vmem:[%s9 + $0x14] sm:$0xf]
        %v981 = vld [vmem:[%s9 + $0x18] sm:$0xf]
        %v982 = vld [vmem:[%s9 + $0x1c] sm:$0xf]
        %v983 = vld [vmem:[%s9 + $0x20] sm:$0xf]
        %v984 = vld [vmem:[%s9 + $0x24] sm:$0xf]
        %v985 = vld [vmem:[%s9 + $0x28] sm:$0xf]
        %v986 = vld [vmem:[%s9 + $0x2c] sm:$0xf]
        %v987 = vld [vmem:[%s9 + $0x30] sm:$0xf]
        %v988 = vld [vmem:[%s9 + $0x34] sm:$0xf]
        %v989 = vld [vmem:[%s9 + $0x38] sm:$0xf]
        %v990 = vld [vmem:[%s9 + $0x3c] sm:$0xf]
        %v991 = vld [vmem:[%s10] sm:$0x1]
        %v1008 = vunpack.c.l.b16 %v975
        %v1009 = vunpack.c.l.b16 %v976
        %v1010 = vunpack.c.l.b16 %v977
        %v1011 = vunpack.c.l.b16 %v978
        %v1012 = vunpack.c.l.b16 %v979
        %v1013 = vunpack.c.l.b16 %v980
        %v1014 = vunpack.c.l.b16 %v981
        %v1015 = vunpack.c.l.b16 %v982
        %v1016 = vunpack.c.l.b16 %v983
        %v1017 = vunpack.c.l.b16 %v984
        %v1018 = vunpack.c.l.b16 %v985
        %v1019 = vunpack.c.l.b16 %v986
        %v1020 = vunpack.c.l.b16 %v987
        %v1021 = vunpack.c.l.b16 %v988
        %v1022 = vunpack.c.l.b16 %v989
        %v1023 = vunpack.c.l.b16 %v990
        %v1024 = vpack.c.b16 %v1009, %v1008
        %v1025 = vpack.c.b16 %v1011, %v1010
        %v1026 = vpack.c.b16 %v1013, %v1012
        %v1027 = vpack.c.b16 %v1015, %v1014
        %v1028 = vpack.c.b16 %v1017, %v1016
        %v1029 = vpack.c.b16 %v1019, %v1018
        %v1030 = vpack.c.b16 %v1021, %v1020
        %v1031 = vpack.c.b16 %v1023, %v1022
        %1040 = vmatprep.subr.bf16.mxu0 0
        %1041 = vmatpush1.bf16.msra.mxu0 %v1031
        %1042 = vmatprep.subr.bf16.mxu0 0
        %1043 = vmatpush1.bf16.msra.mxu0 %v1030
        %1044 = vmatprep.subr.bf16.mxu0 0
        %1045 = vmatpush1.bf16.msra.mxu0 %v1029
        %1046 = vmatprep.subr.bf16.mxu0 0
        %1047 = vmatpush1.bf16.msra.mxu0 %v1028
        %1048 = vmatprep.subr.bf16.mxu0 0
        %1049 = vmatpush1.bf16.msra.mxu0 %v1027
        %1050 = vmatprep.subr.bf16.mxu0 0
        %1051 = vmatpush1.bf16.msra.mxu0 %v1026
        %1052 = vmatprep.subr.bf16.mxu0 0
        %1053 = vmatpush1.bf16.msra.mxu0 %v1025
        %1054 = vmatprep.subr.bf16.mxu0 0
        %1055 = vmatpush1.bf16.msra.mxu0 %v1024
        %1056 = vmatprep.subr.bf16.mxu0 0
        %1057 = vmatpush2.bf16.msra.mxu0 0
        %1058 = vmatprep.subr.bf16.mxu0 0
        %1059 = vmatpush2.bf16.msra.mxu0 0
        %1060 = vmatprep.subr.bf16.mxu0 0
        %1061 = vmatpush2.bf16.msra.mxu0 0
        %1062 = vmatprep.subr.bf16.mxu0 0
        %1063 = vmatpush2.bf16.msra.mxu0 0
        %1064 = vmatprep.subr.bf16.mxu0 0
        %1065 = vmatpush2.bf16.msra.mxu0 0
        %1066 = vmatprep.subr.bf16.mxu0 0
        %1067 = vmatpush2.bf16.msra.mxu0 0
        %1068 = vmatprep.subr.bf16.mxu0 0
        %1069 = vmatpush2.bf16.msra.mxu0 0
        %1070 = vmatprep.subr.bf16.mxu0 0
        %1071 = vmatpush2.bf16.msra.mxu0 0
        %1072 = vmatprep.mubr.bf16.mxu0 0
        %1073 = vmatmul.mubr.bf16.gmra.mxu0 %v974
        %v1074 = vpop.f32.mrf.mxu0
        %v1075 = vadd.f32 %v991, %v1074
        %v1076 = vpop.f32.mrf.mxu0
        %v1077 = vpop.f32.mrf.mxu0
        %v1078 = vpop.f32.mrf.mxu0
        %1079 = vdwg.mxu0
        %v1080 = vxor.u32 %v1075, 2147483648
        %v1081 = vmul.f32 %v1080, 1.442695
        %v1082 = vpow.pop %v1081
        %v1083 = vadd.f32 %v1082, 1.0
        %v1084 = vrcp.pop %v1083
        %v1085 = vmul.f32 1.0, %v1084
        %v1086 = vlaneseq
        %v1087 = vshrl.u32 %v1086, 7
        %v1088 = vsub.s32 0, %v1087
        %v1089 = vrot.slane %v1085, %v1088
        %v1090 = vmul.f32 %v842, %v1089
        %v1091 = vmul.f32 %v843, %v1089
        %v1092 = vmul.f32 %v844, %v1089
        %v1093 = vmul.f32 %v845, %v1089
        %v1094 = vpack.c.bf16 %v1090, %v1090
        %v1095 = vld [vmem:[%s11] sm:$0xf]
        %v1096 = vld [vmem:[%s11 + $0x4] sm:$0xf]
        %v1097 = vld [vmem:[%s11 + $0x8] sm:$0xf]
        %v1098 = vld [vmem:[%s11 + $0xc] sm:$0xf]
        %v1099 = vld [vmem:[%s11 + $0x10] sm:$0xf]
        %v1100 = vld [vmem:[%s11 + $0x14] sm:$0xf]
        %v1101 = vld [vmem:[%s11 + $0x18] sm:$0xf]
        %v1102 = vld [vmem:[%s11 + $0x1c] sm:$0xf]
        %v1103 = vld [vmem:[%s11 + $0x20] sm:$0xf]
        %v1104 = vld [vmem:[%s11 + $0x24] sm:$0xf]
        %v1105 = vld [vmem:[%s11 + $0x28] sm:$0xf]
        %v1106 = vld [vmem:[%s11 + $0x2c] sm:$0xf]
        %v1107 = vld [vmem:[%s11 + $0x30] sm:$0xf]
        %v1108 = vld [vmem:[%s11 + $0x34] sm:$0xf]
        %v1109 = vld [vmem:[%s11 + $0x38] sm:$0xf]
        %v1110 = vld [vmem:[%s11 + $0x3c] sm:$0xf]
        %v1127 = vunpack.c.l.b16 %v1095
        %v1128 = vunpack.c.l.b16 %v1096
        %v1129 = vunpack.c.l.b16 %v1097
        %v1130 = vunpack.c.l.b16 %v1098
        %v1131 = vunpack.c.l.b16 %v1099
        %v1132 = vunpack.c.l.b16 %v1100
        %v1133 = vunpack.c.l.b16 %v1101
        %v1134 = vunpack.c.l.b16 %v1102
        %v1135 = vunpack.c.l.b16 %v1103
        %v1136 = vunpack.c.l.b16 %v1104
        %v1137 = vunpack.c.l.b16 %v1105
        %v1138 = vunpack.c.l.b16 %v1106
        %v1139 = vunpack.c.l.b16 %v1107
        %v1140 = vunpack.c.l.b16 %v1108
        %v1141 = vunpack.c.l.b16 %v1109
        %v1142 = vunpack.c.l.b16 %v1110
        %v1143 = vpack.c.b16 %v1128, %v1127
        %v1144 = vpack.c.b16 %v1130, %v1129
        %v1145 = vpack.c.b16 %v1132, %v1131
        %v1146 = vpack.c.b16 %v1134, %v1133
        %v1147 = vpack.c.b16 %v1136, %v1135
        %v1148 = vpack.c.b16 %v1138, %v1137
        %v1149 = vpack.c.b16 %v1140, %v1139
        %v1150 = vpack.c.b16 %v1142, %v1141
        %1159 = vmatprep.subr.bf16.mxu0 0
        %1160 = vmatpush1.bf16.msra.mxu0 %v1150
        %1161 = vmatprep.subr.bf16.mxu0 0
        %1162 = vmatpush1.bf16.msra.mxu0 %v1149
        %1163 = vmatprep.subr.bf16.mxu0 0
        %1164 = vmatpush1.bf16.msra.mxu0 %v1148
        %1165 = vmatprep.subr.bf16.mxu0 0
        %1166 = vmatpush1.bf16.msra.mxu0 %v1147
        %1167 = vmatprep.subr.bf16.mxu0 0
        %1168 = vmatpush1.bf16.msra.mxu0 %v1146
        %1169 = vmatprep.subr.bf16.mxu0 0
        %1170 = vmatpush1.bf16.msra.mxu0 %v1145
        %1171 = vmatprep.subr.bf16.mxu0 0
        %1172 = vmatpush1.bf16.msra.mxu0 %v1144
        %1173 = vmatprep.subr.bf16.mxu0 0
        %1174 = vmatpush1.bf16.msra.mxu0 %v1143
        %1175 = vmatprep.subr.bf16.mxu0 0
        %1176 = vmatpush2.bf16.msra.mxu0 0
        %1177 = vmatprep.subr.bf16.mxu0 0
        %1178 = vmatpush2.bf16.msra.mxu0 0
        %1179 = vmatprep.subr.bf16.mxu0 0
        %1180 = vmatpush2.bf16.msra.mxu0 0
        %1181 = vmatprep.subr.bf16.mxu0 0
        %1182 = vmatpush2.bf16.msra.mxu0 0
        %1183 = vmatprep.subr.bf16.mxu0 0
        %1184 = vmatpush2.bf16.msra.mxu0 0
        %1185 = vmatprep.subr.bf16.mxu0 0
        %1186 = vmatpush2.bf16.msra.mxu0 0
        %1187 = vmatprep.subr.bf16.mxu0 0
        %1188 = vmatpush2.bf16.msra.mxu0 0
        %1189 = vmatprep.subr.bf16.mxu0 0
        %1190 = vmatpush2.bf16.msra.mxu0 0
        %1191 = vmatprep.mubr.bf16.mxu0 0
        %1192 = vmatmul.mubr.bf16.gmra.mxu0 %v1094
        %v1193 = vpop.f32.mrf.mxu0
        %v1194 = vadd.f32 0.0, %v1193
        %v1195 = vpop.f32.mrf.mxu0
        %v1196 = vpop.f32.mrf.mxu0
        %v1197 = vpop.f32.mrf.mxu0
        %1198 = vdwg.mxu0
        %v1199 = vld [vmem:[%s12] sm:$0x1]
        %v1201 = vlaneseq
        %v1202 = vshrl.u32 %v1201, 7
        %v1203 = vsub.s32 0, %v1202
        %v1204 = vrot.slane %v1199, %v1203
        %v1206 = vmul.f32 %v1194, %v1204
        %v1207 = vld [vmem:[%s13] sm:$0x1]
        %v1209 = vlaneseq
        %v1210 = vshrl.u32 %v1209, 7
        %v1211 = vsub.s32 0, %v1210
        %v1212 = vrot.slane %v1207, %v1211
        %v1214 = vadd.f32 %v1206, %v1212
        %v1215 = vpack.c.bf16 %v1214, %v1214
        %v1216 = vld [vmem:[%s14] sm:$0xf]
        %v1217 = vld [vmem:[%s14 + $0x4] sm:$0xf]
        %v1218 = vld [vmem:[%s14 + $0x8] sm:$0xf]
        %v1219 = vld [vmem:[%s14 + $0xc] sm:$0xf]
        %v1220 = vld [vmem:[%s14 + $0x10] sm:$0xf]
        %v1221 = vld [vmem:[%s14 + $0x14] sm:$0xf]
        %v1222 = vld [vmem:[%s14 + $0x18] sm:$0xf]
        %v1223 = vld [vmem:[%s14 + $0x1c] sm:$0xf]
        %v1224 = vld [vmem:[%s14 + $0x20] sm:$0xf]
        %v1225 = vld [vmem:[%s14 + $0x24] sm:$0xf]
        %v1226 = vld [vmem:[%s14 + $0x28] sm:$0xf]
        %v1227 = vld [vmem:[%s14 + $0x2c] sm:$0xf]
        %v1228 = vld [vmem:[%s14 + $0x30] sm:$0xf]
        %v1229 = vld [vmem:[%s14 + $0x34] sm:$0xf]
        %v1230 = vld [vmem:[%s14 + $0x38] sm:$0xf]
        %v1231 = vld [vmem:[%s14 + $0x3c] sm:$0xf]
        %v1248 = vunpack.c.l.b16 %v1216
        %v1249 = vunpack.c.l.b16 %v1217
        %v1250 = vunpack.c.l.b16 %v1218
        %v1251 = vunpack.c.l.b16 %v1219
        %v1252 = vunpack.c.l.b16 %v1220
        %v1253 = vunpack.c.l.b16 %v1221
        %v1254 = vunpack.c.l.b16 %v1222
        %v1255 = vunpack.c.l.b16 %v1223
        %v1256 = vunpack.c.l.b16 %v1224
        %v1257 = vunpack.c.l.b16 %v1225
        %v1258 = vunpack.c.l.b16 %v1226
        %v1259 = vunpack.c.l.b16 %v1227
        %v1260 = vunpack.c.l.b16 %v1228
        %v1261 = vunpack.c.l.b16 %v1229
        %v1262 = vunpack.c.l.b16 %v1230
        %v1263 = vunpack.c.l.b16 %v1231
        %v1264 = vpack.c.b16 %v1249, %v1248
        %v1265 = vpack.c.b16 %v1251, %v1250
        %v1266 = vpack.c.b16 %v1253, %v1252
        %v1267 = vpack.c.b16 %v1255, %v1254
        %v1268 = vpack.c.b16 %v1257, %v1256
        %v1269 = vpack.c.b16 %v1259, %v1258
        %v1270 = vpack.c.b16 %v1261, %v1260
        %v1271 = vpack.c.b16 %v1263, %v1262
        %1280 = vmatprep.subr.bf16.mxu0 0
        %1281 = vmatpush1.bf16.msra.mxu0 %v1271
        %1282 = vmatprep.subr.bf16.mxu0 0
        %1283 = vmatpush1.bf16.msra.mxu0 %v1270
        %1284 = vmatprep.subr.bf16.mxu0 0
        %1285 = vmatpush1.bf16.msra.mxu0 %v1269
        %1286 = vmatprep.subr.bf16.mxu0 0
        %1287 = vmatpush1.bf16.msra.mxu0 %v1268
        %1288 = vmatprep.subr.bf16.mxu0 0
        %1289 = vmatpush1.bf16.msra.mxu0 %v1267
        %1290 = vmatprep.subr.bf16.mxu0 0
        %1291 = vmatpush1.bf16.msra.mxu0 %v1266
        %1292 = vmatprep.subr.bf16.mxu0 0
        %1293 = vmatpush1.bf16.msra.mxu0 %v1265
        %1294 = vmatprep.subr.bf16.mxu0 0
        %1295 = vmatpush1.bf16.msra.mxu0 %v1264
        %1296 = vmatprep.subr.bf16.mxu0 0
        %1297 = vmatpush2.bf16.msra.mxu0 0
        %1298 = vmatprep.subr.bf16.mxu0 0
        %1299 = vmatpush2.bf16.msra.mxu0 0
        %1300 = vmatprep.subr.bf16.mxu0 0
        %1301 = vmatpush2.bf16.msra.mxu0 0
        %1302 = vmatprep.subr.bf16.mxu0 0
        %1303 = vmatpush2.bf16.msra.mxu0 0
        %1304 = vmatprep.subr.bf16.mxu0 0
        %1305 = vmatpush2.bf16.msra.mxu0 0
        %1306 = vmatprep.subr.bf16.mxu0 0
        %1307 = vmatpush2.bf16.msra.mxu0 0
        %1308 = vmatprep.subr.bf16.mxu0 0
        %1309 = vmatpush2.bf16.msra.mxu0 0
        %1310 = vmatprep.subr.bf16.mxu0 0
        %1311 = vmatpush2.bf16.msra.mxu0 0
        %1312 = vmatprep.mubr.bf16.mxu0 0
        %1313 = vmatmul.mubr.bf16.gmra.mxu0 %v1215
        %v1314 = vpop.f32.mrf.mxu0
        %v1315 = vadd.f32 0.0, %v1314
        %v1316 = vpop.f32.mrf.mxu0
        %v1317 = vpop.f32.mrf.mxu0
        %v1318 = vpop.f32.mrf.mxu0
        %1319 = vdwg.mxu0
        %v1320 = vld [vmem:[%s15] sm:$0x1]
        %v1322 = vlaneseq
        %v1323 = vshrl.u32 %v1322, 7
        %v1324 = vsub.s32 0, %v1323
        %v1325 = vrot.slane %v1320, %v1324
        %v1327 = vmul.f32 %v1315, %v1325
        %v1328 = vld [vmem:[%s16] sm:$0x1]
        %v1330 = vlaneseq
        %v1331 = vshrl.u32 %v1330, 7
        %v1332 = vsub.s32 0, %v1331
        %v1333 = vrot.slane %v1328, %v1332
        %v1335 = vadd.f32 %v1327, %v1333
        %v1336 = vxor.u32 %v1335, 2147483648
        %v1337 = vmul.f32 %v1336, 1.442695
        %v1338 = vpow.pop %v1337
        %v1339 = vadd.f32 %v1338, 1.0
        %v1340 = vrcp.pop %v1339
        %v1341 = vmul.f32 1.0, %v1340
        %v1342 = vmul.f32 %v1335, %v1341
        %v1343 = vsel %vm846, %v1342, 0.0
        %v1344 = vrot.slane %v1343, 4
        %v1345 = vadd.f32 %v1343, %v1344
        %v1346 = vrot.slane %v1345, 2
        %v1347 = vadd.f32 %v1345, %v1346
        %v1348 = vrot.slane %v1347, 1
        %v1349 = vadd.f32 %v1347, %v1348
        %v1350 = vadd.f32 %v1349, 0.0
        %v1351 = vpack.c.bf16 %v1091, %v1091
        %1352 = vmatprep.subr.bf16.mxu0 0
        %1353 = vmatpush1.bf16.msra.mxu0 %v1150
        %1354 = vmatprep.subr.bf16.mxu0 0
        %1355 = vmatpush1.bf16.msra.mxu0 %v1149
        %1356 = vmatprep.subr.bf16.mxu0 0
        %1357 = vmatpush1.bf16.msra.mxu0 %v1148
        %1358 = vmatprep.subr.bf16.mxu0 0
        %1359 = vmatpush1.bf16.msra.mxu0 %v1147
        %1360 = vmatprep.subr.bf16.mxu0 0
        %1361 = vmatpush1.bf16.msra.mxu0 %v1146
        %1362 = vmatprep.subr.bf16.mxu0 0
        %1363 = vmatpush1.bf16.msra.mxu0 %v1145
        %1364 = vmatprep.subr.bf16.mxu0 0
        %1365 = vmatpush1.bf16.msra.mxu0 %v1144
        %1366 = vmatprep.subr.bf16.mxu0 0
        %1367 = vmatpush1.bf16.msra.mxu0 %v1143
        %1368 = vmatprep.subr.bf16.mxu0 0
        %1369 = vmatpush2.bf16.msra.mxu0 0
        %1370 = vmatprep.subr.bf16.mxu0 0
        %1371 = vmatpush2.bf16.msra.mxu0 0
        %1372 = vmatprep.subr.bf16.mxu0 0
        %1373 = vmatpush2.bf16.msra.mxu0 0
        %1374 = vmatprep.subr.bf16.mxu0 0
        %1375 = vmatpush2.bf16.msra.mxu0 0
        %1376 = vmatprep.subr.bf16.mxu0 0
        %1377 = vmatpush2.bf16.msra.mxu0 0
        %1378 = vmatprep.subr.bf16.mxu0 0
        %1379 = vmatpush2.bf16.msra.mxu0 0
        %1380 = vmatprep.subr.bf16.mxu0 0
        %1381 = vmatpush2.bf16.msra.mxu0 0
        %1382 = vmatprep.subr.bf16.mxu0 0
        %1383 = vmatpush2.bf16.msra.mxu0 0
        %1384 = vmatprep.mubr.bf16.mxu0 0
        %1385 = vmatmul.mubr.bf16.gmra.mxu0 %v1351
        %v1386 = vpop.f32.mrf.mxu0
        %v1387 = vadd.f32 0.0, %v1386
        %v1388 = vpop.f32.mrf.mxu0
        %v1389 = vpop.f32.mrf.mxu0
        %v1390 = vpop.f32.mrf.mxu0
        %1391 = vdwg.mxu0
        %v1392 = vmul.f32 %v1387, %v1204
        %v1393 = vadd.f32 %v1392, %v1212
        %v1394 = vpack.c.bf16 %v1393, %v1393
        %1395 = vmatprep.subr.bf16.mxu0 0
        %1396 = vmatpush1.bf16.msra.mxu0 %v1271
        %1397 = vmatprep.subr.bf16.mxu0 0
        %1398 = vmatpush1.bf16.msra.mxu0 %v1270
        %1399 = vmatprep.subr.bf16.mxu0 0
        %1400 = vmatpush1.bf16.msra.mxu0 %v1269
        %1401 = vmatprep.subr.bf16.mxu0 0
        %1402 = vmatpush1.bf16.msra.mxu0 %v1268
        %1403 = vmatprep.subr.bf16.mxu0 0
        %1404 = vmatpush1.bf16.msra.mxu0 %v1267
        %1405 = vmatprep.subr.bf16.mxu0 0
        %1406 = vmatpush1.bf16.msra.mxu0 %v1266
        %1407 = vmatprep.subr.bf16.mxu0 0
        %1408 = vmatpush1.bf16.msra.mxu0 %v1265
        %1409 = vmatprep.subr.bf16.mxu0 0
        %1410 = vmatpush1.bf16.msra.mxu0 %v1264
        %1411 = vmatprep.subr.bf16.mxu0 0
        %1412 = vmatpush2.bf16.msra.mxu0 0
        %1413 = vmatprep.subr.bf16.mxu0 0
        %1414 = vmatpush2.bf16.msra.mxu0 0
        %1415 = vmatprep.subr.bf16.mxu0 0
        %1416 = vmatpush2.bf16.msra.mxu0 0
        %1417 = vmatprep.subr.bf16.mxu0 0
        %1418 = vmatpush2.bf16.msra.mxu0 0
        %1419 = vmatprep.subr.bf16.mxu0 0
        %1420 = vmatpush2.bf16.msra.mxu0 0
        %1421 = vmatprep.subr.bf16.mxu0 0
        %1422 = vmatpush2.bf16.msra.mxu0 0
        %1423 = vmatprep.subr.bf16.mxu0 0
        %1424 = vmatpush2.bf16.msra.mxu0 0
        %1425 = vmatprep.subr.bf16.mxu0 0
        %1426 = vmatpush2.bf16.msra.mxu0 0
        %1427 = vmatprep.mubr.bf16.mxu0 0
        %1428 = vmatmul.mubr.bf16.gmra.mxu0 %v1394
        %v1429 = vpop.f32.mrf.mxu0
        %v1430 = vadd.f32 0.0, %v1429
        %v1431 = vpop.f32.mrf.mxu0
        %v1432 = vpop.f32.mrf.mxu0
        %v1433 = vpop.f32.mrf.mxu0
        %1434 = vdwg.mxu0
        %v1435 = vmul.f32 %v1430, %v1325
        %v1436 = vadd.f32 %v1435, %v1333
        %v1437 = vxor.u32 %v1436, 2147483648
        %v1438 = vmul.f32 %v1437, 1.442695
        %v1439 = vpow.pop %v1438
        %v1440 = vadd.f32 %v1439, 1.0
        %v1441 = vrcp.pop %v1440
        %v1442 = vmul.f32 1.0, %v1441
        %v1443 = vmul.f32 %v1436, %v1442
        %v1444 = vsel %vm846, %v1443, 0.0
        %v1445 = vrot.slane %v1444, 4
        %v1446 = vadd.f32 %v1444, %v1445
        %v1447 = vrot.slane %v1446, 2
        %v1448 = vadd.f32 %v1446, %v1447
        %v1449 = vrot.slane %v1448, 1
        %v1450 = vadd.f32 %v1448, %v1449
        %v1451 = vadd.f32 %v1350, %v1450
        %v1452 = vpack.c.bf16 %v1092, %v1092
        %1453 = vmatprep.subr.bf16.mxu0 0
        %1454 = vmatpush1.bf16.msra.mxu0 %v1150
        %1455 = vmatprep.subr.bf16.mxu0 0
        %1456 = vmatpush1.bf16.msra.mxu0 %v1149
        %1457 = vmatprep.subr.bf16.mxu0 0
        %1458 = vmatpush1.bf16.msra.mxu0 %v1148
        %1459 = vmatprep.subr.bf16.mxu0 0
        %1460 = vmatpush1.bf16.msra.mxu0 %v1147
        %1461 = vmatprep.subr.bf16.mxu0 0
        %1462 = vmatpush1.bf16.msra.mxu0 %v1146
        %1463 = vmatprep.subr.bf16.mxu0 0
        %1464 = vmatpush1.bf16.msra.mxu0 %v1145
        %1465 = vmatprep.subr.bf16.mxu0 0
        %1466 = vmatpush1.bf16.msra.mxu0 %v1144
        %1467 = vmatprep.subr.bf16.mxu0 0
        %1468 = vmatpush1.bf16.msra.mxu0 %v1143
        %1469 = vmatprep.subr.bf16.mxu0 0
        %1470 = vmatpush2.bf16.msra.mxu0 0
        %1471 = vmatprep.subr.bf16.mxu0 0
        %1472 = vmatpush2.bf16.msra.mxu0 0
        %1473 = vmatprep.subr.bf16.mxu0 0
        %1474 = vmatpush2.bf16.msra.mxu0 0
        %1475 = vmatprep.subr.bf16.mxu0 0
        %1476 = vmatpush2.bf16.msra.mxu0 0
        %1477 = vmatprep.subr.bf16.mxu0 0
        %1478 = vmatpush2.bf16.msra.mxu0 0
        %1479 = vmatprep.subr.bf16.mxu0 0
        %1480 = vmatpush2.bf16.msra.mxu0 0
        %1481 = vmatprep.subr.bf16.mxu0 0
        %1482 = vmatpush2.bf16.msra.mxu0 0
        %1483 = vmatprep.subr.bf16.mxu0 0
        %1484 = vmatpush2.bf16.msra.mxu0 0
        %1485 = vmatprep.mubr.bf16.mxu0 0
        %1486 = vmatmul.mubr.bf16.gmra.mxu0 %v1452
        %v1487 = vpop.f32.mrf.mxu0
        %v1488 = vadd.f32 0.0, %v1487
        %v1489 = vpop.f32.mrf.mxu0
        %v1490 = vpop.f32.mrf.mxu0
        %v1491 = vpop.f32.mrf.mxu0
        %1492 = vdwg.mxu0
        %v1493 = vmul.f32 %v1488, %v1204
        %v1494 = vadd.f32 %v1493, %v1212
        %v1495 = vpack.c.bf16 %v1494, %v1494
        %1496 = vmatprep.subr.bf16.mxu0 0
        %1497 = vmatpush1.bf16.msra.mxu0 %v1271
        %1498 = vmatprep.subr.bf16.mxu0 0
        %1499 = vmatpush1.bf16.msra.mxu0 %v1270
        %1500 = vmatprep.subr.bf16.mxu0 0
        %1501 = vmatpush1.bf16.msra.mxu0 %v1269
        %1502 = vmatprep.subr.bf16.mxu0 0
        %1503 = vmatpush1.bf16.msra.mxu0 %v1268
        %1504 = vmatprep.subr.bf16.mxu0 0
        %1505 = vmatpush1.bf16.msra.mxu0 %v1267
        %1506 = vmatprep.subr.bf16.mxu0 0
        %1507 = vmatpush1.bf16.msra.mxu0 %v1266
        %1508 = vmatprep.subr.bf16.mxu0 0
        %1509 = vmatpush1.bf16.msra.mxu0 %v1265
        %1510 = vmatprep.subr.bf16.mxu0 0
        %1511 = vmatpush1.bf16.msra.mxu0 %v1264
        %1512 = vmatprep.subr.bf16.mxu0 0
        %1513 = vmatpush2.bf16.msra.mxu0 0
        %1514 = vmatprep.subr.bf16.mxu0 0
        %1515 = vmatpush2.bf16.msra.mxu0 0
        %1516 = vmatprep.subr.bf16.mxu0 0
        %1517 = vmatpush2.bf16.msra.mxu0 0
        %1518 = vmatprep.subr.bf16.mxu0 0
        %1519 = vmatpush2.bf16.msra.mxu0 0
        %1520 = vmatprep.subr.bf16.mxu0 0
        %1521 = vmatpush2.bf16.msra.mxu0 0
        %1522 = vmatprep.subr.bf16.mxu0 0
        %1523 = vmatpush2.bf16.msra.mxu0 0
        %1524 = vmatprep.subr.bf16.mxu0 0
        %1525 = vmatpush2.bf16.msra.mxu0 0
        %1526 = vmatprep.subr.bf16.mxu0 0
        %1527 = vmatpush2.bf16.msra.mxu0 0
        %1528 = vmatprep.mubr.bf16.mxu0 0
        %1529 = vmatmul.mubr.bf16.gmra.mxu0 %v1495
        %v1530 = vpop.f32.mrf.mxu0
        %v1531 = vadd.f32 0.0, %v1530
        %v1532 = vpop.f32.mrf.mxu0
        %v1533 = vpop.f32.mrf.mxu0
        %v1534 = vpop.f32.mrf.mxu0
        %1535 = vdwg.mxu0
        %v1536 = vmul.f32 %v1531, %v1325
        %v1537 = vadd.f32 %v1536, %v1333
        %v1538 = vxor.u32 %v1537, 2147483648
        %v1539 = vmul.f32 %v1538, 1.442695
        %v1540 = vpow.pop %v1539
        %v1541 = vadd.f32 %v1540, 1.0
        %v1542 = vrcp.pop %v1541
        %v1543 = vmul.f32 1.0, %v1542
        %v1544 = vmul.f32 %v1537, %v1543
        %v1545 = vsel %vm846, %v1544, 0.0
        %v1546 = vrot.slane %v1545, 4
        %v1547 = vadd.f32 %v1545, %v1546
        %v1548 = vrot.slane %v1547, 2
        %v1549 = vadd.f32 %v1547, %v1548
        %v1550 = vrot.slane %v1549, 1
        %v1551 = vadd.f32 %v1549, %v1550
        %v1552 = vadd.f32 %v1451, %v1551
        %v1553 = vpack.c.bf16 %v1093, %v1093
        %1554 = vmatprep.subr.bf16.mxu0 0
        %1555 = vmatpush1.bf16.msra.mxu0 %v1150
        %1556 = vmatprep.subr.bf16.mxu0 0
        %1557 = vmatpush1.bf16.msra.mxu0 %v1149
        %1558 = vmatprep.subr.bf16.mxu0 0
        %1559 = vmatpush1.bf16.msra.mxu0 %v1148
        %1560 = vmatprep.subr.bf16.mxu0 0
        %1561 = vmatpush1.bf16.msra.mxu0 %v1147
        %1562 = vmatprep.subr.bf16.mxu0 0
        %1563 = vmatpush1.bf16.msra.mxu0 %v1146
        %1564 = vmatprep.subr.bf16.mxu0 0
        %1565 = vmatpush1.bf16.msra.mxu0 %v1145
        %1566 = vmatprep.subr.bf16.mxu0 0
        %1567 = vmatpush1.bf16.msra.mxu0 %v1144
        %1568 = vmatprep.subr.bf16.mxu0 0
        %1569 = vmatpush1.bf16.msra.mxu0 %v1143
        %1570 = vmatprep.subr.bf16.mxu0 0
        %1571 = vmatpush2.bf16.msra.mxu0 0
        %1572 = vmatprep.subr.bf16.mxu0 0
        %1573 = vmatpush2.bf16.msra.mxu0 0
        %1574 = vmatprep.subr.bf16.mxu0 0
        %1575 = vmatpush2.bf16.msra.mxu0 0
        %1576 = vmatprep.subr.bf16.mxu0 0
        %1577 = vmatpush2.bf16.msra.mxu0 0
        %1578 = vmatprep.subr.bf16.mxu0 0
        %1579 = vmatpush2.bf16.msra.mxu0 0
        %1580 = vmatprep.subr.bf16.mxu0 0
        %1581 = vmatpush2.bf16.msra.mxu0 0
        %1582 = vmatprep.subr.bf16.mxu0 0
        %1583 = vmatpush2.bf16.msra.mxu0 0
        %1584 = vmatprep.subr.bf16.mxu0 0
        %1585 = vmatpush2.bf16.msra.mxu0 0
        %1586 = vmatprep.mubr.bf16.mxu0 0
        %1587 = vmatmul.mubr.bf16.gmra.mxu0 %v1553
        %v1588 = vpop.f32.mrf.mxu0
        %v1589 = vadd.f32 0.0, %v1588
        %v1590 = vpop.f32.mrf.mxu0
        %v1591 = vpop.f32.mrf.mxu0
        %v1592 = vpop.f32.mrf.mxu0
        %1593 = vdwg.mxu0
        %v1594 = vmul.f32 %v1589, %v1204
        %v1595 = vadd.f32 %v1594, %v1212
        %v1596 = vpack.c.bf16 %v1595, %v1595
        %1597 = vmatprep.subr.bf16.mxu0 0
        %1598 = vmatpush1.bf16.msra.mxu0 %v1271
        %1599 = vmatprep.subr.bf16.mxu0 0
        %1600 = vmatpush1.bf16.msra.mxu0 %v1270
        %1601 = vmatprep.subr.bf16.mxu0 0
        %1602 = vmatpush1.bf16.msra.mxu0 %v1269
        %1603 = vmatprep.subr.bf16.mxu0 0
        %1604 = vmatpush1.bf16.msra.mxu0 %v1268
        %1605 = vmatprep.subr.bf16.mxu0 0
        %1606 = vmatpush1.bf16.msra.mxu0 %v1267
        %1607 = vmatprep.subr.bf16.mxu0 0
        %1608 = vmatpush1.bf16.msra.mxu0 %v1266
        %1609 = vmatprep.subr.bf16.mxu0 0
        %1610 = vmatpush1.bf16.msra.mxu0 %v1265
        %1611 = vmatprep.subr.bf16.mxu0 0
        %1612 = vmatpush1.bf16.msra.mxu0 %v1264
        %1613 = vmatprep.subr.bf16.mxu0 0
        %1614 = vmatpush2.bf16.msra.mxu0 0
        %1615 = vmatprep.subr.bf16.mxu0 0
        %1616 = vmatpush2.bf16.msra.mxu0 0
        %1617 = vmatprep.subr.bf16.mxu0 0
        %1618 = vmatpush2.bf16.msra.mxu0 0
        %1619 = vmatprep.subr.bf16.mxu0 0
        %1620 = vmatpush2.bf16.msra.mxu0 0
        %1621 = vmatprep.subr.bf16.mxu0 0
        %1622 = vmatpush2.bf16.msra.mxu0 0
        %1623 = vmatprep.subr.bf16.mxu0 0
        %1624 = vmatpush2.bf16.msra.mxu0 0
        %1625 = vmatprep.subr.bf16.mxu0 0
        %1626 = vmatpush2.bf16.msra.mxu0 0
        %1627 = vmatprep.subr.bf16.mxu0 0
        %1628 = vmatpush2.bf16.msra.mxu0 0
        %1629 = vmatprep.mubr.bf16.mxu0 0
        %1630 = vmatmul.mubr.bf16.gmra.mxu0 %v1596
        %v1631 = vpop.f32.mrf.mxu0
        %v1632 = vadd.f32 0.0, %v1631
        %v1633 = vpop.f32.mrf.mxu0
        %v1634 = vpop.f32.mrf.mxu0
        %v1635 = vpop.f32.mrf.mxu0
        %1636 = vdwg.mxu0
        %v1637 = vmul.f32 %v1632, %v1325
        %v1638 = vadd.f32 %v1637, %v1333
        %v1639 = vxor.u32 %v1638, 2147483648
        %v1640 = vmul.f32 %v1639, 1.442695
        %v1641 = vpow.pop %v1640
        %v1642 = vadd.f32 %v1641, 1.0
        %v1643 = vrcp.pop %v1642
        %v1644 = vmul.f32 1.0, %v1643
        %v1645 = vmul.f32 %v1638, %v1644
        %v1646 = vsel %vm846, %v1645, 0.0
        %v1647 = vrot.slane %v1646, 4
        %v1648 = vadd.f32 %v1646, %v1647
        %v1649 = vrot.slane %v1648, 2
        %v1650 = vadd.f32 %v1648, %v1649
        %v1651 = vrot.slane %v1650, 1
        %v1652 = vadd.f32 %v1650, %v1651
        %v1653 = vadd.f32 %v1552, %v1652
        %v1654 = vmul.f32 %v1653, 0.0625
        %1655 = vst [vmem:[%s585] sm:$0x1] %v1654
        %s1656 = sand.u32 %s416, 1
        %s1657 = scalar_lea.sflag [#allocation3], %s1656
        %s1658 = sand.u32 %s416, 1
        %s1659 = scalar_lea.vmem [#allocation2], %s1658
        // Predicated region
        $region89: #{efficientnet_forward.5} parent=87 // pred_check
          %p1660 = pneg %p426
        $region90: #{efficientnet_forward.5} parent=87 // pred_check_branch
          %1662 = sbr.rel (%p1660) target = $region92
        $region91: #{efficientnet_forward.5} parent=87 // pred_region
          %s1664 = ssub.s32 16, 16
          %1665 = vsyncadd %s1657, %s1664
          %s1666 = smul.addr %s31, 16
          %s1667 = scalar_lea.hbm %s17, %s1666
          %s1669 = sshll.u32 %s1659, 4
          %s1670 = int_to_ptr.vmem [resolvable:$true] %s1669
          %1672 = dma.vmem_to_hbm [thread:$0]  %s1670, 16, %s1667, %s1657
        $region92: #{efficientnet_forward.5} parent=87 // pred_fallthru
          _
      $region88: #{efficientnet_forward.5} parent=5 // pred_fallthru
        _
      %p1673 = scmp.le.s32.totalorder 2, %s26
      // Predicated region
      $region93: #{efficientnet_forward.5} parent=5 // pred_check
        %p1674 = pneg %p1673
      $region94: #{efficientnet_forward.5} parent=5 // pred_check_branch
        %1676 = sbr.rel (%p1674) target = $region96
      $region95: #{efficientnet_forward.5} parent=5 // pred_region
        %s1677 = ssub.s32 %s26, 2
        // Predicated region
        $region97: #{efficientnet_forward.5} parent=95 // pred_check
          %p1678 = pneg %p432
        $region98: #{efficientnet_forward.5} parent=95 // pred_check_branch
          %1680 = sbr.rel (%p1678) target = $region100
        $region99: #{efficientnet_forward.5} parent=95 // pred_region
          %s1681 = sand.u32 %s417, 1
          %s1682 = scalar_lea.sflag [#allocation3], %s1681
          %s1683 = sand.u32 %s417, 1
          %s1684 = scalar_lea.vmem [#allocation2], %s1683
          %1685 = dma.done %s1682, 16
        $region100: #{efficientnet_forward.5} parent=95 // pred_fallthru
          _
      $region96: #{efficientnet_forward.5} parent=5 // pred_fallthru
        _
    $region6: #{efficientnet_forward.5} parent=1 // loop_footer
      %s30 = sadd.s32 1, %s26
    $region7: #{efficientnet_forward.5} parent=1 // loop_footer_branch
      %25 = sbr.rel target = $region3
    $region8: #{efficientnet_forward.5} parent=1 // loop_exit
      _
    %1686 = vsyncpa [#allocation3], 1
    %s1687 = scalar_lea.sflag [#allocation3], 1
    %1688 = vsyncpa %s1687, 1

</llo_original>
